<compile_context>
chip_gen: v7x
topology: tpu7x:2x2x1
jax: 0.10.0
libtpu: 0.0.40
codegen_flags: <defaults>
</compile_context>

<pallas_src>
import math

import jax
import jax.numpy as jnp
from jax import lax
from jax.experimental import pallas as pl
from jax.experimental.pallas import tpu as pltpu

CH = 256              # channel_dim (forced by the hard-coded 256x16x16 forward)
SCALE = 2
CQ = CH // SCALE      # 128 query/key channels
QKV = 2 * CQ + CH     # 512 stacked projection rows [wq; wk; wv]
KV = CQ + CH          # 384 stacked rows [wk; wv]
HW = 16
S = HW * HW           # 256 spatial positions
POOL_K = 8
POOLED = (HW // POOL_K) ** 2   # 4 pooled positions per channel
FLAT = CH * POOLED             # 1024
OUT_F = 768
LN_EPS = 1e-5
INV_SQRT_DIM = 1.0 / math.sqrt(CH / SCALE)


def _mm(a, b, contract):
    """MXU matmul of bf16 operands with f32 accumulation."""
    return lax.dot_general(a, b, dimension_numbers=(contract, ((), ())),
                           preferred_element_type=jnp.float32)


def _attend(q, k, v):
    """softmax(k^T q) applied to v (scale pre-folded into q).

    q, k: (CQ, S) bf16    v: (CH, S) bf16    returns (CH, S) f32.
    """
    # att[s_k, s_q] = sum_c k[c, s_k] * q[c, s_q]
    att = _mm(k, q, ((0,), (0,)))                               # (S, S) f32
    att = att - jnp.max(att, axis=-1, keepdims=True)
    e = jnp.exp(att)
    p = (e * pl.reciprocal(jnp.sum(e, axis=-1, keepdims=True), approx=True)
         ).astype(jnp.bfloat16)
    # response[c, s_k] = sum_{s_q} p[s_k, s_q] * v[c, s_q]
    return _mm(v, p, ((1,), (1,)))                              # (CH, S) f32


def _wordlevel_cfa_kernel(img_ref, word_ref, wqkv_ref, bqkv_ref, gamma_ref,
                          pool_ref, pgamma_ref, pbeta_ref, out_ref,
                          qkv_scr, img1_scr, kv2_scr):
    bt = word_ref.shape[0]                 # static batch-tile size
    unroll = bt if bt <= 4 else 2          # full unroll for small tiles

    # ---- batched q/k/v projection for the first self-attention (one MXU op) ----
    qkv = _mm(wqkv_ref[...], img_ref[...], ((1,), (0,)))        # (512, bt*S) f32
    qkv_scr[...] = (qkv + bqkv_ref[...]).astype(jnp.bfloat16)

    # ---- pass 1: first self-attention (x == y == img), per sample ----
    def first_attn(bi, carry):
        off = pl.multiple_of(bi * S, S)
        q = qkv_scr[pl.ds(0, CQ), pl.ds(off, S)]
        k = qkv_scr[pl.ds(CQ, CQ), pl.ds(off, S)]
        v = qkv_scr[pl.ds(2 * CQ, CH), pl.ds(off, S)]
        img1_scr[:, pl.ds(off, S)] = _attend(q, k, v).astype(jnp.bfloat16)
        return carry

    lax.fori_loop(0, bt, first_attn, 0, unroll=unroll)

    # NOTE: self.ln1(img) in the reference forward is dead code (overwritten);
    # bn_img / conv / relu are never called in forward.

    # ---- batched k/v projection of img1 for the second attention (one MXU op) ----
    kv2 = _mm(wqkv_ref[pl.ds(CQ, KV), :], img1_scr[...], ((1,), (0,)))
    kv2_scr[...] = (kv2 + bqkv_ref[pl.ds(CQ, KV), :]).astype(jnp.bfloat16)

    # Hoisted (per grid step, not per sample): weight slice, bias broadcast,
    # LayerNorm/pool constants.
    wq_s = wqkv_ref[pl.ds(0, CQ), :]                            # (CQ, CH) bf16
    bias_q = jnp.broadcast_to(bqkv_ref[pl.ds(0, CQ), :], (CQ, S))
    gamma = gamma_ref[...]
    pool = pool_ref[...]
    pgamma = pgamma_ref[...]
    pbeta = pbeta_ref[...]

    # ---- pass 2: word-query attention + LayerNorm + AvgPool, per sample ----
    def second_attn(bi, carry):
        off = pl.multiple_of(bi * S, S)
        word = word_ref[bi]                                     # (CH, D) bf16
        # q2 = wq @ (word word^T / sqrt(CH)) + bq, with both scales folded in;
        # the gram matrix itself is never materialized.
        t = _mm(wq_s, word, ((1,), (0,)))                       # (CQ, D) f32
        q2 = _mm(t.astype(jnp.bfloat16), word, ((1,), (1,)))    # (CQ, S) f32
        q2 = (q2 + bias_q).astype(jnp.bfloat16)
        k2 = kv2_scr[pl.ds(0, CQ), pl.ds(off, S)]
        v2 = kv2_scr[pl.ds(CQ, CH), pl.ds(off, S)]
        iw = _attend(q2, k2, v2)                                # (CH, S) f32

        # ln2: LayerNorm([256,16,16]) statistics over all CH*S elements
        # (single-pass); the affine + beta are folded through the pooling
        # matmul so only the gamma*iw elementwise pass touches the full map.
        mu = jnp.mean(iw)
        var = jnp.maximum(jnp.mean(iw * iw) - mu * mu, 0.0)
        r = lax.rsqrt(var + LN_EPS)
        gi = (iw * gamma).astype(jnp.bfloat16)
        pg = _mm(pool, gi, ((1,), (1,)))                        # (POOLED, CH) f32
        out_ref[bi] = (pg - mu * pgamma) * r + pbeta
        return carry

    lax.fori_loop(0, bt, second_attn, 0, unroll=unroll)


def _pooling_matrix():
    s = jnp.arange(S)
    h, w = s // HW, s % HW
    j = (h // POOL_K) * (HW // POOL_K) + (w // POOL_K)
    one_hot = jax.nn.one_hot(j, POOLED, dtype=jnp.float32)      # (S, POOLED)
    return one_hot.T / float(POOL_K * POOL_K)                   # (POOLED, S)


def prepare_params(params):
    """One-time parameter prep: fused/rescaled weights + folded LN/pool terms."""
    (wq, bq, wk, bk, wv, bv, gamma, beta, wl_t, bl) = params
    # softmax 1/sqrt(dim) folded into the query projection (both attentions)
    wqkv = jnp.concatenate([wq * INV_SQRT_DIM, wk, wv], axis=0).astype(jnp.bfloat16)
    bqkv = jnp.concatenate([bq * INV_SQRT_DIM, bk, bv], axis=0).astype(jnp.float32)
    pool = _pooling_matrix()                                     # (POOLED, S) f32
    pgamma = jnp.dot(pool, gamma.T, precision=lax.Precision.HIGHEST)  # (4, CH)
    pbeta = jnp.dot(pool, beta.T, precision=lax.Precision.HIGHEST)    # (4, CH)
    # Reorder Linear rows from c*4+j to j*256+c so (N, POOLED, CH) flattens
    # straight into the GEMM (no runtime transpose of the pooled output).
    wl_perm = wl_t.reshape(CH, POOLED, OUT_F).transpose(1, 0, 2).reshape(FLAT, OUT_F)
    return (wqkv, bqkv, gamma.astype(jnp.float32), pool.astype(jnp.bfloat16),
            pgamma.astype(jnp.float32), pbeta.astype(jnp.float32), wl_perm, bl)


def wordlevel_cfa_lstm(gl_img, word, prep, *, block_b=8):
    """gl_img: (N, 256, 14, 14), word: (N, 256, D) -> (N, 768)."""
    (wqkv, bqkv, gamma, pool, pgamma, pbeta, wl_perm, bl) = prep
    N = gl_img.shape[0]
    D = word.shape[-1]

    # Batch tile: keep >= 2 grid steps whenever N >= 2 so the "parallel" axis
    # actually shards across both v7x TensorCores (irrelevant on v5e/v6e).
    bt = max(1, min(block_b, pl.cdiv(N, 2)))
    n_pad = pl.cdiv(N, bt) * bt

    # word * 256**-0.25 (exactly 0.25) folds the gram's 1/sqrt(CH) scale.
    word_s = (word * (CH ** -0.25)).astype(jnp.bfloat16)
    gl = gl_img.astype(jnp.bfloat16)
    if n_pad != N:   # zero samples are benign (softmax->uniform, LN eps-guarded)
        word_s = jnp.pad(word_s, ((0, n_pad - N), (0, 0), (0, 0)))
        gl = jnp.pad(gl, ((0, n_pad - N), (0, 0), (0, 0), (0, 0)))

    # img = zeros(N,256,16,16); img[:,:,1:15,1:15] = gl_img, laid out channel-
    # major (CH, N*S) bf16 so the kernel can batch the q/k/v projection.
    # TODO(synk): fold this zero-pad into the kernel via a (196,256) selection
    # matmul to drop the XLA pad/transpose pass and its HBM intermediate.
    img = jnp.pad(gl, ((0, 0), (0, 0), (1, 1), (1, 1)))
    imgT = img.reshape(n_pad, CH, S).transpose(1, 0, 2).reshape(CH, n_pad * S)

    grid = (n_pad // bt,)
    in_specs = [
        pl.BlockSpec((CH, bt * S), lambda g: (0, g)),      # img, channel-major tile
        pl.BlockSpec((bt, CH, D), lambda g: (g, 0, 0)),    # word, batch tile
        pl.BlockSpec((QKV, CH), lambda g: (0, 0)),         # fused [wq;wk;wv]
        pl.BlockSpec((QKV, 1), lambda g: (0, 0)),          # fused bias
        pl.BlockSpec((CH, S), lambda g: (0, 0)),           # ln2 gamma
        pl.BlockSpec((POOLED, S), lambda g: (0, 0)),       # pooling matrix
        pl.BlockSpec((POOLED, CH), lambda g: (0, 0)),      # pool @ gamma^T
        pl.BlockSpec((POOLED, CH), lambda g: (0, 0)),      # pool @ beta^T
    ]
    out_specs = pl.BlockSpec((bt, POOLED, CH), lambda g: (g, 0, 0))
    scratch_shapes = [
        pltpu.VMEM((QKV, bt * S), jnp.bfloat16),   # q/k/v of img (batched)
        pltpu.VMEM((CH, bt * S), jnp.bfloat16),    # img1 (first attention out)
        pltpu.VMEM((KV, bt * S), jnp.bfloat16),    # k/v of img1 (batched)
    ]

    pooled = pl.pallas_call(
        _wordlevel_cfa_kernel,
        out_shape=jax.ShapeDtypeStruct((n_pad, POOLED, CH), jnp.float32),
        grid_spec=pltpu.PrefetchScalarGridSpec(
            num_scalar_prefetch=0, grid=grid,
            in_specs=in_specs, out_specs=out_specs,
            scratch_shapes=scratch_shapes),
        compiler_params=pltpu.CompilerParams(
            dimension_semantics=("parallel",),
            vmem_limit_bytes=32 * 1024 * 1024),
    )(imgT, word_s, wqkv, bqkv, gamma, pool, pgamma, pbeta)

    # Linear(1024, 768) as one batched XLA GEMM on the pre-permuted weight.
    flat = pooled[:N].reshape(N, FLAT)
    return jnp.dot(flat, wl_perm, preferred_element_type=jnp.float32) + bl


def init_params(key):
    """Deterministic synthetic parameters with the module's shapes."""
    ks = jax.random.split(key, 10)

    def u(k, shape, fan_in):
        b = 1.0 / math.sqrt(fan_in)
        return jax.random.uniform(k, shape, jnp.float32, -b, b)

    wq = u(ks[0], (CQ, CH), CH); bq = u(ks[1], (CQ, 1), CH)   # query_proj 1x1
    wk = u(ks[2], (CQ, CH), CH); bk = u(ks[3], (CQ, 1), CH)   # key_proj 1x1
    wv = u(ks[4], (CH, CH), CH); bv = u(ks[5], (CH, 1), CH)   # value_proj 1x1
    gamma = 1.0 + 0.1 * jax.random.normal(ks[6], (CH, S), jnp.float32)  # ln2 weight
    beta = 0.1 * jax.random.normal(ks[7], (CH, S), jnp.float32)         # ln2 bias
    wl_t = u(ks[8], (FLAT, OUT_F), FLAT)        # Linear weight^T: (1024, 768)
    bl = u(ks[9], (1, OUT_F), FLAT)
    return (wq, bq, wk, bk, wv, bv, gamma, beta, wl_t, bl)


def reference(gl_img, word, params):
    """Pure-JAX f32 (HIGHEST precision) reproduction of the PyTorch forward."""
    (wq, bq, wk, bk, wv, bv, gamma, beta, wl_t, bl) = params
    P = lax.Precision.HIGHEST
    N = gl_img.shape[0]
    img = jnp.pad(gl_img, ((0, 0), (0, 0), (1, 1), (1, 1))).reshape(N, CH, S)
    word_g = jnp.einsum('nld,nmd->nlm', word, word, precision=P) / math.sqrt(CH)

    def sa(x, y):
        q = jnp.einsum('oc,ncs->nos', wq, y, precision=P) + bq[None]
        k = jnp.einsum('oc,ncs->nos', wk, x, precision=P) + bk[None]
        v = jnp.einsum('oc,ncs->nos', wv, x, precision=P) + bv[None]
        att = jnp.einsum('nck,ncq->nkq', k, q, precision=P) / math.sqrt(CH / SCALE)
        p = jax.nn.softmax(att, axis=-1)
        return jnp.einsum('ncq,nkq->nck', v, p, precision=P)

    img1 = sa(img, img)
    iw = sa(img1, word_g)
    mu = jnp.mean(iw, axis=(1, 2), keepdims=True)
    var = jnp.mean((iw - mu) ** 2, axis=(1, 2), keepdims=True)
    iw = (iw - mu) / jnp.sqrt(var + LN_EPS) * gamma[None] + beta[None]
    iw = iw.reshape(N, CH, HW, HW)
    pooled = iw.reshape(N, CH, 2, POOL_K, 2, POOL_K).mean(axis=(3, 5))  # (N,CH,2,2)
    flat = pooled.reshape(N, FLAT)
    return jnp.dot(flat, wl_t, precision=P) + bl


if __name__ == "__main__":
    key = jax.random.PRNGKey(0)
    k1, k2, k3 = jax.random.split(key, 3)
    N, D = 2, 32
    gl_img = jax.random.normal(k1, (N, CH, 14, 14), jnp.float32)  # fills img[:, :, 1:15, 1:15]
    word = jax.random.normal(k2, (N, CH, D), jnp.float32)          # bmm(word, word^T) -> (N,256,256)
    params = init_params(k3)
    prep = prepare_params(params)

    out = jax.jit(wordlevel_cfa_lstm)(gl_img, word, prep)
    out = jax.block_until_ready(out)
    assert out.shape == (N, OUT_F), out.shape
    assert bool(jnp.isfinite(out).all())

    ref = reference(gl_img, word, params)
    rel_err = float(jnp.max(jnp.abs(out - ref)) / (jnp.max(jnp.abs(ref)) + 1e-6))
    assert rel_err < 5e-2, f"relative error too large: {rel_err}"
    print("KERNEL_OK")
</pallas_src>

<mosaic_0001>
module attributes {stable_mosaic.version = 11 : i64} {
  func.func @_wordlevel_cfa_kernel(%arg0: i32, %arg1: memref<256x256xbf16, #tpu.memory_space<vmem>>, %arg2: memref<1x256x32xbf16, #tpu.memory_space<vmem>>, %arg3: memref<512x256xbf16, #tpu.memory_space<vmem>>, %arg4: memref<512x1xf32, #tpu.memory_space<vmem>>, %arg5: memref<256x256xf32, #tpu.memory_space<vmem>>, %arg6: memref<4x256xbf16, #tpu.memory_space<vmem>>, %arg7: memref<4x256xf32, #tpu.memory_space<vmem>>, %arg8: memref<4x256xf32, #tpu.memory_space<vmem>>, %arg9: memref<1x4x256xf32, #tpu.memory_space<vmem>>, %arg10: memref<512x256xbf16, #tpu.memory_space<vmem>>, %arg11: memref<256x256xbf16, #tpu.memory_space<vmem>>, %arg12: memref<384x256xbf16, #tpu.memory_space<vmem>>) attributes {dimension_semantics = [#tpu.dimension_semantics<parallel>], iteration_bounds = array<i64: 2>, scalar_prefetch = 0 : i64, scratch_operands = 3 : i64, tpu.core_type = #tpu.core_type<tc>, window_params = [{transform_indices = @transform_0, window_bounds = array<i64: 256, 256>}, {transform_indices = @transform_1, window_bounds = array<i64: 1, 256, 32>}, {pipeline_mode = #tpu.pipeline_mode<synchronous>, transform_indices = @transform_2, window_bounds = array<i64: 512, 256>}, {pipeline_mode = #tpu.pipeline_mode<synchronous>, transform_indices = @transform_3, window_bounds = array<i64: 512, 1>}, {pipeline_mode = #tpu.pipeline_mode<synchronous>, transform_indices = @transform_4, window_bounds = array<i64: 256, 256>}, {pipeline_mode = #tpu.pipeline_mode<synchronous>, transform_indices = @transform_5, window_bounds = array<i64: 4, 256>}, {pipeline_mode = #tpu.pipeline_mode<synchronous>, transform_indices = @transform_6, window_bounds = array<i64: 4, 256>}, {pipeline_mode = #tpu.pipeline_mode<synchronous>, transform_indices = @transform_7, window_bounds = array<i64: 4, 256>}, {transform_indices = @transform_8, window_bounds = array<i64: 1, 4, 256>}]} {
    %c0 = arith.constant 0 : index
    %c0_0 = arith.constant 0 : index
    %0 = vector.load %arg3[%c0, %c0_0] : memref<512x256xbf16, #tpu.memory_space<vmem>>, vector<512x256xbf16>
    %c0_1 = arith.constant 0 : index
    %c0_2 = arith.constant 0 : index
    %1 = vector.load %arg1[%c0_1, %c0_2] : memref<256x256xbf16, #tpu.memory_space<vmem>>, vector<256x256xbf16>
    %cst = arith.constant dense<0.000000e+00> : vector<512x256xf32>
    %2 = tpu.matmul %0, %1, %cst {dimension_numbers = #tpu.dot_dimension_numbers<[1], [0], [0], [1], [0, 0, 1, 1], [], []>} : vector<512x256xbf16>, vector<256x256xbf16>, vector<512x256xf32> -> vector<512x256xf32>
    %c0_3 = arith.constant 0 : index
    %c0_4 = arith.constant 0 : index
    %3 = vector.load %arg4[%c0_3, %c0_4] : memref<512x1xf32, #tpu.memory_space<vmem>>, vector<512x1xf32>
    %4 = vector.broadcast %3 : vector<512x1xf32> to vector<512x256xf32>
    %5 = arith.addf %2, %4 : vector<512x256xf32>
    %6 = arith.truncf %5 : vector<512x256xf32> to vector<512x256xbf16>
    %c0_5 = arith.constant 0 : index
    %c0_6 = arith.constant 0 : index
    %7 = vector.load %arg10[%c0_5, %c0_6] : memref<512x256xbf16, #tpu.memory_space<vmem>>, vector<512x256xbf16>
    tpu.vector_store %arg10[%c0_5, %c0_6], %6 {strides = array<i32>} : memref<512x256xbf16, #tpu.memory_space<vmem>>, vector<512x256xbf16>,
    %c0_i32 = arith.constant 0 : i32
    %c256_i32 = arith.constant 256 : i32
    %8 = arith.muli %c0_i32, %c256_i32 : i32
    %9 = tpu.assume_multiple %8, 256 : i32
    %c0_7 = arith.constant 0 : index
    %10 = arith.index_cast %9 : i32 to index
    %11 = vector.load %arg10[%c0_7, %10] : memref<512x256xbf16, #tpu.memory_space<vmem>>, vector<128x256xbf16>
    %c128 = arith.constant 128 : index
    %12 = arith.index_cast %9 : i32 to index
    %13 = vector.load %arg10[%c128, %12] : memref<512x256xbf16, #tpu.memory_space<vmem>>, vector<128x256xbf16>
    %c256 = arith.constant 256 : index
    %14 = arith.index_cast %9 : i32 to index
    %15 = vector.load %arg10[%c256, %14] : memref<512x256xbf16, #tpu.memory_space<vmem>>, vector<256x256xbf16>
    %cst_8 = arith.constant dense<0.000000e+00> : vector<256x256xf32>
    %16 = tpu.matmul %13, %11, %cst_8 {dimension_numbers = #tpu.dot_dimension_numbers<[0], [0], [1], [1], [0, 1, 1, 1], [], []>} : vector<128x256xbf16>, vector<128x256xbf16>, vector<256x256xf32> -> vector<256x256xf32>
    %cst_9 = arith.constant dense<0xFF800000> : vector<256xf32>
    %17 = vector.multi_reduction <maximumf>, %16, %cst_9 [1] : vector<256x256xf32> to vector<256xf32>
    %18 = vector.shape_cast %17 : vector<256xf32> to vector<256x1xf32>
    %19 = vector.broadcast %18 : vector<256x1xf32> to vector<256x256xf32>
    %20 = arith.subf %16, %19 : vector<256x256xf32>
    %21 = math.exp %20 : vector<256x256xf32>
    %cst_10 = arith.constant dense<0.000000e+00> : vector<256xf32>
    %22 = vector.multi_reduction <add>, %21, %cst_10 [1] : vector<256x256xf32> to vector<256xf32>
    %23 = vector.shape_cast %22 : vector<256xf32> to vector<256x1xf32>
    %24 = tpu.reciprocal %23 {approx = true} : vector<256x1xf32> -> vector<256x1xf32>
    %25 = vector.broadcast %24 : vector<256x1xf32> to vector<256x256xf32>
    %26 = arith.mulf %21, %25 : vector<256x256xf32>
    %27 = arith.truncf %26 : vector<256x256xf32> to vector<256x256xbf16>
    %cst_11 = arith.constant dense<0.000000e+00> : vector<256x256xf32>
    %28 = tpu.matmul %15, %27, %cst_11 {dimension_numbers = #tpu.dot_dimension_numbers<[1], [1], [0], [0], [0, 0, 1, 0], [], []>} : vector<256x256xbf16>, vector<256x256xbf16>, vector<256x256xf32> -> vector<256x256xf32>
    %29 = arith.truncf %28 : vector<256x256xf32> to vector<256x256xbf16>
    %c0_12 = arith.constant 0 : index
    %30 = arith.index_cast %9 : i32 to index
    %31 = vector.load %arg11[%c0_12, %30] : memref<256x256xbf16, #tpu.memory_space<vmem>>, vector<256x256xbf16>
    tpu.vector_store %arg11[%c0_12, %30], %29 {strides = array<i32>} : memref<256x256xbf16, #tpu.memory_space<vmem>>, vector<256x256xbf16>,
    %c1_i32 = arith.constant 1 : i32
    %c128_13 = arith.constant 128 : index
    %c0_14 = arith.constant 0 : index
    %32 = vector.load %arg3[%c128_13, %c0_14] : memref<512x256xbf16, #tpu.memory_space<vmem>>, vector<384x256xbf16>
    %c0_15 = arith.constant 0 : index
    %c0_16 = arith.constant 0 : index
    %33 = vector.load %arg11[%c0_15, %c0_16] : memref<256x256xbf16, #tpu.memory_space<vmem>>, vector<256x256xbf16>
    %cst_17 = arith.constant dense<0.000000e+00> : vector<384x256xf32>
    %34 = tpu.matmul %32, %33, %cst_17 {dimension_numbers = #tpu.dot_dimension_numbers<[1], [0], [0], [1], [0, 0, 1, 1], [], []>} : vector<384x256xbf16>, vector<256x256xbf16>, vector<384x256xf32> -> vector<384x256xf32>
    %c128_18 = arith.constant 128 : index
    %c0_19 = arith.constant 0 : index
    %35 = vector.load %arg4[%c128_18, %c0_19] : memref<512x1xf32, #tpu.memory_space<vmem>>, vector<384x1xf32>
    %36 = vector.broadcast %35 : vector<384x1xf32> to vector<384x256xf32>
    %37 = arith.addf %34, %36 : vector<384x256xf32>
    %38 = arith.truncf %37 : vector<384x256xf32> to vector<384x256xbf16>
    %c0_20 = arith.constant 0 : index
    %c0_21 = arith.constant 0 : index
    %39 = vector.load %arg12[%c0_20, %c0_21] : memref<384x256xbf16, #tpu.memory_space<vmem>>, vector<384x256xbf16>
    tpu.vector_store %arg12[%c0_20, %c0_21], %38 {strides = array<i32>} : memref<384x256xbf16, #tpu.memory_space<vmem>>, vector<384x256xbf16>,
    %c0_22 = arith.constant 0 : index
    %c0_23 = arith.constant 0 : index
    %40 = vector.load %arg3[%c0_22, %c0_23] : memref<512x256xbf16, #tpu.memory_space<vmem>>, vector<128x256xbf16>
    %c0_24 = arith.constant 0 : index
    %c0_25 = arith.constant 0 : index
    %41 = vector.load %arg4[%c0_24, %c0_25] : memref<512x1xf32, #tpu.memory_space<vmem>>, vector<128x1xf32>
    %42 = vector.shape_cast %41 : vector<128x1xf32> to vector<128x1xf32>
    %43 = vector.broadcast %42 : vector<128x1xf32> to vector<128x256xf32>
    %c0_26 = arith.constant 0 : index
    %c0_27 = arith.constant 0 : index
    %44 = vector.load %arg5[%c0_26, %c0_27] : memref<256x256xf32, #tpu.memory_space<vmem>>, vector<256x256xf32>
    %c0_28 = arith.constant 0 : index
    %c0_29 = arith.constant 0 : index
    %45 = vector.load %arg6[%c0_28, %c0_29] : memref<4x256xbf16, #tpu.memory_space<vmem>>, vector<4x256xbf16>
    %c0_30 = arith.constant 0 : index
    %c0_31 = arith.constant 0 : index
    %46 = vector.load %arg7[%c0_30, %c0_31] : memref<4x256xf32, #tpu.memory_space<vmem>>, vector<4x256xf32>
    %c0_32 = arith.constant 0 : index
    %c0_33 = arith.constant 0 : index
    %47 = vector.load %arg8[%c0_32, %c0_33] : memref<4x256xf32, #tpu.memory_space<vmem>>, vector<4x256xf32>
    %c0_i32_34 = arith.constant 0 : i32
    %c256_i32_35 = arith.constant 256 : i32
    %48 = arith.muli %c0_i32_34, %c256_i32_35 : i32
    %49 = tpu.assume_multiple %48, 256 : i32
    %50 = arith.index_cast %c0_i32_34 : i32 to index
    %c0_36 = arith.constant 0 : index
    %c0_37 = arith.constant 0 : index
    %51 = vector.load %arg2[%50, %c0_36, %c0_37] : memref<1x256x32xbf16, #tpu.memory_space<vmem>>, vector<1x256x32xbf16>
    %52 = vector.shape_cast %51 : vector<1x256x32xbf16> to vector<256x32xbf16>
    %cst_38 = arith.constant dense<0.000000e+00> : vector<128x32xf32>
    %53 = tpu.matmul %40, %52, %cst_38 {dimension_numbers = #tpu.dot_dimension_numbers<[1], [0], [0], [1], [0, 0, 1, 1], [], []>} : vector<128x256xbf16>, vector<256x32xbf16>, vector<128x32xf32> -> vector<128x32xf32>
    %54 = arith.truncf %53 : vector<128x32xf32> to vector<128x32xbf16>
    %cst_39 = arith.constant dense<0.000000e+00> : vector<128x256xf32>
    %55 = tpu.matmul %54, %52, %cst_39 {dimension_numbers = #tpu.dot_dimension_numbers<[1], [1], [0], [0], [0, 0, 1, 0], [], []>} : vector<128x32xbf16>, vector<256x32xbf16>, vector<128x256xf32> -> vector<128x256xf32>
    %56 = arith.addf %55, %43 : vector<128x256xf32>
    %57 = arith.truncf %56 : vector<128x256xf32> to vector<128x256xbf16>
    %c0_40 = arith.constant 0 : index
    %58 = arith.index_cast %49 : i32 to index
    %59 = vector.load %arg12[%c0_40, %58] : memref<384x256xbf16, #tpu.memory_space<vmem>>, vector<128x256xbf16>
    %c128_41 = arith.constant 128 : index
    %60 = arith.index_cast %49 : i32 to index
    %61 = vector.load %arg12[%c128_41, %60] : memref<384x256xbf16, #tpu.memory_space<vmem>>, vector<256x256xbf16>
    %cst_42 = arith.constant dense<0.000000e+00> : vector<256x256xf32>
    %62 = tpu.matmul %59, %57, %cst_42 {dimension_numbers = #tpu.dot_dimension_numbers<[0], [0], [1], [1], [0, 1, 1, 1], [], []>} : vector<128x256xbf16>, vector<128x256xbf16>, vector<256x256xf32> -> vector<256x256xf32>
    %cst_43 = arith.constant dense<0xFF800000> : vector<256xf32>
    %63 = vector.multi_reduction <maximumf>, %62, %cst_43 [1] : vector<256x256xf32> to vector<256xf32>
    %64 = vector.shape_cast %63 : vector<256xf32> to vector<256x1xf32>
    %65 = vector.broadcast %64 : vector<256x1xf32> to vector<256x256xf32>
    %66 = arith.subf %62, %65 : vector<256x256xf32>
    %67 = math.exp %66 : vector<256x256xf32>
    %cst_44 = arith.constant dense<0.000000e+00> : vector<256xf32>
    %68 = vector.multi_reduction <add>, %67, %cst_44 [1] : vector<256x256xf32> to vector<256xf32>
    %69 = vector.shape_cast %68 : vector<256xf32> to vector<256x1xf32>
    %70 = tpu.reciprocal %69 {approx = true} : vector<256x1xf32> -> vector<256x1xf32>
    %71 = vector.broadcast %70 : vector<256x1xf32> to vector<256x256xf32>
    %72 = arith.mulf %67, %71 : vector<256x256xf32>
    %73 = arith.truncf %72 : vector<256x256xf32> to vector<256x256xbf16>
    %cst_45 = arith.constant dense<0.000000e+00> : vector<256x256xf32>
    %74 = tpu.matmul %61, %73, %cst_45 {dimension_numbers = #tpu.dot_dimension_numbers<[1], [1], [0], [0], [0, 0, 1, 0], [], []>} : vector<256x256xbf16>, vector<256x256xbf16>, vector<256x256xf32> -> vector<256x256xf32>
    %75 = vector.shape_cast %74 : vector<256x256xf32> to vector<1x256x256xf32>
    %cst_46 = arith.constant dense<0.000000e+00> : vector<1xf32>
    %76 = vector.multi_reduction <add>, %75, %cst_46 [1, 2] : vector<1x256x256xf32> to vector<1xf32>
    %77 = vector.shape_cast %76 : vector<1xf32> to vector<1x1x1xf32>
    %78 = vector.extract %77[0, 0, 0] : f32 from vector<1x1x1xf32>
    %cst_47 = arith.constant 6.553600e+04 : f32
    %79 = arith.divf %78, %cst_47 : f32
    %80 = arith.mulf %74, %74 : vector<256x256xf32>
    %81 = vector.shape_cast %80 : vector<256x256xf32> to vector<1x256x256xf32>
    %cst_48 = arith.constant dense<0.000000e+00> : vector<1xf32>
    %82 = vector.multi_reduction <add>, %81, %cst_48 [1, 2] : vector<1x256x256xf32> to vector<1xf32>
    %83 = vector.shape_cast %82 : vector<1xf32> to vector<1x1x1xf32>
    %84 = vector.extract %83[0, 0, 0] : f32 from vector<1x1x1xf32>
    %cst_49 = arith.constant 6.553600e+04 : f32
    %85 = arith.divf %84, %cst_49 : f32
    %86 = arith.mulf %79, %79 : f32
    %87 = arith.subf %85, %86 : f32
    %cst_50 = arith.constant 0.000000e+00 : f32
    %88 = arith.maximumf %87, %cst_50 : f32
    %cst_51 = arith.constant 9.99999974E-6 : f32
    %89 = arith.addf %88, %cst_51 : f32
    %90 = math.rsqrt %89 : f32
    %91 = arith.mulf %74, %44 : vector<256x256xf32>
    %92 = arith.truncf %91 : vector<256x256xf32> to vector<256x256xbf16>
    %cst_52 = arith.constant dense<0.000000e+00> : vector<4x256xf32>
    %93 = tpu.matmul %45, %92, %cst_52 {dimension_numbers = #tpu.dot_dimension_numbers<[1], [1], [0], [0], [0, 0, 1, 0], [], []>} : vector<4x256xbf16>, vector<256x256xbf16>, vector<4x256xf32> -> vector<4x256xf32>
    %94 = vector.broadcast %79 : f32 to vector<4x256xf32>
    %95 = arith.mulf %94, %46 : vector<4x256xf32>
    %96 = arith.subf %93, %95 : vector<4x256xf32>
    %97 = vector.broadcast %90 : f32 to vector<4x256xf32>
    %98 = arith.mulf %96, %97 : vector<4x256xf32>
    %99 = arith.addf %98, %47 : vector<4x256xf32>
    %100 = arith.index_cast %c0_i32_34 : i32 to index
    %c0_53 = arith.constant 0 : index
    %c0_54 = arith.constant 0 : index
    %101 = vector.load %arg9[%100, %c0_53, %c0_54] : memref<1x4x256xf32, #tpu.memory_space<vmem>>, vector<1x4x256xf32>
    %102 = vector.shape_cast %101 : vector<1x4x256xf32> to vector<4x256xf32>
    %103 = vector.shape_cast %99 : vector<4x256xf32> to vector<1x4x256xf32>
    tpu.vector_store %arg9[%100, %c0_53, %c0_54], %103 {strides = array<i32>} : memref<1x4x256xf32, #tpu.memory_space<vmem>>, vector<1x4x256xf32>,
    %c1_i32_55 = arith.constant 1 : i32
    return
  }
  func.func @transform_0(%arg0: i32) -> (i32, i32) {
    %c0_i32 = arith.constant 0 : i32
    %c0_i32_0 = arith.constant 0 : i32
    return %c0_i32, %arg0 : i32, i32
  }
  func.func @transform_1(%arg0: i32) -> (i32, i32, i32) {
    %c0_i32 = arith.constant 0 : i32
    %c0_i32_0 = arith.constant 0 : i32
    %c0_i32_1 = arith.constant 0 : i32
    return %arg0, %c0_i32, %c0_i32_0 : i32, i32, i32
  }
  func.func @transform_2(%arg0: i32) -> (i32, i32) {
    %c0_i32 = arith.constant 0 : i32
    %c0_i32_0 = arith.constant 0 : i32
    %c0_i32_1 = arith.constant 0 : i32
    return %c0_i32, %c0_i32_0 : i32, i32
  }
  func.func @transform_3(%arg0: i32) -> (i32, i32) {
    %c0_i32 = arith.constant 0 : i32
    %c0_i32_0 = arith.constant 0 : i32
    %c0_i32_1 = arith.constant 0 : i32
    return %c0_i32, %c0_i32_0 : i32, i32
  }
  func.func @transform_4(%arg0: i32) -> (i32, i32) {
    %c0_i32 = arith.constant 0 : i32
    %c0_i32_0 = arith.constant 0 : i32
    %c0_i32_1 = arith.constant 0 : i32
    return %c0_i32, %c0_i32_0 : i32, i32
  }
  func.func @transform_5(%arg0: i32) -> (i32, i32) {
    %c0_i32 = arith.constant 0 : i32
    %c0_i32_0 = arith.constant 0 : i32
    %c0_i32_1 = arith.constant 0 : i32
    return %c0_i32, %c0_i32_0 : i32, i32
  }
  func.func @transform_6(%arg0: i32) -> (i32, i32) {
    %c0_i32 = arith.constant 0 : i32
    %c0_i32_0 = arith.constant 0 : i32
    %c0_i32_1 = arith.constant 0 : i32
    return %c0_i32, %c0_i32_0 : i32, i32
  }
  func.func @transform_7(%arg0: i32) -> (i32, i32) {
    %c0_i32 = arith.constant 0 : i32
    %c0_i32_0 = arith.constant 0 : i32
    %c0_i32_1 = arith.constant 0 : i32
    return %c0_i32, %c0_i32_0 : i32, i32
  }
  func.func @transform_8(%arg0: i32) -> (i32, i32, i32) {
    %c0_i32 = arith.constant 0 : i32
    %c0_i32_0 = arith.constant 0 : i32
    %c0_i32_1 = arith.constant 0 : i32
    return %arg0, %c0_i32, %c0_i32_0 : i32, i32, i32
  }
}

</mosaic_0001>

<llo_original>
// kernel: wordlevel_cfa_lstm.1
$region0: #{wordlevel_cfa_lstm.1}
  #allocation0 [shape = 'u32[]', space=smem, size = 0x4, offset = 0x4, fixed_abs, tag = 'smem constant byte address 0x4 - core index']
  #allocation1 [shape = 'u32[144,128]{1,0:T(1,128)}', space=vmem, size = 0x12000, scoped, tag = 'internal scratch']
  #allocation2 [shape = 'bf16[512,256]{1,0:T(16,128)(2,1)}', space=vmem, size = 0x40000, scoped, tag = 'scratch operand']
  #allocation3 [shape = 'bf16[256,256]{1,0:T(16,128)(2,1)}', space=vmem, size = 0x20000, scoped, tag = 'scratch operand']
  #allocation4 [shape = 'bf16[384,256]{1,0:T(16,128)(2,1)}', space=vmem, size = 0x30000, scoped, tag = 'scratch operand']
  %s0 = inlined_call_operand.vmem [shape: bf16[256,512], index: 0, kind: input, shape index: {}]
  %s1 = inlined_call_operand.vmem [shape: bf16[2,256,32], index: 1, kind: input, shape index: {}]
  %s2 = inlined_call_operand.vmem [shape: bf16[512,256], index: 2, kind: input, shape index: {}]
  %s3 = inlined_call_operand.vmem [shape: f32[512,1], index: 3, kind: input, shape index: {}]
  %s4 = inlined_call_operand.vmem [shape: f32[256,256], index: 4, kind: input, shape index: {}]
  %s5 = inlined_call_operand.hbm [shape: bf16[4,256], index: 5, kind: input, shape index: {}]
  %s6 = inlined_call_operand.hbm [shape: f32[4,256], index: 6, kind: input, shape index: {}]
  %s7 = inlined_call_operand.hbm [shape: f32[4,256], index: 7, kind: input, shape index: {}]
  %s8 = inlined_call_operand.vmem [shape: f32[2,4,256], index: 8, kind: output, shape index: {}]
  %s9 = sld [smem:[#allocation0]]
  $region115: #{wordlevel_cfa_lstm.1} parent=0
    _
  %s11 = ssub.s32 1, %s9
  %s12 = scalar_select 0, %s11, %s9
  $region1: #{wordlevel_cfa_lstm.1} parent=0
    #allocation5 [shape = 'u8[262144]{0}', space=vmem, size = 0x40000, scoped, tag = 'input window, operand 0']
    #allocation6 [shape = 'u8[2048]{0}', space=vmem, size = 0x800, scoped, tag = 'input window, operand 5, single buffered']
    #allocation7 [shape = 's32[2]{0}', space=sflag, size = 0x8, scoped, tag = 'scoped memory for wordlevel_cfa_lstm.1']
    #allocation8 [shape = 'u8[4096]{0}', space=vmem, size = 0x1000, scoped, tag = 'input window, operand 6, single buffered']
    #allocation9 [shape = 's32[1]{0}', space=sflag, size = 0x4, scoped, tag = 'scoped memory for wordlevel_cfa_lstm.1']
    #allocation10 [shape = 'u8[4096]{0}', space=vmem, size = 0x1000, scoped, tag = 'input window, operand 7, single buffered']
    %13 = vsyncpa [#allocation7], 0
    %14 = vsyncpa [#allocation9], 0
    loop: start=0, step=1, limit=4
    $region2: #{wordlevel_cfa_lstm.1} parent=1 // loop_pre_header
      _
    $region3: #{wordlevel_cfa_lstm.1} parent=1 // loop_header
      %s16 = sphi 0, %s20
      %p17 = scmp.ge.s32.totalorder %s16, 4
      %s26 = sphi 0, %s28
      %s29 = sphi 0, %s26
      %s30 = sphi 0, %s29
      %s46 = sphi 0, %s30
      %s52 = sphi 0, %s54
      %s55 = sphi 0, %s52
      %s56 = sphi 0, %s55
      %s72 = sphi 0, %s56
      %s76 = sphi 0, %s76
      %s78 = sphi 0, %s76
      %s79 = sphi 0, %s78
      %s93 = sphi 0, %s79
      %s97 = sphi 0, %s97
      %s99 = sphi 0, %s97
      %s100 = sphi 0, %s99
      %s114 = sphi 0, %s100
      %s118 = sphi 0, %s118
      %s120 = sphi 0, %s118
      %s121 = sphi 0, %s120
      %s135 = sphi 0, %s121
      %s139 = sphi 0, %s139
      %s141 = sphi 0, %s139
      %s142 = sphi 0, %s141
      %s156 = sphi 0, %s142
      %s160 = sphi 0, %s160
      %s162 = sphi 0, %s160
      %s163 = sphi 0, %s162
      %s177 = sphi 0, %s163
      %s181 = sphi 0, %s181
      %s183 = sphi 0, %s181
      %s184 = sphi 0, %s183
      %s198 = sphi 0, %s184
      %s204 = sphi 0, %s206
      %s207 = sphi 0, %s204
      %s208 = sphi 0, %s207
      %s224 = sphi 0, %s208
    $region4: #{wordlevel_cfa_lstm.1} parent=1 // loop_header_branch
      %19 = sbr.rel (%p17) target = $region8
    $region5: #{wordlevel_cfa_lstm.1} parent=1 // loop_body
      %s21 = ssub.s32 %s16, 1
      %s22 = ssub.s32 %s16, 2
      %s23 = sadd.s32 %s16, 1
      %s24 = ssub.s32 %s16, %s23
      %p25 = scmp.eq.s32.totalorder %s24, 0
      %s27 = sadd.s32 %s26, 1
      %s28 = scalar_select %p25, %s26, %s27
      %p31 = pneg %p25
      %p32 = scmp.eq.s32.totalorder %s16, 1
      %p33 = por %p31, %p32
      %p34 = scmp.ne.s32.totalorder %s26, %s29
      %p35 = scmp.eq.s32.totalorder %s16, 0
      %p36 = por %p34, %p35
      %p37 = scmp.ne.s32.totalorder %s26, %s29
      %p38 = scmp.eq.s32.totalorder %s21, 1
      %p39 = por %p37, %p38
      %p40 = scmp.ne.s32.totalorder %s29, %s30
      %p41 = scmp.eq.s32.totalorder %s21, 0
      %p42 = por %p40, %p41
      %p43 = scmp.ne.s32.totalorder %s29, %s30
      %p44 = scmp.eq.s32.totalorder %s22, 1
      %p45 = por %p43, %p44
      %p47 = scmp.ne.s32.totalorder %s30, %s46
      %p48 = scmp.eq.s32.totalorder %s22, 0
      %p49 = por %p47, %p48
      %s50 = ssub.s32 %s16, %s23
      %p51 = scmp.eq.s32.totalorder %s50, 0
      %s53 = sadd.s32 %s52, 1
      %s54 = scalar_select %p51, %s52, %s53
      %p57 = pneg %p51
      %p58 = scmp.eq.s32.totalorder %s16, 1
      %p59 = por %p57, %p58
      %p60 = scmp.ne.s32.totalorder %s52, %s55
      %p61 = scmp.eq.s32.totalorder %s16, 0
      %p62 = por %p60, %p61
      %p63 = scmp.ne.s32.totalorder %s52, %s55
      %p64 = scmp.eq.s32.totalorder %s21, 1
      %p65 = por %p63, %p64
      %p66 = scmp.ne.s32.totalorder %s55, %s56
      %p67 = scmp.eq.s32.totalorder %s21, 0
      %p68 = por %p66, %p67
      %p69 = scmp.ne.s32.totalorder %s55, %s56
      %p70 = scmp.eq.s32.totalorder %s22, 1
      %p71 = por %p69, %p70
      %p73 = scmp.ne.s32.totalorder %s56, %s72
      %p74 = scmp.eq.s32.totalorder %s22, 0
      %p75 = por %p73, %p74
      %s77 = sadd.s32 %s76, 1
      %p80 = scmp.eq.s32.totalorder %s16, 1
      %p81 = scmp.ne.s32.totalorder %s76, %s78
      %p82 = scmp.eq.s32.totalorder %s16, 0
      %p83 = por %p81, %p82
      %p84 = scmp.ne.s32.totalorder %s76, %s78
      %p85 = scmp.eq.s32.totalorder %s21, 1
      %p86 = por %p84, %p85
      %p87 = scmp.ne.s32.totalorder %s78, %s79
      %p88 = scmp.eq.s32.totalorder %s21, 0
      %p89 = por %p87, %p88
      %p90 = scmp.ne.s32.totalorder %s78, %s79
      %p91 = scmp.eq.s32.totalorder %s22, 1
      %p92 = por %p90, %p91
      %p94 = scmp.ne.s32.totalorder %s79, %s93
      %p95 = scmp.eq.s32.totalorder %s22, 0
      %p96 = por %p94, %p95
      %s98 = sadd.s32 %s97, 1
      %p101 = scmp.eq.s32.totalorder %s16, 1
      %p102 = scmp.ne.s32.totalorder %s97, %s99
      %p103 = scmp.eq.s32.totalorder %s16, 0
      %p104 = por %p102, %p103
      %p105 = scmp.ne.s32.totalorder %s97, %s99
      %p106 = scmp.eq.s32.totalorder %s21, 1
      %p107 = por %p105, %p106
      %p108 = scmp.ne.s32.totalorder %s99, %s100
      %p109 = scmp.eq.s32.totalorder %s21, 0
      %p110 = por %p108, %p109
      %p111 = scmp.ne.s32.totalorder %s99, %s100
      %p112 = scmp.eq.s32.totalorder %s22, 1
      %p113 = por %p111, %p112
      %p115 = scmp.ne.s32.totalorder %s100, %s114
      %p116 = scmp.eq.s32.totalorder %s22, 0
      %p117 = por %p115, %p116
      %s119 = sadd.s32 %s118, 1
      %p122 = scmp.eq.s32.totalorder %s16, 1
      %p123 = scmp.ne.s32.totalorder %s118, %s120
      %p124 = scmp.eq.s32.totalorder %s16, 0
      %p125 = por %p123, %p124
      %p126 = scmp.ne.s32.totalorder %s118, %s120
      %p127 = scmp.eq.s32.totalorder %s21, 1
      %p128 = por %p126, %p127
      %p129 = scmp.ne.s32.totalorder %s120, %s121
      %p130 = scmp.eq.s32.totalorder %s21, 0
      %p131 = por %p129, %p130
      %p132 = scmp.ne.s32.totalorder %s120, %s121
      %p133 = scmp.eq.s32.totalorder %s22, 1
      %p134 = por %p132, %p133
      %p136 = scmp.ne.s32.totalorder %s121, %s135
      %p137 = scmp.eq.s32.totalorder %s22, 0
      %p138 = por %p136, %p137
      %s140 = sadd.s32 %s139, 1
      %p143 = scmp.eq.s32.totalorder %s16, 1
      %p144 = scmp.ne.s32.totalorder %s139, %s141
      %p145 = scmp.eq.s32.totalorder %s16, 0
      %p146 = por %p144, %p145
      %p147 = scmp.ne.s32.totalorder %s139, %s141
      %p148 = scmp.eq.s32.totalorder %s21, 1
      %p149 = por %p147, %p148
      %p150 = scmp.ne.s32.totalorder %s141, %s142
      %p151 = scmp.eq.s32.totalorder %s21, 0
      %p152 = por %p150, %p151
      %p153 = scmp.ne.s32.totalorder %s141, %s142
      %p154 = scmp.eq.s32.totalorder %s22, 1
      %p155 = por %p153, %p154
      %p157 = scmp.ne.s32.totalorder %s142, %s156
      %p158 = scmp.eq.s32.totalorder %s22, 0
      %p159 = por %p157, %p158
      %s161 = sadd.s32 %s160, 1
      %p164 = scmp.eq.s32.totalorder %s16, 1
      %p165 = scmp.ne.s32.totalorder %s160, %s162
      %p166 = scmp.eq.s32.totalorder %s16, 0
      %p167 = por %p165, %p166
      %p168 = scmp.ne.s32.totalorder %s160, %s162
      %p169 = scmp.eq.s32.totalorder %s21, 1
      %p170 = por %p168, %p169
      %p171 = scmp.ne.s32.totalorder %s162, %s163
      %p172 = scmp.eq.s32.totalorder %s21, 0
      %p173 = por %p171, %p172
      %p174 = scmp.ne.s32.totalorder %s162, %s163
      %p175 = scmp.eq.s32.totalorder %s22, 1
      %p176 = por %p174, %p175
      %p178 = scmp.ne.s32.totalorder %s163, %s177
      %p179 = scmp.eq.s32.totalorder %s22, 0
      %p180 = por %p178, %p179
      %s182 = sadd.s32 %s181, 1
      %p185 = scmp.eq.s32.totalorder %s16, 1
      %p186 = scmp.ne.s32.totalorder %s181, %s183
      %p187 = scmp.eq.s32.totalorder %s16, 0
      %p188 = por %p186, %p187
      %p189 = scmp.ne.s32.totalorder %s181, %s183
      %p190 = scmp.eq.s32.totalorder %s21, 1
      %p191 = por %p189, %p190
      %p192 = scmp.ne.s32.totalorder %s183, %s184
      %p193 = scmp.eq.s32.totalorder %s21, 0
      %p194 = por %p192, %p193
      %p195 = scmp.ne.s32.totalorder %s183, %s184
      %p196 = scmp.eq.s32.totalorder %s22, 1
      %p197 = por %p195, %p196
      %p199 = scmp.ne.s32.totalorder %s184, %s198
      %p200 = scmp.eq.s32.totalorder %s22, 0
      %p201 = por %p199, %p200
      %s202 = ssub.s32 %s16, %s23
      %p203 = scmp.eq.s32.totalorder %s202, 0
      %s205 = sadd.s32 %s204, 1
      %s206 = scalar_select %p203, %s204, %s205
      %p209 = pneg %p203
      %p210 = scmp.eq.s32.totalorder %s16, 1
      %p211 = por %p209, %p210
      %p212 = scmp.ne.s32.totalorder %s204, %s207
      %p213 = scmp.eq.s32.totalorder %s16, 0
      %p214 = por %p212, %p213
      %p215 = scmp.ne.s32.totalorder %s204, %s207
      %p216 = scmp.eq.s32.totalorder %s21, 1
      %p217 = por %p215, %p216
      %p218 = scmp.ne.s32.totalorder %s207, %s208
      %p219 = scmp.eq.s32.totalorder %s21, 0
      %p220 = por %p218, %p219
      %p221 = scmp.ne.s32.totalorder %s207, %s208
      %p222 = scmp.eq.s32.totalorder %s22, 1
      %p223 = por %p221, %p222
      %p225 = scmp.ne.s32.totalorder %s208, %s224
      %p226 = scmp.eq.s32.totalorder %s22, 0
      %p227 = por %p225, %p226
      %p228 = scmp.le.s32.totalorder 1, %s16
      %p229 = scmp.lt.s32.totalorder %s16, 3
      %p230 = pnand %p228, %p229
      %p231 = pneg %p230
      // Predicated region
      $region9: #{wordlevel_cfa_lstm.1} parent=5 // pred_check
        _
      $region10: #{wordlevel_cfa_lstm.1} parent=5 // pred_check_branch
        %233 = sbr.rel (%p230) target = $region12
      $region11: #{wordlevel_cfa_lstm.1} parent=5 // pred_region
        %s234 = ssub.s32 %s16, 1
        // Predicated region
        $region13: #{wordlevel_cfa_lstm.1} parent=11 // pred_check
          %p235 = pneg %p89
        $region14: #{wordlevel_cfa_lstm.1} parent=11 // pred_check_branch
          %237 = sbr.rel (%p235) target = $region16
        $region15: #{wordlevel_cfa_lstm.1} parent=11 // pred_region
          _
        $region16: #{wordlevel_cfa_lstm.1} parent=11 // pred_fallthru
          _
        // Predicated region
        $region17: #{wordlevel_cfa_lstm.1} parent=11 // pred_check
          %p238 = pneg %p110
        $region18: #{wordlevel_cfa_lstm.1} parent=11 // pred_check_branch
          %240 = sbr.rel (%p238) target = $region20
        $region19: #{wordlevel_cfa_lstm.1} parent=11 // pred_region
          _
        $region20: #{wordlevel_cfa_lstm.1} parent=11 // pred_fallthru
          _
        // Predicated region
        $region21: #{wordlevel_cfa_lstm.1} parent=11 // pred_check
          %p241 = pneg %p131
        $region22: #{wordlevel_cfa_lstm.1} parent=11 // pred_check_branch
          %243 = sbr.rel (%p241) target = $region24
        $region23: #{wordlevel_cfa_lstm.1} parent=11 // pred_region
          _
        $region24: #{wordlevel_cfa_lstm.1} parent=11 // pred_fallthru
          _
        // Predicated region
        $region25: #{wordlevel_cfa_lstm.1} parent=11 // pred_check
          %p244 = pneg %p152
        $region26: #{wordlevel_cfa_lstm.1} parent=11 // pred_check_branch
          %246 = sbr.rel (%p244) target = $region28
        $region27: #{wordlevel_cfa_lstm.1} parent=11 // pred_region
          %s248 = ssub.s32 64, 64
          %249 = vsyncadd [#allocation7], %s248
          %s251 = sshll.u32 [#allocation6], 4
          %s252 = int_to_ptr.vmem [resolvable:$true] %s251
          %254 = dma.hbm_to_vmem [thread:$0]  %s5, 64, %s252, [#allocation7]
        $region28: #{wordlevel_cfa_lstm.1} parent=11 // pred_fallthru
          _
        // Predicated region
        $region29: #{wordlevel_cfa_lstm.1} parent=11 // pred_check
          %p255 = pneg %p173
        $region30: #{wordlevel_cfa_lstm.1} parent=11 // pred_check_branch
          %257 = sbr.rel (%p255) target = $region32
        $region31: #{wordlevel_cfa_lstm.1} parent=11 // pred_region
          %s259 = ssub.s32 128, 128
          %260 = vsyncadd [#allocation9], %s259
          %s262 = sshll.u32 [#allocation8], 4
          %s263 = int_to_ptr.vmem [resolvable:$true] %s262
          %265 = dma.hbm_to_vmem [thread:$0]  %s6, 128, %s263, [#allocation9]
        $region32: #{wordlevel_cfa_lstm.1} parent=11 // pred_fallthru
          _
        // Predicated region
        $region33: #{wordlevel_cfa_lstm.1} parent=11 // pred_check
          %p266 = pneg %p194
        $region34: #{wordlevel_cfa_lstm.1} parent=11 // pred_check_branch
          %268 = sbr.rel (%p266) target = $region36
        $region35: #{wordlevel_cfa_lstm.1} parent=11 // pred_region
          %s270 = ssub.s32 128, 128
          %271 = vsyncadd [#allocation9], %s270
          %s273 = sshll.u32 [#allocation10], 4
          %s274 = int_to_ptr.vmem [resolvable:$true] %s273
          %276 = dma.hbm_to_vmem [thread:$0]  %s7, 128, %s274, [#allocation9]
        $region36: #{wordlevel_cfa_lstm.1} parent=11 // pred_fallthru
          _
      $region12: #{wordlevel_cfa_lstm.1} parent=5 // pred_fallthru
        _
      %p277 = scmp.lt.s32.totalorder %s16, 2
      // Predicated region
      $region37: #{wordlevel_cfa_lstm.1} parent=5 // pred_check
        %p278 = pneg %p277
      $region38: #{wordlevel_cfa_lstm.1} parent=5 // pred_check_branch
        %280 = sbr.rel (%p278) target = $region40
      $region39: #{wordlevel_cfa_lstm.1} parent=5 // pred_region
        // Predicated region
        $region41: #{wordlevel_cfa_lstm.1} parent=39 // pred_check
          %p281 = pneg %p36
        $region42: #{wordlevel_cfa_lstm.1} parent=39 // pred_check_branch
          %283 = sbr.rel (%p281) target = $region44
        $region43: #{wordlevel_cfa_lstm.1} parent=39 // pred_region
          %s284 = sand.u32 %s26, 1
          %s285 = sand.u32 %s26, 1
          %s286 = smul.addr %s285, 256
          %s287 = scalar_lea.vmem [#allocation5], %s286
          %s288 = smul.u32 2, %s16
          %s289 = smul.addr %s288, 4
          %s290 = scalar_lea.vmem %s0, %s289
          // Predicated region
          $region45: #{wordlevel_cfa_lstm.1} parent=43 // pred_check
            _
          $region46: #{wordlevel_cfa_lstm.1} parent=43 // pred_check_branch
            %292 = sbr.rel (0) target = $region48
          $region47: #{wordlevel_cfa_lstm.1} parent=43 // pred_region
            // Predicated region
            $region49: #{wordlevel_cfa_lstm.1} parent=47 // pred_check
              _
            $region50: #{wordlevel_cfa_lstm.1} parent=47 // pred_check_branch
              %294 = sbr.rel (0) target = $region52
            $region51: #{wordlevel_cfa_lstm.1} parent=47 // pred_region
              // Predicated region
              $region64: #{wordlevel_cfa_lstm.1} parent=51 // pred_check
                _
              $region65: #{wordlevel_cfa_lstm.1} parent=51 // pred_check_branch
                %371 = sbr.rel (0) target = $region67
              $region66: #{wordlevel_cfa_lstm.1} parent=51 // pred_region
                loop: start=0, step=1, limit=1
                $region68: #{wordlevel_cfa_lstm.1} parent=66 // loop_pre_header
                  _
                $region69: #{wordlevel_cfa_lstm.1} parent=66 // loop_header
                  %s373 = sphi 0, %s377
                  %p374 = scmp.ge.s32.totalorder %s373, 1
                  %s378 = sphi %s290, %s290
                  %s379 = sphi %s287, %s287
                $region70: #{wordlevel_cfa_lstm.1} parent=66 // loop_header_branch
                  %376 = sbr.rel (%p374) target = $region74
                $region71: #{wordlevel_cfa_lstm.1} parent=66 // loop_body
                  %v380 = vld [vmem:[%s378] sm:$0xff]
                  %381 = vst [vmem:[%s379] sm:$0xff] %v380
                  %v382 = vld [vmem:[%s378 + $0x10] sm:$0xff]
                  %383 = vst [vmem:[%s379 + $0x8] sm:$0xff] %v382
                  %v384 = vld [vmem:[%s378 + $0x20] sm:$0xff]
                  %385 = vst [vmem:[%s379 + $0x10] sm:$0xff] %v384
                  %v386 = vld [vmem:[%s378 + $0x30] sm:$0xff]
                  %387 = vst [vmem:[%s379 + $0x18] sm:$0xff] %v386
                  %v388 = vld [vmem:[%s378 + $0x40] sm:$0xff]
                  %389 = vst [vmem:[%s379 + $0x20] sm:$0xff] %v388
                  %v390 = vld [vmem:[%s378 + $0x50] sm:$0xff]
                  %391 = vst [vmem:[%s379 + $0x28] sm:$0xff] %v390
                  %v392 = vld [vmem:[%s378 + $0x60] sm:$0xff]
                  %393 = vst [vmem:[%s379 + $0x30] sm:$0xff] %v392
                  %v394 = vld [vmem:[%s378 + $0x70] sm:$0xff]
                  %395 = vst [vmem:[%s379 + $0x38] sm:$0xff] %v394
                  %v396 = vld [vmem:[%s378 + $0x80] sm:$0xff]
                  %397 = vst [vmem:[%s379 + $0x40] sm:$0xff] %v396
                  %v398 = vld [vmem:[%s378 + $0x90] sm:$0xff]
                  %399 = vst [vmem:[%s379 + $0x48] sm:$0xff] %v398
                  %v400 = vld [vmem:[%s378 + $0xa0] sm:$0xff]
                  %401 = vst [vmem:[%s379 + $0x50] sm:$0xff] %v400
                  %v402 = vld [vmem:[%s378 + $0xb0] sm:$0xff]
                  %403 = vst [vmem:[%s379 + $0x58] sm:$0xff] %v402
                  %v404 = vld [vmem:[%s378 + $0xc0] sm:$0xff]
                  %405 = vst [vmem:[%s379 + $0x60] sm:$0xff] %v404
                  %v406 = vld [vmem:[%s378 + $0xd0] sm:$0xff]
                  %407 = vst [vmem:[%s379 + $0x68] sm:$0xff] %v406
                  %v408 = vld [vmem:[%s378 + $0xe0] sm:$0xff]
                  %409 = vst [vmem:[%s379 + $0x70] sm:$0xff] %v408
                  %v410 = vld [vmem:[%s378 + $0xf0] sm:$0xff]
                  %411 = vst [vmem:[%s379 + $0x78] sm:$0xff] %v410
                  %v412 = vld [vmem:[%s378 + $0x100] sm:$0xff]
                  %413 = vst [vmem:[%s379 + $0x80] sm:$0xff] %v412
                  %v414 = vld [vmem:[%s378 + $0x110] sm:$0xff]
                  %415 = vst [vmem:[%s379 + $0x88] sm:$0xff] %v414
                  %v416 = vld [vmem:[%s378 + $0x120] sm:$0xff]
                  %417 = vst [vmem:[%s379 + $0x90] sm:$0xff] %v416
                  %v418 = vld [vmem:[%s378 + $0x130] sm:$0xff]
                  %419 = vst [vmem:[%s379 + $0x98] sm:$0xff] %v418
                  %v420 = vld [vmem:[%s378 + $0x140] sm:$0xff]
                  %421 = vst [vmem:[%s379 + $0xa0] sm:$0xff] %v420
                  %v422 = vld [vmem:[%s378 + $0x150] sm:$0xff]
                  %423 = vst [vmem:[%s379 + $0xa8] sm:$0xff] %v422
                  %v424 = vld [vmem:[%s378 + $0x160] sm:$0xff]
                  %425 = vst [vmem:[%s379 + $0xb0] sm:$0xff] %v424
                  %v426 = vld [vmem:[%s378 + $0x170] sm:$0xff]
                  %427 = vst [vmem:[%s379 + $0xb8] sm:$0xff] %v426
                  %v428 = vld [vmem:[%s378 + $0x180] sm:$0xff]
                  %429 = vst [vmem:[%s379 + $0xc0] sm:$0xff] %v428
                  %v430 = vld [vmem:[%s378 + $0x190] sm:$0xff]
                  %431 = vst [vmem:[%s379 + $0xc8] sm:$0xff] %v430
                  %v432 = vld [vmem:[%s378 + $0x1a0] sm:$0xff]
                  %433 = vst [vmem:[%s379 + $0xd0] sm:$0xff] %v432
                  %v434 = vld [vmem:[%s378 + $0x1b0] sm:$0xff]
                  %435 = vst [vmem:[%s379 + $0xd8] sm:$0xff] %v434
                  %v436 = vld [vmem:[%s378 + $0x1c0] sm:$0xff]
                  %437 = vst [vmem:[%s379 + $0xe0] sm:$0xff] %v436
                  %v438 = vld [vmem:[%s378 + $0x1d0] sm:$0xff]
                  %439 = vst [vmem:[%s379 + $0xe8] sm:$0xff] %v438
                  %v440 = vld [vmem:[%s378 + $0x1e0] sm:$0xff]
                  %441 = vst [vmem:[%s379 + $0xf0] sm:$0xff] %v440
                  %v442 = vld [vmem:[%s378 + $0x1f0] sm:$0xff]
                  %443 = vst [vmem:[%s379 + $0xf8] sm:$0xff] %v442
                $region72: #{wordlevel_cfa_lstm.1} parent=66 // loop_footer
                  %s377 = sadd.s32 1, %s373
                $region73: #{wordlevel_cfa_lstm.1} parent=66 // loop_footer_branch
                  %372 = sbr.rel target = $region69
                $region74: #{wordlevel_cfa_lstm.1} parent=66 // loop_exit
                  _
              $region67: #{wordlevel_cfa_lstm.1} parent=51 // pred_fallthru
                _
              // Predicated region
              $region75: #{wordlevel_cfa_lstm.1} parent=51 // pred_check
                _
              $region76: #{wordlevel_cfa_lstm.1} parent=51 // pred_check_branch
                %445 = sbr.rel target = $region78
              $region77: #{wordlevel_cfa_lstm.1} parent=51 // pred_region
                _
              $region78: #{wordlevel_cfa_lstm.1} parent=51 // pred_fallthru
                _
            $region52: #{wordlevel_cfa_lstm.1} parent=47 // pred_fallthru
              _
            // Predicated region
            $region53: #{wordlevel_cfa_lstm.1} parent=47 // pred_check
              _
            $region54: #{wordlevel_cfa_lstm.1} parent=47 // pred_check_branch
              %296 = sbr.rel target = $region56
            $region55: #{wordlevel_cfa_lstm.1} parent=47 // pred_region
              loop: start=0, step=1, limit=1
              $region57: #{wordlevel_cfa_lstm.1} parent=55 // loop_pre_header
                _
              $region58: #{wordlevel_cfa_lstm.1} parent=55 // loop_header
                %s299 = sphi 0, %s303
                %p300 = scmp.ge.s32.totalorder %s299, 1
                %s304 = sphi %s290, %s290
                %s305 = sphi %s287, %s287
              $region59: #{wordlevel_cfa_lstm.1} parent=55 // loop_header_branch
                %302 = sbr.rel (%p300) target = $region63
              $region60: #{wordlevel_cfa_lstm.1} parent=55 // loop_body
                %v306 = vld [vmem:[%s304] sm:$0xff]
                %307 = vst [vmem:[%s305] sm:$0xff] %v306
                %v308 = vld [vmem:[%s304 + $0x10] sm:$0xff]
                %309 = vst [vmem:[%s305 + $0x8] sm:$0xff] %v308
                %v310 = vld [vmem:[%s304 + $0x20] sm:$0xff]
                %311 = vst [vmem:[%s305 + $0x10] sm:$0xff] %v310
                %v312 = vld [vmem:[%s304 + $0x30] sm:$0xff]
                %313 = vst [vmem:[%s305 + $0x18] sm:$0xff] %v312
                %v314 = vld [vmem:[%s304 + $0x40] sm:$0xff]
                %315 = vst [vmem:[%s305 + $0x20] sm:$0xff] %v314
                %v316 = vld [vmem:[%s304 + $0x50] sm:$0xff]
                %317 = vst [vmem:[%s305 + $0x28] sm:$0xff] %v316
                %v318 = vld [vmem:[%s304 + $0x60] sm:$0xff]
                %319 = vst [vmem:[%s305 + $0x30] sm:$0xff] %v318
                %v320 = vld [vmem:[%s304 + $0x70] sm:$0xff]
                %321 = vst [vmem:[%s305 + $0x38] sm:$0xff] %v320
                %v322 = vld [vmem:[%s304 + $0x80] sm:$0xff]
                %323 = vst [vmem:[%s305 + $0x40] sm:$0xff] %v322
                %v324 = vld [vmem:[%s304 + $0x90] sm:$0xff]
                %325 = vst [vmem:[%s305 + $0x48] sm:$0xff] %v324
                %v326 = vld [vmem:[%s304 + $0xa0] sm:$0xff]
                %327 = vst [vmem:[%s305 + $0x50] sm:$0xff] %v326
                %v328 = vld [vmem:[%s304 + $0xb0] sm:$0xff]
                %329 = vst [vmem:[%s305 + $0x58] sm:$0xff] %v328
                %v330 = vld [vmem:[%s304 + $0xc0] sm:$0xff]
                %331 = vst [vmem:[%s305 + $0x60] sm:$0xff] %v330
                %v332 = vld [vmem:[%s304 + $0xd0] sm:$0xff]
                %333 = vst [vmem:[%s305 + $0x68] sm:$0xff] %v332
                %v334 = vld [vmem:[%s304 + $0xe0] sm:$0xff]
                %335 = vst [vmem:[%s305 + $0x70] sm:$0xff] %v334
                %v336 = vld [vmem:[%s304 + $0xf0] sm:$0xff]
                %337 = vst [vmem:[%s305 + $0x78] sm:$0xff] %v336
                %v338 = vld [vmem:[%s304 + $0x100] sm:$0xff]
                %339 = vst [vmem:[%s305 + $0x80] sm:$0xff] %v338
                %v340 = vld [vmem:[%s304 + $0x110] sm:$0xff]
                %341 = vst [vmem:[%s305 + $0x88] sm:$0xff] %v340
                %v342 = vld [vmem:[%s304 + $0x120] sm:$0xff]
                %343 = vst [vmem:[%s305 + $0x90] sm:$0xff] %v342
                %v344 = vld [vmem:[%s304 + $0x130] sm:$0xff]
                %345 = vst [vmem:[%s305 + $0x98] sm:$0xff] %v344
                %v346 = vld [vmem:[%s304 + $0x140] sm:$0xff]
                %347 = vst [vmem:[%s305 + $0xa0] sm:$0xff] %v346
                %v348 = vld [vmem:[%s304 + $0x150] sm:$0xff]
                %349 = vst [vmem:[%s305 + $0xa8] sm:$0xff] %v348
                %v350 = vld [vmem:[%s304 + $0x160] sm:$0xff]
                %351 = vst [vmem:[%s305 + $0xb0] sm:$0xff] %v350
                %v352 = vld [vmem:[%s304 + $0x170] sm:$0xff]
                %353 = vst [vmem:[%s305 + $0xb8] sm:$0xff] %v352
                %v354 = vld [vmem:[%s304 + $0x180] sm:$0xff]
                %355 = vst [vmem:[%s305 + $0xc0] sm:$0xff] %v354
                %v356 = vld [vmem:[%s304 + $0x190] sm:$0xff]
                %357 = vst [vmem:[%s305 + $0xc8] sm:$0xff] %v356
                %v358 = vld [vmem:[%s304 + $0x1a0] sm:$0xff]
                %359 = vst [vmem:[%s305 + $0xd0] sm:$0xff] %v358
                %v360 = vld [vmem:[%s304 + $0x1b0] sm:$0xff]
                %361 = vst [vmem:[%s305 + $0xd8] sm:$0xff] %v360
                %v362 = vld [vmem:[%s304 + $0x1c0] sm:$0xff]
                %363 = vst [vmem:[%s305 + $0xe0] sm:$0xff] %v362
                %v364 = vld [vmem:[%s304 + $0x1d0] sm:$0xff]
                %365 = vst [vmem:[%s305 + $0xe8] sm:$0xff] %v364
                %v366 = vld [vmem:[%s304 + $0x1e0] sm:$0xff]
                %367 = vst [vmem:[%s305 + $0xf0] sm:$0xff] %v366
                %v368 = vld [vmem:[%s304 + $0x1f0] sm:$0xff]
                %369 = vst [vmem:[%s305 + $0xf8] sm:$0xff] %v368
              $region61: #{wordlevel_cfa_lstm.1} parent=55 // loop_footer
                %s303 = sadd.s32 1, %s299
              $region62: #{wordlevel_cfa_lstm.1} parent=55 // loop_footer_branch
                %298 = sbr.rel target = $region58
              $region63: #{wordlevel_cfa_lstm.1} parent=55 // loop_exit
                _
            $region56: #{wordlevel_cfa_lstm.1} parent=47 // pred_fallthru
              _
          $region48: #{wordlevel_cfa_lstm.1} parent=43 // pred_fallthru
            _
          %446 = vnop
        $region44: #{wordlevel_cfa_lstm.1} parent=39 // pred_fallthru
          _
        // Predicated region
        $region79: #{wordlevel_cfa_lstm.1} parent=39 // pred_check
          %p447 = pneg %p62
        $region80: #{wordlevel_cfa_lstm.1} parent=39 // pred_check_branch
          %449 = sbr.rel (%p447) target = $region82
        $region81: #{wordlevel_cfa_lstm.1} parent=39 // pred_region
          %p450 = scmp.lt.s32.totalorder %s16, 1
          %s451 = scalar_select %p450, %s16, 1
          %s452 = smul.addr %s451, 32
          %s453 = smul.addr %s452, 4
          %s454 = scalar_lea.vmem %s1, %s453
        $region82: #{wordlevel_cfa_lstm.1} parent=39 // pred_fallthru
          _
      $region40: #{wordlevel_cfa_lstm.1} parent=5 // pred_fallthru
        _
      %p455 = scmp.le.s32.totalorder 1, %s16
      %p456 = scmp.lt.s32.totalorder %s16, 3
      %p457 = pnand %p455, %p456
      %p458 = pneg %p457
      // Predicated region
      $region83: #{wordlevel_cfa_lstm.1} parent=5 // pred_check
        _
      $region84: #{wordlevel_cfa_lstm.1} parent=5 // pred_check_branch
        %460 = sbr.rel (%p457) target = $region86
      $region85: #{wordlevel_cfa_lstm.1} parent=5 // pred_region
        %s461 = ssub.s32 %s16, 1
        %s462 = sand.u32 %s29, 1
        %s463 = sand.u32 %s29, 1
        %s464 = smul.addr %s463, 256
        %s465 = scalar_lea.vmem [#allocation5], %s464
        // Predicated region
        $region87: #{wordlevel_cfa_lstm.1} parent=85 // pred_check
          %p466 = pneg %p42
        $region88: #{wordlevel_cfa_lstm.1} parent=85 // pred_check_branch
          %468 = sbr.rel (%p466) target = $region90
        $region89: #{wordlevel_cfa_lstm.1} parent=85 // pred_region
          _
        $region90: #{wordlevel_cfa_lstm.1} parent=85 // pred_fallthru
          _
        // Predicated region
        $region91: #{wordlevel_cfa_lstm.1} parent=85 // pred_check
          %p469 = pneg %p152
        $region92: #{wordlevel_cfa_lstm.1} parent=85 // pred_check_branch
          %471 = sbr.rel (%p469) target = $region94
        $region93: #{wordlevel_cfa_lstm.1} parent=85 // pred_region
          %472 = dma.done [#allocation7], 64
        $region94: #{wordlevel_cfa_lstm.1} parent=85 // pred_fallthru
          _
        // Predicated region
        $region95: #{wordlevel_cfa_lstm.1} parent=85 // pred_check
          %p473 = pneg %p173
        $region96: #{wordlevel_cfa_lstm.1} parent=85 // pred_check_branch
          %475 = sbr.rel (%p473) target = $region98
        $region97: #{wordlevel_cfa_lstm.1} parent=85 // pred_region
          %476 = dma.done [#allocation9], 128
        $region98: #{wordlevel_cfa_lstm.1} parent=85 // pred_fallthru
          _
        // Predicated region
        $region99: #{wordlevel_cfa_lstm.1} parent=85 // pred_check
          %p477 = pneg %p194
        $region100: #{wordlevel_cfa_lstm.1} parent=85 // pred_check_branch
          %479 = sbr.rel (%p477) target = $region102
        $region101: #{wordlevel_cfa_lstm.1} parent=85 // pred_region
          %480 = dma.done [#allocation9], 128
        $region102: #{wordlevel_cfa_lstm.1} parent=85 // pred_fallthru
          _
        %s481 = sand.u32 %s29, 1
        %s482 = sand.u32 %s29, 1
        %s483 = smul.addr %s482, 256
        %s484 = scalar_lea.vmem [#allocation5], %s483
        %p485 = pneg %p42
        %p486 = pneg %p39
        %p487 = scmp.lt.s32.totalorder %s21, 1
        %s488 = scalar_select %p487, %s21, 1
        %s489 = smul.addr %s488, 32
        %s490 = smul.addr %s489, 4
        %s491 = scalar_lea.vmem %s1, %s490
        %p492 = pneg %p68
        %p493 = pneg %p65
        %p494 = pneg %p89
        %p495 = pneg %p86
        %p496 = pneg %p110
        %p497 = pneg %p107
        %p498 = pneg %p131
        %p499 = pneg %p128
        %p500 = pneg %p152
        %p501 = pneg %p149
        %p502 = pneg %p173
        %p503 = pneg %p170
        %p504 = pneg %p194
        %p505 = pneg %p191
        %p506 = pneg %p220
        %p507 = pneg %p217
        %p508 = scmp.lt.s32.totalorder %s21, 1
        %s509 = scalar_select %p508, %s21, 1
        %s510 = smul.addr %s509, 2
        %s511 = smul.addr %s510, 4
        %s512 = scalar_lea.vmem %s8, %s511
        %s513 = smul.u32 2, %s21
        %p514 = scmp.lt.s32.totalorder %s21, 1
        %s515 = scalar_select %p514, %s21, 1
        %s516 = smul.addr %s515, 32
        %s517 = smul.addr %s516, 4
        %s518 = scalar_lea.vmem %s1, %s517
        %p519 = scmp.lt.s32.totalorder %s21, 1
        %s520 = scalar_select %p519, %s21, 1
        %s521 = smul.addr %s520, 2
        %s522 = smul.addr %s521, 4
        %s523 = scalar_lea.vmem %s8, %s522
        %v525 = vld [vmem:[%s2] sm:$0xff]
        %v526 = vld [vmem:[%s2 + $0x8] sm:$0xff]
        %v527 = vld [vmem:[%s2 + $0x10] sm:$0xff]
        %v528 = vld [vmem:[%s2 + $0x18] sm:$0xff]
        %v529 = vld [vmem:[%s2 + $0x20] sm:$0xff]
        %v530 = vld [vmem:[%s2 + $0x28] sm:$0xff]
        %v531 = vld [vmem:[%s2 + $0x30] sm:$0xff]
        %v532 = vld [vmem:[%s2 + $0x38] sm:$0xff]
        %v533 = vld [vmem:[%s2 + $0x40] sm:$0xff]
        %v534 = vld [vmem:[%s2 + $0x48] sm:$0xff]
        %v535 = vld [vmem:[%s2 + $0x50] sm:$0xff]
        %v536 = vld [vmem:[%s2 + $0x58] sm:$0xff]
        %v537 = vld [vmem:[%s2 + $0x60] sm:$0xff]
        %v538 = vld [vmem:[%s2 + $0x68] sm:$0xff]
        %v539 = vld [vmem:[%s2 + $0x70] sm:$0xff]
        %v540 = vld [vmem:[%s2 + $0x78] sm:$0xff]
        %v541 = vld [vmem:[%s2 + $0x80] sm:$0xff]
        %v542 = vld [vmem:[%s2 + $0x88] sm:$0xff]
        %v543 = vld [vmem:[%s2 + $0x90] sm:$0xff]
        %v544 = vld [vmem:[%s2 + $0x98] sm:$0xff]
        %v545 = vld [vmem:[%s2 + $0xa0] sm:$0xff]
        %v546 = vld [vmem:[%s2 + $0xa8] sm:$0xff]
        %v547 = vld [vmem:[%s2 + $0xb0] sm:$0xff]
        %v548 = vld [vmem:[%s2 + $0xb8] sm:$0xff]
        %v549 = vld [vmem:[%s2 + $0xc0] sm:$0xff]
        %v550 = vld [vmem:[%s2 + $0xc8] sm:$0xff]
        %v551 = vld [vmem:[%s2 + $0xd0] sm:$0xff]
        %v552 = vld [vmem:[%s2 + $0xd8] sm:$0xff]
        %v553 = vld [vmem:[%s2 + $0xe0] sm:$0xff]
        %v554 = vld [vmem:[%s2 + $0xe8] sm:$0xff]
        %v555 = vld [vmem:[%s2 + $0xf0] sm:$0xff]
        %v556 = vld [vmem:[%s2 + $0xf8] sm:$0xff]
        %v557 = vld [vmem:[%s2 + $0x100] sm:$0xff]
        %v558 = vld [vmem:[%s2 + $0x108] sm:$0xff]
        %v559 = vld [vmem:[%s2 + $0x110] sm:$0xff]
        %v560 = vld [vmem:[%s2 + $0x118] sm:$0xff]
        %v561 = vld [vmem:[%s2 + $0x120] sm:$0xff]
        %v562 = vld [vmem:[%s2 + $0x128] sm:$0xff]
        %v563 = vld [vmem:[%s2 + $0x130] sm:$0xff]
        %v564 = vld [vmem:[%s2 + $0x138] sm:$0xff]
        %v565 = vld [vmem:[%s2 + $0x140] sm:$0xff]
        %v566 = vld [vmem:[%s2 + $0x148] sm:$0xff]
        %v567 = vld [vmem:[%s2 + $0x150] sm:$0xff]
        %v568 = vld [vmem:[%s2 + $0x158] sm:$0xff]
        %v569 = vld [vmem:[%s2 + $0x160] sm:$0xff]
        %v570 = vld [vmem:[%s2 + $0x168] sm:$0xff]
        %v571 = vld [vmem:[%s2 + $0x170] sm:$0xff]
        %v572 = vld [vmem:[%s2 + $0x178] sm:$0xff]
        %v573 = vld [vmem:[%s2 + $0x180] sm:$0xff]
        %v574 = vld [vmem:[%s2 + $0x188] sm:$0xff]
        %v575 = vld [vmem:[%s2 + $0x190] sm:$0xff]
        %v576 = vld [vmem:[%s2 + $0x198] sm:$0xff]
        %v577 = vld [vmem:[%s2 + $0x1a0] sm:$0xff]
        %v578 = vld [vmem:[%s2 + $0x1a8] sm:$0xff]
        %v579 = vld [vmem:[%s2 + $0x1b0] sm:$0xff]
        %v580 = vld [vmem:[%s2 + $0x1b8] sm:$0xff]
        %v581 = vld [vmem:[%s2 + $0x1c0] sm:$0xff]
        %v582 = vld [vmem:[%s2 + $0x1c8] sm:$0xff]
        %v583 = vld [vmem:[%s2 + $0x1d0] sm:$0xff]
        %v584 = vld [vmem:[%s2 + $0x1d8] sm:$0xff]
        %v585 = vld [vmem:[%s2 + $0x1e0] sm:$0xff]
        %v586 = vld [vmem:[%s2 + $0x1e8] sm:$0xff]
        %v587 = vld [vmem:[%s2 + $0x1f0] sm:$0xff]
        %v588 = vld [vmem:[%s2 + $0x1f8] sm:$0xff]
        %v589 = vld [vmem:[%s465] sm:$0xff]
        %v590 = vld [vmem:[%s465 + $0x8] sm:$0xff]
        %v591 = vld [vmem:[%s465 + $0x10] sm:$0xff]
        %v592 = vld [vmem:[%s465 + $0x18] sm:$0xff]
        %v593 = vld [vmem:[%s465 + $0x20] sm:$0xff]
        %v594 = vld [vmem:[%s465 + $0x28] sm:$0xff]
        %v595 = vld [vmem:[%s465 + $0x30] sm:$0xff]
        %v596 = vld [vmem:[%s465 + $0x38] sm:$0xff]
        %v597 = vld [vmem:[%s465 + $0x40] sm:$0xff]
        %v598 = vld [vmem:[%s465 + $0x48] sm:$0xff]
        %v599 = vld [vmem:[%s465 + $0x50] sm:$0xff]
        %v600 = vld [vmem:[%s465 + $0x58] sm:$0xff]
        %v601 = vld [vmem:[%s465 + $0x60] sm:$0xff]
        %v602 = vld [vmem:[%s465 + $0x68] sm:$0xff]
        %v603 = vld [vmem:[%s465 + $0x70] sm:$0xff]
        %v604 = vld [vmem:[%s465 + $0x78] sm:$0xff]
        %v605 = vld [vmem:[%s465 + $0x80] sm:$0xff]
        %v606 = vld [vmem:[%s465 + $0x88] sm:$0xff]
        %v607 = vld [vmem:[%s465 + $0x90] sm:$0xff]
        %v608 = vld [vmem:[%s465 + $0x98] sm:$0xff]
        %v609 = vld [vmem:[%s465 + $0xa0] sm:$0xff]
        %v610 = vld [vmem:[%s465 + $0xa8] sm:$0xff]
        %v611 = vld [vmem:[%s465 + $0xb0] sm:$0xff]
        %v612 = vld [vmem:[%s465 + $0xb8] sm:$0xff]
        %v613 = vld [vmem:[%s465 + $0xc0] sm:$0xff]
        %v614 = vld [vmem:[%s465 + $0xc8] sm:$0xff]
        %v615 = vld [vmem:[%s465 + $0xd0] sm:$0xff]
        %v616 = vld [vmem:[%s465 + $0xd8] sm:$0xff]
        %v617 = vld [vmem:[%s465 + $0xe0] sm:$0xff]
        %v618 = vld [vmem:[%s465 + $0xe8] sm:$0xff]
        %v619 = vld [vmem:[%s465 + $0xf0] sm:$0xff]
        %v620 = vld [vmem:[%s465 + $0xf8] sm:$0xff]
        %v621 = vld [vmem:[%s3] sm:$0xff]
        %v622 = vld [vmem:[%s3 + $0x8] sm:$0xff]
        %v623 = vld [vmem:[%s3 + $0x10] sm:$0xff]
        %v624 = vld [vmem:[%s3 + $0x18] sm:$0xff]
        %v625 = vld [vmem:[%s3 + $0x20] sm:$0xff]
        %v626 = vld [vmem:[%s3 + $0x28] sm:$0xff]
        %v627 = vld [vmem:[%s3 + $0x30] sm:$0xff]
        %v628 = vld [vmem:[%s3 + $0x38] sm:$0xff]
        %v629 = vld [vmem:[%s3 + $0x40] sm:$0xff]
        %v630 = vld [vmem:[%s3 + $0x48] sm:$0xff]
        %v631 = vld [vmem:[%s3 + $0x50] sm:$0xff]
        %v632 = vld [vmem:[%s3 + $0x58] sm:$0xff]
        %v633 = vld [vmem:[%s3 + $0x60] sm:$0xff]
        %v634 = vld [vmem:[%s3 + $0x68] sm:$0xff]
        %v635 = vld [vmem:[%s3 + $0x70] sm:$0xff]
        %v636 = vld [vmem:[%s3 + $0x78] sm:$0xff]
        %v637 = vld [vmem:[%s3 + $0x80] sm:$0xff]
        %v638 = vld [vmem:[%s3 + $0x88] sm:$0xff]
        %v639 = vld [vmem:[%s3 + $0x90] sm:$0xff]
        %v640 = vld [vmem:[%s3 + $0x98] sm:$0xff]
        %v641 = vld [vmem:[%s3 + $0xa0] sm:$0xff]
        %v642 = vld [vmem:[%s3 + $0xa8] sm:$0xff]
        %v643 = vld [vmem:[%s3 + $0xb0] sm:$0xff]
        %v644 = vld [vmem:[%s3 + $0xb8] sm:$0xff]
        %v645 = vld [vmem:[%s3 + $0xc0] sm:$0xff]
        %v646 = vld [vmem:[%s3 + $0xc8] sm:$0xff]
        %v647 = vld [vmem:[%s3 + $0xd0] sm:$0xff]
        %v648 = vld [vmem:[%s3 + $0xd8] sm:$0xff]
        %v649 = vld [vmem:[%s3 + $0xe0] sm:$0xff]
        %v650 = vld [vmem:[%s3 + $0xe8] sm:$0xff]
        %v651 = vld [vmem:[%s3 + $0xf0] sm:$0xff]
        %v652 = vld [vmem:[%s3 + $0xf8] sm:$0xff]
        %v653 = vld [vmem:[%s3 + $0x100] sm:$0xff]
        %v654 = vld [vmem:[%s3 + $0x108] sm:$0xff]
        %v655 = vld [vmem:[%s3 + $0x110] sm:$0xff]
        %v656 = vld [vmem:[%s3 + $0x118] sm:$0xff]
        %v657 = vld [vmem:[%s3 + $0x120] sm:$0xff]
        %v658 = vld [vmem:[%s3 + $0x128] sm:$0xff]
        %v659 = vld [vmem:[%s3 + $0x130] sm:$0xff]
        %v660 = vld [vmem:[%s3 + $0x138] sm:$0xff]
        %v661 = vld [vmem:[%s3 + $0x140] sm:$0xff]
        %v662 = vld [vmem:[%s3 + $0x148] sm:$0xff]
        %v663 = vld [vmem:[%s3 + $0x150] sm:$0xff]
        %v664 = vld [vmem:[%s3 + $0x158] sm:$0xff]
        %v665 = vld [vmem:[%s3 + $0x160] sm:$0xff]
        %v666 = vld [vmem:[%s3 + $0x168] sm:$0xff]
        %v667 = vld [vmem:[%s3 + $0x170] sm:$0xff]
        %v668 = vld [vmem:[%s3 + $0x178] sm:$0xff]
        %v669 = vld [vmem:[%s3 + $0x180] sm:$0xff]
        %v670 = vld [vmem:[%s3 + $0x188] sm:$0xff]
        %v671 = vld [vmem:[%s3 + $0x190] sm:$0xff]
        %v672 = vld [vmem:[%s3 + $0x198] sm:$0xff]
        %v673 = vld [vmem:[%s3 + $0x1a0] sm:$0xff]
        %v674 = vld [vmem:[%s3 + $0x1a8] sm:$0xff]
        %v675 = vld [vmem:[%s3 + $0x1b0] sm:$0xff]
        %v676 = vld [vmem:[%s3 + $0x1b8] sm:$0xff]
        %v677 = vld [vmem:[%s3 + $0x1c0] sm:$0xff]
        %v678 = vld [vmem:[%s3 + $0x1c8] sm:$0xff]
        %v679 = vld [vmem:[%s3 + $0x1d0] sm:$0xff]
        %v680 = vld [vmem:[%s3 + $0x1d8] sm:$0xff]
        %v681 = vld [vmem:[%s3 + $0x1e0] sm:$0xff]
        %v682 = vld [vmem:[%s3 + $0x1e8] sm:$0xff]
        %v683 = vld [vmem:[%s3 + $0x1f0] sm:$0xff]
        %v684 = vld [vmem:[%s3 + $0x1f8] sm:$0xff]
        %686 = vset.pattern.permute.xlu0 0
        %687 = vperm.xlu0 %686, %v621
        %v688 = vpop.permute.xlu0 %687
        %691 = vset.pattern.permute.xlu0 0
        %692 = vperm.xlu0 %691, %v622
        %v693 = vpop.permute.xlu0 %692
        %696 = vset.pattern.permute.xlu0 0
        %697 = vperm.xlu0 %696, %v623
        %v698 = vpop.permute.xlu0 %697
        %701 = vset.pattern.permute.xlu0 0
        %702 = vperm.xlu0 %701, %v624
        %v703 = vpop.permute.xlu0 %702
        %706 = vset.pattern.permute.xlu0 0
        %707 = vperm.xlu0 %706, %v625
        %v708 = vpop.permute.xlu0 %707
        %711 = vset.pattern.permute.xlu0 0
        %712 = vperm.xlu0 %711, %v626
        %v713 = vpop.permute.xlu0 %712
        %716 = vset.pattern.permute.xlu0 0
        %717 = vperm.xlu0 %716, %v627
        %v718 = vpop.permute.xlu0 %717
        %721 = vset.pattern.permute.xlu0 0
        %722 = vperm.xlu0 %721, %v628
        %v723 = vpop.permute.xlu0 %722
        %726 = vset.pattern.permute.xlu0 0
        %727 = vperm.xlu0 %726, %v629
        %v728 = vpop.permute.xlu0 %727
        %731 = vset.pattern.permute.xlu0 0
        %732 = vperm.xlu0 %731, %v630
        %v733 = vpop.permute.xlu0 %732
        %736 = vset.pattern.permute.xlu0 0
        %737 = vperm.xlu0 %736, %v631
        %v738 = vpop.permute.xlu0 %737
        %741 = vset.pattern.permute.xlu0 0
        %742 = vperm.xlu0 %741, %v632
        %v743 = vpop.permute.xlu0 %742
        %746 = vset.pattern.permute.xlu0 0
        %747 = vperm.xlu0 %746, %v633
        %v748 = vpop.permute.xlu0 %747
        %751 = vset.pattern.permute.xlu0 0
        %752 = vperm.xlu0 %751, %v634
        %v753 = vpop.permute.xlu0 %752
        %756 = vset.pattern.permute.xlu0 0
        %757 = vperm.xlu0 %756, %v635
        %v758 = vpop.permute.xlu0 %757
        %761 = vset.pattern.permute.xlu0 0
        %762 = vperm.xlu0 %761, %v636
        %v763 = vpop.permute.xlu0 %762
        %766 = vset.pattern.permute.xlu0 0
        %767 = vperm.xlu0 %766, %v637
        %v768 = vpop.permute.xlu0 %767
        %771 = vset.pattern.permute.xlu0 0
        %772 = vperm.xlu0 %771, %v638
        %v773 = vpop.permute.xlu0 %772
        %776 = vset.pattern.permute.xlu0 0
        %777 = vperm.xlu0 %776, %v639
        %v778 = vpop.permute.xlu0 %777
        %781 = vset.pattern.permute.xlu0 0
        %782 = vperm.xlu0 %781, %v640
        %v783 = vpop.permute.xlu0 %782
        %786 = vset.pattern.permute.xlu0 0
        %787 = vperm.xlu0 %786, %v641
        %v788 = vpop.permute.xlu0 %787
        %791 = vset.pattern.permute.xlu0 0
        %792 = vperm.xlu0 %791, %v642
        %v793 = vpop.permute.xlu0 %792
        %796 = vset.pattern.permute.xlu0 0
        %797 = vperm.xlu0 %796, %v643
        %v798 = vpop.permute.xlu0 %797
        %801 = vset.pattern.permute.xlu0 0
        %802 = vperm.xlu0 %801, %v644
        %v803 = vpop.permute.xlu0 %802
        %806 = vset.pattern.permute.xlu0 0
        %807 = vperm.xlu0 %806, %v645
        %v808 = vpop.permute.xlu0 %807
        %811 = vset.pattern.permute.xlu0 0
        %812 = vperm.xlu0 %811, %v646
        %v813 = vpop.permute.xlu0 %812
        %816 = vset.pattern.permute.xlu0 0
        %817 = vperm.xlu0 %816, %v647
        %v818 = vpop.permute.xlu0 %817
        %821 = vset.pattern.permute.xlu0 0
        %822 = vperm.xlu0 %821, %v648
        %v823 = vpop.permute.xlu0 %822
        %826 = vset.pattern.permute.xlu0 0
        %827 = vperm.xlu0 %826, %v649
        %v828 = vpop.permute.xlu0 %827
        %831 = vset.pattern.permute.xlu0 0
        %832 = vperm.xlu0 %831, %v650
        %v833 = vpop.permute.xlu0 %832
        %836 = vset.pattern.permute.xlu0 0
        %837 = vperm.xlu0 %836, %v651
        %v838 = vpop.permute.xlu0 %837
        %841 = vset.pattern.permute.xlu0 0
        %842 = vperm.xlu0 %841, %v652
        %v843 = vpop.permute.xlu0 %842
        %846 = vset.pattern.permute.xlu0 0
        %847 = vperm.xlu0 %846, %v653
        %v848 = vpop.permute.xlu0 %847
        %851 = vset.pattern.permute.xlu0 0
        %852 = vperm.xlu0 %851, %v654
        %v853 = vpop.permute.xlu0 %852
        %856 = vset.pattern.permute.xlu0 0
        %857 = vperm.xlu0 %856, %v655
        %v858 = vpop.permute.xlu0 %857
        %861 = vset.pattern.permute.xlu0 0
        %862 = vperm.xlu0 %861, %v656
        %v863 = vpop.permute.xlu0 %862
        %866 = vset.pattern.permute.xlu0 0
        %867 = vperm.xlu0 %866, %v657
        %v868 = vpop.permute.xlu0 %867
        %871 = vset.pattern.permute.xlu0 0
        %872 = vperm.xlu0 %871, %v658
        %v873 = vpop.permute.xlu0 %872
        %876 = vset.pattern.permute.xlu0 0
        %877 = vperm.xlu0 %876, %v659
        %v878 = vpop.permute.xlu0 %877
        %881 = vset.pattern.permute.xlu0 0
        %882 = vperm.xlu0 %881, %v660
        %v883 = vpop.permute.xlu0 %882
        %886 = vset.pattern.permute.xlu0 0
        %887 = vperm.xlu0 %886, %v661
        %v888 = vpop.permute.xlu0 %887
        %891 = vset.pattern.permute.xlu0 0
        %892 = vperm.xlu0 %891, %v662
        %v893 = vpop.permute.xlu0 %892
        %896 = vset.pattern.permute.xlu0 0
        %897 = vperm.xlu0 %896, %v663
        %v898 = vpop.permute.xlu0 %897
        %901 = vset.pattern.permute.xlu0 0
        %902 = vperm.xlu0 %901, %v664
        %v903 = vpop.permute.xlu0 %902
        %906 = vset.pattern.permute.xlu0 0
        %907 = vperm.xlu0 %906, %v665
        %v908 = vpop.permute.xlu0 %907
        %911 = vset.pattern.permute.xlu0 0
        %912 = vperm.xlu0 %911, %v666
        %v913 = vpop.permute.xlu0 %912
        %916 = vset.pattern.permute.xlu0 0
        %917 = vperm.xlu0 %916, %v667
        %v918 = vpop.permute.xlu0 %917
        %921 = vset.pattern.permute.xlu0 0
        %922 = vperm.xlu0 %921, %v668
        %v923 = vpop.permute.xlu0 %922
        %926 = vset.pattern.permute.xlu0 0
        %927 = vperm.xlu0 %926, %v669
        %v928 = vpop.permute.xlu0 %927
        %931 = vset.pattern.permute.xlu0 0
        %932 = vperm.xlu0 %931, %v670
        %v933 = vpop.permute.xlu0 %932
        %936 = vset.pattern.permute.xlu0 0
        %937 = vperm.xlu0 %936, %v671
        %v938 = vpop.permute.xlu0 %937
        %941 = vset.pattern.permute.xlu0 0
        %942 = vperm.xlu0 %941, %v672
        %v943 = vpop.permute.xlu0 %942
        %946 = vset.pattern.permute.xlu0 0
        %947 = vperm.xlu0 %946, %v673
        %v948 = vpop.permute.xlu0 %947
        %951 = vset.pattern.permute.xlu0 0
        %952 = vperm.xlu0 %951, %v674
        %v953 = vpop.permute.xlu0 %952
        %956 = vset.pattern.permute.xlu0 0
        %957 = vperm.xlu0 %956, %v675
        %v958 = vpop.permute.xlu0 %957
        %961 = vset.pattern.permute.xlu0 0
        %962 = vperm.xlu0 %961, %v676
        %v963 = vpop.permute.xlu0 %962
        %966 = vset.pattern.permute.xlu0 0
        %967 = vperm.xlu0 %966, %v677
        %v968 = vpop.permute.xlu0 %967
        %971 = vset.pattern.permute.xlu0 0
        %972 = vperm.xlu0 %971, %v678
        %v973 = vpop.permute.xlu0 %972
        %976 = vset.pattern.permute.xlu0 0
        %977 = vperm.xlu0 %976, %v679
        %v978 = vpop.permute.xlu0 %977
        %981 = vset.pattern.permute.xlu0 0
        %982 = vperm.xlu0 %981, %v680
        %v983 = vpop.permute.xlu0 %982
        %986 = vset.pattern.permute.xlu0 0
        %987 = vperm.xlu0 %986, %v681
        %v988 = vpop.permute.xlu0 %987
        %991 = vset.pattern.permute.xlu0 0
        %992 = vperm.xlu0 %991, %v682
        %v993 = vpop.permute.xlu0 %992
        %996 = vset.pattern.permute.xlu0 0
        %997 = vperm.xlu0 %996, %v683
        %v998 = vpop.permute.xlu0 %997
        %1001 = vset.pattern.permute.xlu0 0
        %1002 = vperm.xlu0 %1001, %v684
        %v1003 = vpop.permute.xlu0 %1002
        %v1069 = vunpack.c.l.b16 %v525
        %v1070 = vunpack.c.h.b16 %v525
        %v1071 = vunpack.c.l.b16 %v526
        %v1072 = vunpack.c.h.b16 %v526
        %v1073 = vunpack.c.l.b16 %v527
        %v1074 = vunpack.c.h.b16 %v527
        %v1075 = vunpack.c.l.b16 %v528
        %v1076 = vunpack.c.h.b16 %v528
        %v1077 = vunpack.c.l.b16 %v529
        %v1078 = vunpack.c.h.b16 %v529
        %v1079 = vunpack.c.l.b16 %v530
        %v1080 = vunpack.c.h.b16 %v530
        %v1081 = vunpack.c.l.b16 %v531
        %v1082 = vunpack.c.h.b16 %v531
        %v1083 = vunpack.c.l.b16 %v532
        %v1084 = vunpack.c.h.b16 %v532
        %v1085 = vunpack.c.l.b16 %v533
        %v1086 = vunpack.c.h.b16 %v533
        %v1087 = vunpack.c.l.b16 %v534
        %v1088 = vunpack.c.h.b16 %v534
        %v1089 = vunpack.c.l.b16 %v535
        %v1090 = vunpack.c.h.b16 %v535
        %v1091 = vunpack.c.l.b16 %v536
        %v1092 = vunpack.c.h.b16 %v536
        %v1093 = vunpack.c.l.b16 %v537
        %v1094 = vunpack.c.h.b16 %v537
        %v1095 = vunpack.c.l.b16 %v538
        %v1096 = vunpack.c.h.b16 %v538
        %v1097 = vunpack.c.l.b16 %v539
        %v1098 = vunpack.c.h.b16 %v539
        %v1099 = vunpack.c.l.b16 %v540
        %v1100 = vunpack.c.h.b16 %v540
        %v1101 = vunpack.c.l.b16 %v541
        %v1102 = vunpack.c.h.b16 %v541
        %v1103 = vunpack.c.l.b16 %v542
        %v1104 = vunpack.c.h.b16 %v542
        %v1105 = vunpack.c.l.b16 %v543
        %v1106 = vunpack.c.h.b16 %v543
        %v1107 = vunpack.c.l.b16 %v544
        %v1108 = vunpack.c.h.b16 %v544
        %v1109 = vunpack.c.l.b16 %v545
        %v1110 = vunpack.c.h.b16 %v545
        %v1111 = vunpack.c.l.b16 %v546
        %v1112 = vunpack.c.h.b16 %v546
        %v1113 = vunpack.c.l.b16 %v547
        %v1114 = vunpack.c.h.b16 %v547
        %v1115 = vunpack.c.l.b16 %v548
        %v1116 = vunpack.c.h.b16 %v548
        %v1117 = vunpack.c.l.b16 %v549
        %v1118 = vunpack.c.h.b16 %v549
        %v1119 = vunpack.c.l.b16 %v550
        %v1120 = vunpack.c.h.b16 %v550
        %v1121 = vunpack.c.l.b16 %v551
        %v1122 = vunpack.c.h.b16 %v551
        %v1123 = vunpack.c.l.b16 %v552
        %v1124 = vunpack.c.h.b16 %v552
        %v1125 = vunpack.c.l.b16 %v553
        %v1126 = vunpack.c.h.b16 %v553
        %v1127 = vunpack.c.l.b16 %v554
        %v1128 = vunpack.c.h.b16 %v554
        %v1129 = vunpack.c.l.b16 %v555
        %v1130 = vunpack.c.h.b16 %v555
        %v1131 = vunpack.c.l.b16 %v556
        %v1132 = vunpack.c.h.b16 %v556
        %v1133 = vunpack.c.l.b16 %v557
        %v1134 = vunpack.c.h.b16 %v557
        %v1135 = vunpack.c.l.b16 %v558
        %v1136 = vunpack.c.h.b16 %v558
        %v1137 = vunpack.c.l.b16 %v559
        %v1138 = vunpack.c.h.b16 %v559
        %v1139 = vunpack.c.l.b16 %v560
        %v1140 = vunpack.c.h.b16 %v560
        %v1141 = vunpack.c.l.b16 %v561
        %v1142 = vunpack.c.h.b16 %v561
        %v1143 = vunpack.c.l.b16 %v562
        %v1144 = vunpack.c.h.b16 %v562
        %v1145 = vunpack.c.l.b16 %v563
        %v1146 = vunpack.c.h.b16 %v563
        %v1147 = vunpack.c.l.b16 %v564
        %v1148 = vunpack.c.h.b16 %v564
        %v1149 = vunpack.c.l.b16 %v565
        %v1150 = vunpack.c.h.b16 %v565
        %v1151 = vunpack.c.l.b16 %v566
        %v1152 = vunpack.c.h.b16 %v566
        %v1153 = vunpack.c.l.b16 %v567
        %v1154 = vunpack.c.h.b16 %v567
        %v1155 = vunpack.c.l.b16 %v568
        %v1156 = vunpack.c.h.b16 %v568
        %v1157 = vunpack.c.l.b16 %v569
        %v1158 = vunpack.c.h.b16 %v569
        %v1159 = vunpack.c.l.b16 %v570
        %v1160 = vunpack.c.h.b16 %v570
        %v1161 = vunpack.c.l.b16 %v571
        %v1162 = vunpack.c.h.b16 %v571
        %v1163 = vunpack.c.l.b16 %v572
        %v1164 = vunpack.c.h.b16 %v572
        %v1165 = vunpack.c.l.b16 %v573
        %v1166 = vunpack.c.h.b16 %v573
        %v1167 = vunpack.c.l.b16 %v574
        %v1168 = vunpack.c.h.b16 %v574
        %v1169 = vunpack.c.l.b16 %v575
        %v1170 = vunpack.c.h.b16 %v575
        %v1171 = vunpack.c.l.b16 %v576
        %v1172 = vunpack.c.h.b16 %v576
        %v1173 = vunpack.c.l.b16 %v577
        %v1174 = vunpack.c.h.b16 %v577
        %v1175 = vunpack.c.l.b16 %v578
        %v1176 = vunpack.c.h.b16 %v578
        %v1177 = vunpack.c.l.b16 %v579
        %v1178 = vunpack.c.h.b16 %v579
        %v1179 = vunpack.c.l.b16 %v580
        %v1180 = vunpack.c.h.b16 %v580
        %v1181 = vunpack.c.l.b16 %v581
        %v1182 = vunpack.c.h.b16 %v581
        %v1183 = vunpack.c.l.b16 %v582
        %v1184 = vunpack.c.h.b16 %v582
        %v1185 = vunpack.c.l.b16 %v583
        %v1186 = vunpack.c.h.b16 %v583
        %v1187 = vunpack.c.l.b16 %v584
        %v1188 = vunpack.c.h.b16 %v584
        %v1189 = vunpack.c.l.b16 %v585
        %v1190 = vunpack.c.h.b16 %v585
        %v1191 = vunpack.c.l.b16 %v586
        %v1192 = vunpack.c.h.b16 %v586
        %v1193 = vunpack.c.l.b16 %v587
        %v1194 = vunpack.c.h.b16 %v587
        %v1195 = vunpack.c.l.b16 %v588
        %v1196 = vunpack.c.h.b16 %v588
        %v1197 = vpack.c.b16 %v1071, %v1069
        %v1198 = vpack.c.b16 %v1072, %v1070
        %v1199 = vpack.c.b16 %v1075, %v1073
        %v1200 = vpack.c.b16 %v1076, %v1074
        %v1201 = vpack.c.b16 %v1079, %v1077
        %v1202 = vpack.c.b16 %v1080, %v1078
        %v1203 = vpack.c.b16 %v1083, %v1081
        %v1204 = vpack.c.b16 %v1084, %v1082
        %v1205 = vpack.c.b16 %v1087, %v1085
        %v1206 = vpack.c.b16 %v1088, %v1086
        %v1207 = vpack.c.b16 %v1091, %v1089
        %v1208 = vpack.c.b16 %v1092, %v1090
        %v1209 = vpack.c.b16 %v1095, %v1093
        %v1210 = vpack.c.b16 %v1096, %v1094
        %v1211 = vpack.c.b16 %v1099, %v1097
        %v1212 = vpack.c.b16 %v1100, %v1098
        %v1213 = vpack.c.b16 %v1103, %v1101
        %v1214 = vpack.c.b16 %v1104, %v1102
        %v1215 = vpack.c.b16 %v1107, %v1105
        %v1216 = vpack.c.b16 %v1108, %v1106
        %v1217 = vpack.c.b16 %v1111, %v1109
        %v1218 = vpack.c.b16 %v1112, %v1110
        %v1219 = vpack.c.b16 %v1115, %v1113
        %v1220 = vpack.c.b16 %v1116, %v1114
        %v1221 = vpack.c.b16 %v1119, %v1117
        %v1222 = vpack.c.b16 %v1120, %v1118
        %v1223 = vpack.c.b16 %v1123, %v1121
        %v1224 = vpack.c.b16 %v1124, %v1122
        %v1225 = vpack.c.b16 %v1127, %v1125
        %v1226 = vpack.c.b16 %v1128, %v1126
        %v1227 = vpack.c.b16 %v1131, %v1129
        %v1228 = vpack.c.b16 %v1132, %v1130
        %v1229 = vpack.c.b16 %v1135, %v1133
        %v1230 = vpack.c.b16 %v1136, %v1134
        %v1231 = vpack.c.b16 %v1139, %v1137
        %v1232 = vpack.c.b16 %v1140, %v1138
        %v1233 = vpack.c.b16 %v1143, %v1141
        %v1234 = vpack.c.b16 %v1144, %v1142
        %v1235 = vpack.c.b16 %v1147, %v1145
        %v1236 = vpack.c.b16 %v1148, %v1146
        %v1237 = vpack.c.b16 %v1151, %v1149
        %v1238 = vpack.c.b16 %v1152, %v1150
        %v1239 = vpack.c.b16 %v1155, %v1153
        %v1240 = vpack.c.b16 %v1156, %v1154
        %v1241 = vpack.c.b16 %v1159, %v1157
        %v1242 = vpack.c.b16 %v1160, %v1158
        %v1243 = vpack.c.b16 %v1163, %v1161
        %v1244 = vpack.c.b16 %v1164, %v1162
        %v1245 = vpack.c.b16 %v1167, %v1165
        %v1246 = vpack.c.b16 %v1168, %v1166
        %v1247 = vpack.c.b16 %v1171, %v1169
        %v1248 = vpack.c.b16 %v1172, %v1170
        %v1249 = vpack.c.b16 %v1175, %v1173
        %v1250 = vpack.c.b16 %v1176, %v1174
        %v1251 = vpack.c.b16 %v1179, %v1177
        %v1252 = vpack.c.b16 %v1180, %v1178
        %v1253 = vpack.c.b16 %v1183, %v1181
        %v1254 = vpack.c.b16 %v1184, %v1182
        %v1255 = vpack.c.b16 %v1187, %v1185
        %v1256 = vpack.c.b16 %v1188, %v1186
        %v1257 = vpack.c.b16 %v1191, %v1189
        %v1258 = vpack.c.b16 %v1192, %v1190
        %v1259 = vpack.c.b16 %v1195, %v1193
        %v1260 = vpack.c.b16 %v1196, %v1194
        %v1357 = vunpack.c.l.b16 %v589
        %v1358 = vunpack.c.h.b16 %v589
        %v1359 = vunpack.c.l.b16 %v590
        %v1360 = vunpack.c.h.b16 %v590
        %v1361 = vunpack.c.l.b16 %v591
        %v1362 = vunpack.c.h.b16 %v591
        %v1363 = vunpack.c.l.b16 %v592
        %v1364 = vunpack.c.h.b16 %v592
        %v1365 = vunpack.c.l.b16 %v593
        %v1366 = vunpack.c.h.b16 %v593
        %v1367 = vunpack.c.l.b16 %v594
        %v1368 = vunpack.c.h.b16 %v594
        %v1369 = vunpack.c.l.b16 %v595
        %v1370 = vunpack.c.h.b16 %v595
        %v1371 = vunpack.c.l.b16 %v596
        %v1372 = vunpack.c.h.b16 %v596
        %v1373 = vunpack.c.l.b16 %v597
        %v1374 = vunpack.c.h.b16 %v597
        %v1375 = vunpack.c.l.b16 %v598
        %v1376 = vunpack.c.h.b16 %v598
        %v1377 = vunpack.c.l.b16 %v599
        %v1378 = vunpack.c.h.b16 %v599
        %v1379 = vunpack.c.l.b16 %v600
        %v1380 = vunpack.c.h.b16 %v600
        %v1381 = vunpack.c.l.b16 %v601
        %v1382 = vunpack.c.h.b16 %v601
        %v1383 = vunpack.c.l.b16 %v602
        %v1384 = vunpack.c.h.b16 %v602
        %v1385 = vunpack.c.l.b16 %v603
        %v1386 = vunpack.c.h.b16 %v603
        %v1387 = vunpack.c.l.b16 %v604
        %v1388 = vunpack.c.h.b16 %v604
        %v1389 = vunpack.c.l.b16 %v605
        %v1390 = vunpack.c.h.b16 %v605
        %v1391 = vunpack.c.l.b16 %v606
        %v1392 = vunpack.c.h.b16 %v606
        %v1393 = vunpack.c.l.b16 %v607
        %v1394 = vunpack.c.h.b16 %v607
        %v1395 = vunpack.c.l.b16 %v608
        %v1396 = vunpack.c.h.b16 %v608
        %v1397 = vunpack.c.l.b16 %v609
        %v1398 = vunpack.c.h.b16 %v609
        %v1399 = vunpack.c.l.b16 %v610
        %v1400 = vunpack.c.h.b16 %v610
        %v1401 = vunpack.c.l.b16 %v611
        %v1402 = vunpack.c.h.b16 %v611
        %v1403 = vunpack.c.l.b16 %v612
        %v1404 = vunpack.c.h.b16 %v612
        %v1405 = vunpack.c.l.b16 %v613
        %v1406 = vunpack.c.h.b16 %v613
        %v1407 = vunpack.c.l.b16 %v614
        %v1408 = vunpack.c.h.b16 %v614
        %v1409 = vunpack.c.l.b16 %v615
        %v1410 = vunpack.c.h.b16 %v615
        %v1411 = vunpack.c.l.b16 %v616
        %v1412 = vunpack.c.h.b16 %v616
        %v1413 = vunpack.c.l.b16 %v617
        %v1414 = vunpack.c.h.b16 %v617
        %v1415 = vunpack.c.l.b16 %v618
        %v1416 = vunpack.c.h.b16 %v618
        %v1417 = vunpack.c.l.b16 %v619
        %v1418 = vunpack.c.h.b16 %v619
        %v1419 = vunpack.c.l.b16 %v620
        %v1420 = vunpack.c.h.b16 %v620
        %v1421 = vpack.c.b16 %v1359, %v1357
        %v1422 = vpack.c.b16 %v1360, %v1358
        %v1423 = vpack.c.b16 %v1363, %v1361
        %v1424 = vpack.c.b16 %v1364, %v1362
        %v1425 = vpack.c.b16 %v1367, %v1365
        %v1426 = vpack.c.b16 %v1368, %v1366
        %v1427 = vpack.c.b16 %v1371, %v1369
        %v1428 = vpack.c.b16 %v1372, %v1370
        %v1429 = vpack.c.b16 %v1375, %v1373
        %v1430 = vpack.c.b16 %v1376, %v1374
        %v1431 = vpack.c.b16 %v1379, %v1377
        %v1432 = vpack.c.b16 %v1380, %v1378
        %v1433 = vpack.c.b16 %v1383, %v1381
        %v1434 = vpack.c.b16 %v1384, %v1382
        %v1435 = vpack.c.b16 %v1387, %v1385
        %v1436 = vpack.c.b16 %v1388, %v1386
        %v1437 = vpack.c.b16 %v1391, %v1389
        %v1438 = vpack.c.b16 %v1392, %v1390
        %v1439 = vpack.c.b16 %v1395, %v1393
        %v1440 = vpack.c.b16 %v1396, %v1394
        %v1441 = vpack.c.b16 %v1399, %v1397
        %v1442 = vpack.c.b16 %v1400, %v1398
        %v1443 = vpack.c.b16 %v1403, %v1401
        %v1444 = vpack.c.b16 %v1404, %v1402
        %v1445 = vpack.c.b16 %v1407, %v1405
        %v1446 = vpack.c.b16 %v1408, %v1406
        %v1447 = vpack.c.b16 %v1411, %v1409
        %v1448 = vpack.c.b16 %v1412, %v1410
        %v1449 = vpack.c.b16 %v1415, %v1413
        %v1450 = vpack.c.b16 %v1416, %v1414
        %v1451 = vpack.c.b16 %v1419, %v1417
        %v1452 = vpack.c.b16 %v1420, %v1418
        %1485 = vmatprep.subr.bf16.mxu0 %v1422
        %1486 = vmatpush1.bf16.msra.mxu0 %v1421
        %1487 = vmatprep.subr.bf16.mxu0 %v1424
        %1488 = vmatpush1.bf16.msra.mxu0 %v1423
        %1489 = vmatprep.subr.bf16.mxu0 %v1426
        %1490 = vmatpush1.bf16.msra.mxu0 %v1425
        %1491 = vmatprep.subr.bf16.mxu0 %v1428
        %1492 = vmatpush1.bf16.msra.mxu0 %v1427
        %1493 = vmatprep.subr.bf16.mxu0 %v1430
        %1494 = vmatpush1.bf16.msra.mxu0 %v1429
        %1495 = vmatprep.subr.bf16.mxu0 %v1432
        %1496 = vmatpush1.bf16.msra.mxu0 %v1431
        %1497 = vmatprep.subr.bf16.mxu0 %v1434
        %1498 = vmatpush1.bf16.msra.mxu0 %v1433
        %1499 = vmatprep.subr.bf16.mxu0 %v1436
        %1500 = vmatpush1.bf16.msra.mxu0 %v1435
        %1501 = vmatprep.subr.bf16.mxu0 %v1438
        %1502 = vmatpush1.bf16.msra.mxu0 %v1437
        %1503 = vmatprep.subr.bf16.mxu0 %v1440
        %1504 = vmatpush1.bf16.msra.mxu0 %v1439
        %1505 = vmatprep.subr.bf16.mxu0 %v1442
        %1506 = vmatpush1.bf16.msra.mxu0 %v1441
        %1507 = vmatprep.subr.bf16.mxu0 %v1444
        %1508 = vmatpush1.bf16.msra.mxu0 %v1443
        %1509 = vmatprep.subr.bf16.mxu0 %v1446
        %1510 = vmatpush1.bf16.msra.mxu0 %v1445
        %1511 = vmatprep.subr.bf16.mxu0 %v1448
        %1512 = vmatpush1.bf16.msra.mxu0 %v1447
        %1513 = vmatprep.subr.bf16.mxu0 %v1450
        %1514 = vmatpush1.bf16.msra.mxu0 %v1449
        %1515 = vmatprep.subr.bf16.mxu0 %v1452
        %1516 = vmatpush1.bf16.msra.mxu0 %v1451
        %1517 = vmatprep.mubr.bf16.mxu0 %v1198
        %1518 = vmatmul.mubr.bf16.gmra.mrb[0].mxu0 %v1197
        %v1519 = vpop.f32.mrb[0].mxu0
        %v1520 = vadd.f32 %v688, %v1519
        %v1521 = vpop.f32.mrb[0].mxu0
        %v1522 = vadd.f32 %v688, %v1521
        %v1523 = vpop.f32.mrb[0].mxu0
        %v1524 = vadd.f32 %v693, %v1523
        %v1525 = vpop.f32.mrb[0].mxu0
        %v1526 = vadd.f32 %v693, %v1525
        %1527 = vmatprep.mubr.bf16.mxu0 %v1200
        %1528 = vmatmul.mubr.bf16.gmra.mrb[0].mxu0 %v1199
        %v1529 = vpop.f32.mrb[0].mxu0
        %v1530 = vadd.f32 %v698, %v1529
        %v1531 = vpop.f32.mrb[0].mxu0
        %v1532 = vadd.f32 %v698, %v1531
        %v1533 = vpop.f32.mrb[0].mxu0
        %v1534 = vadd.f32 %v703, %v1533
        %v1535 = vpop.f32.mrb[0].mxu0
        %v1536 = vadd.f32 %v703, %v1535
        %1537 = vmatprep.mubr.bf16.mxu0 %v1202
        %1538 = vmatmul.mubr.bf16.gmra.mrb[0].mxu0 %v1201
        %v1539 = vpop.f32.mrb[0].mxu0
        %v1540 = vadd.f32 %v708, %v1539
        %v1541 = vpop.f32.mrb[0].mxu0
        %v1542 = vadd.f32 %v708, %v1541
        %v1543 = vpop.f32.mrb[0].mxu0
        %v1544 = vadd.f32 %v713, %v1543
        %v1545 = vpop.f32.mrb[0].mxu0
        %v1546 = vadd.f32 %v713, %v1545
        %1547 = vmatprep.mubr.bf16.mxu0 %v1204
        %1548 = vmatmul.mubr.bf16.gmra.mrb[0].mxu0 %v1203
        %v1549 = vpop.f32.mrb[0].mxu0
        %v1550 = vadd.f32 %v718, %v1549
        %v1551 = vpop.f32.mrb[0].mxu0
        %v1552 = vadd.f32 %v718, %v1551
        %v1553 = vpop.f32.mrb[0].mxu0
        %v1554 = vadd.f32 %v723, %v1553
        %v1555 = vpop.f32.mrb[0].mxu0
        %v1556 = vadd.f32 %v723, %v1555
        %1557 = vmatprep.mubr.bf16.mxu0 %v1206
        %1558 = vmatmul.mubr.bf16.gmra.mrb[0].mxu0 %v1205
        %v1559 = vpop.f32.mrb[0].mxu0
        %v1560 = vadd.f32 %v728, %v1559
        %v1561 = vpop.f32.mrb[0].mxu0
        %v1562 = vadd.f32 %v728, %v1561
        %v1563 = vpop.f32.mrb[0].mxu0
        %v1564 = vadd.f32 %v733, %v1563
        %v1565 = vpop.f32.mrb[0].mxu0
        %v1566 = vadd.f32 %v733, %v1565
        %1567 = vmatprep.mubr.bf16.mxu0 %v1208
        %1568 = vmatmul.mubr.bf16.gmra.mrb[0].mxu0 %v1207
        %v1569 = vpop.f32.mrb[0].mxu0
        %v1570 = vadd.f32 %v738, %v1569
        %v1571 = vpop.f32.mrb[0].mxu0
        %v1572 = vadd.f32 %v738, %v1571
        %v1573 = vpop.f32.mrb[0].mxu0
        %v1574 = vadd.f32 %v743, %v1573
        %v1575 = vpop.f32.mrb[0].mxu0
        %v1576 = vadd.f32 %v743, %v1575
        %1577 = vmatprep.mubr.bf16.mxu0 %v1210
        %1578 = vmatmul.mubr.bf16.gmra.mrb[0].mxu0 %v1209
        %v1579 = vpop.f32.mrb[0].mxu0
        %v1580 = vadd.f32 %v748, %v1579
        %v1581 = vpop.f32.mrb[0].mxu0
        %v1582 = vadd.f32 %v748, %v1581
        %v1583 = vpop.f32.mrb[0].mxu0
        %v1584 = vadd.f32 %v753, %v1583
        %v1585 = vpop.f32.mrb[0].mxu0
        %v1586 = vadd.f32 %v753, %v1585
        %1587 = vmatprep.mubr.bf16.mxu0 %v1212
        %1588 = vmatmul.mubr.bf16.gmra.mrb[0].mxu0 %v1211
        %v1589 = vpop.f32.mrb[0].mxu0
        %v1590 = vadd.f32 %v758, %v1589
        %v1591 = vpop.f32.mrb[0].mxu0
        %v1592 = vadd.f32 %v758, %v1591
        %v1593 = vpop.f32.mrb[0].mxu0
        %v1594 = vadd.f32 %v763, %v1593
        %v1595 = vpop.f32.mrb[0].mxu0
        %v1596 = vadd.f32 %v763, %v1595
        %1597 = vmatprep.mubr.bf16.mxu0 %v1214
        %1598 = vmatmul.mubr.bf16.gmra.mrb[0].mxu0 %v1213
        %v1599 = vpop.f32.mrb[0].mxu0
        %v1600 = vadd.f32 %v768, %v1599
        %v1601 = vpop.f32.mrb[0].mxu0
        %v1602 = vadd.f32 %v768, %v1601
        %v1603 = vpop.f32.mrb[0].mxu0
        %v1604 = vadd.f32 %v773, %v1603
        %v1605 = vpop.f32.mrb[0].mxu0
        %v1606 = vadd.f32 %v773, %v1605
        %1607 = vmatprep.mubr.bf16.mxu0 %v1216
        %1608 = vmatmul.mubr.bf16.gmra.mrb[0].mxu0 %v1215
        %v1609 = vpop.f32.mrb[0].mxu0
        %v1610 = vadd.f32 %v778, %v1609
        %v1611 = vpop.f32.mrb[0].mxu0
        %v1612 = vadd.f32 %v778, %v1611
        %v1613 = vpop.f32.mrb[0].mxu0
        %v1614 = vadd.f32 %v783, %v1613
        %v1615 = vpop.f32.mrb[0].mxu0
        %v1616 = vadd.f32 %v783, %v1615
        %1617 = vmatprep.mubr.bf16.mxu0 %v1218
        %1618 = vmatmul.mubr.bf16.gmra.mrb[0].mxu0 %v1217
        %v1619 = vpop.f32.mrb[0].mxu0
        %v1620 = vadd.f32 %v788, %v1619
        %v1621 = vpop.f32.mrb[0].mxu0
        %v1622 = vadd.f32 %v788, %v1621
        %v1623 = vpop.f32.mrb[0].mxu0
        %v1624 = vadd.f32 %v793, %v1623
        %v1625 = vpop.f32.mrb[0].mxu0
        %v1626 = vadd.f32 %v793, %v1625
        %1627 = vmatprep.mubr.bf16.mxu0 %v1220
        %1628 = vmatmul.mubr.bf16.gmra.mrb[0].mxu0 %v1219
        %v1629 = vpop.f32.mrb[0].mxu0
        %v1630 = vadd.f32 %v798, %v1629
        %v1631 = vpop.f32.mrb[0].mxu0
        %v1632 = vadd.f32 %v798, %v1631
        %v1633 = vpop.f32.mrb[0].mxu0
        %v1634 = vadd.f32 %v803, %v1633
        %v1635 = vpop.f32.mrb[0].mxu0
        %v1636 = vadd.f32 %v803, %v1635
        %1637 = vmatprep.mubr.bf16.mxu0 %v1222
        %1638 = vmatmul.mubr.bf16.gmra.mrb[0].mxu0 %v1221
        %v1639 = vpop.f32.mrb[0].mxu0
        %v1640 = vadd.f32 %v808, %v1639
        %v1641 = vpop.f32.mrb[0].mxu0
        %v1642 = vadd.f32 %v808, %v1641
        %v1643 = vpop.f32.mrb[0].mxu0
        %v1644 = vadd.f32 %v813, %v1643
        %v1645 = vpop.f32.mrb[0].mxu0
        %v1646 = vadd.f32 %v813, %v1645
        %1647 = vmatprep.mubr.bf16.mxu0 %v1224
        %1648 = vmatmul.mubr.bf16.gmra.mrb[0].mxu0 %v1223
        %v1649 = vpop.f32.mrb[0].mxu0
        %v1650 = vadd.f32 %v818, %v1649
        %v1651 = vpop.f32.mrb[0].mxu0
        %v1652 = vadd.f32 %v818, %v1651
        %v1653 = vpop.f32.mrb[0].mxu0
        %v1654 = vadd.f32 %v823, %v1653
        %v1655 = vpop.f32.mrb[0].mxu0
        %v1656 = vadd.f32 %v823, %v1655
        %1657 = vmatprep.mubr.bf16.mxu0 %v1226
        %1658 = vmatmul.mubr.bf16.gmra.mrb[0].mxu0 %v1225
        %v1659 = vpop.f32.mrb[0].mxu0
        %v1660 = vadd.f32 %v828, %v1659
        %v1661 = vpop.f32.mrb[0].mxu0
        %v1662 = vadd.f32 %v828, %v1661
        %v1663 = vpop.f32.mrb[0].mxu0
        %v1664 = vadd.f32 %v833, %v1663
        %v1665 = vpop.f32.mrb[0].mxu0
        %v1666 = vadd.f32 %v833, %v1665
        %1667 = vmatprep.mubr.bf16.mxu0 %v1228
        %1668 = vmatmul.mubr.bf16.gmra.mrb[0].mxu0 %v1227
        %v1669 = vpop.f32.mrb[0].mxu0
        %v1670 = vadd.f32 %v838, %v1669
        %v1671 = vpop.f32.mrb[0].mxu0
        %v1672 = vadd.f32 %v838, %v1671
        %v1673 = vpop.f32.mrb[0].mxu0
        %v1674 = vadd.f32 %v843, %v1673
        %v1675 = vpop.f32.mrb[0].mxu0
        %v1676 = vadd.f32 %v843, %v1675
        %1677 = vmatprep.mubr.bf16.mxu0 %v1230
        %1678 = vmatmul.mubr.bf16.gmra.mrb[0].mxu0 %v1229
        %v1679 = vpop.f32.mrb[0].mxu0
        %v1680 = vadd.f32 %v848, %v1679
        %v1681 = vpop.f32.mrb[0].mxu0
        %v1682 = vadd.f32 %v848, %v1681
        %v1683 = vpop.f32.mrb[0].mxu0
        %v1684 = vadd.f32 %v853, %v1683
        %v1685 = vpop.f32.mrb[0].mxu0
        %v1686 = vadd.f32 %v853, %v1685
        %1687 = vmatprep.mubr.bf16.mxu0 %v1232
        %1688 = vmatmul.mubr.bf16.gmra.mrb[0].mxu0 %v1231
        %v1689 = vpop.f32.mrb[0].mxu0
        %v1690 = vadd.f32 %v858, %v1689
        %v1691 = vpop.f32.mrb[0].mxu0
        %v1692 = vadd.f32 %v858, %v1691
        %v1693 = vpop.f32.mrb[0].mxu0
        %v1694 = vadd.f32 %v863, %v1693
        %v1695 = vpop.f32.mrb[0].mxu0
        %v1696 = vadd.f32 %v863, %v1695
        %1697 = vmatprep.mubr.bf16.mxu0 %v1234
        %1698 = vmatmul.mubr.bf16.gmra.mrb[0].mxu0 %v1233
        %v1699 = vpop.f32.mrb[0].mxu0
        %v1700 = vadd.f32 %v868, %v1699
        %v1701 = vpop.f32.mrb[0].mxu0
        %v1702 = vadd.f32 %v868, %v1701
        %v1703 = vpop.f32.mrb[0].mxu0
        %v1704 = vadd.f32 %v873, %v1703
        %v1705 = vpop.f32.mrb[0].mxu0
        %v1706 = vadd.f32 %v873, %v1705
        %1707 = vmatprep.mubr.bf16.mxu0 %v1236
        %1708 = vmatmul.mubr.bf16.gmra.mrb[0].mxu0 %v1235
        %v1709 = vpop.f32.mrb[0].mxu0
        %v1710 = vadd.f32 %v878, %v1709
        %v1711 = vpop.f32.mrb[0].mxu0
        %v1712 = vadd.f32 %v878, %v1711
        %v1713 = vpop.f32.mrb[0].mxu0
        %v1714 = vadd.f32 %v883, %v1713
        %v1715 = vpop.f32.mrb[0].mxu0
        %v1716 = vadd.f32 %v883, %v1715
        %1717 = vmatprep.mubr.bf16.mxu0 %v1238
        %1718 = vmatmul.mubr.bf16.gmra.mrb[0].mxu0 %v1237
        %v1719 = vpop.f32.mrb[0].mxu0
        %v1720 = vadd.f32 %v888, %v1719
        %v1721 = vpop.f32.mrb[0].mxu0
        %v1722 = vadd.f32 %v888, %v1721
        %v1723 = vpop.f32.mrb[0].mxu0
        %v1724 = vadd.f32 %v893, %v1723
        %v1725 = vpop.f32.mrb[0].mxu0
        %v1726 = vadd.f32 %v893, %v1725
        %1727 = vmatprep.mubr.bf16.mxu0 %v1240
        %1728 = vmatmul.mubr.bf16.gmra.mrb[0].mxu0 %v1239
        %v1729 = vpop.f32.mrb[0].mxu0
        %v1730 = vadd.f32 %v898, %v1729
        %v1731 = vpop.f32.mrb[0].mxu0
        %v1732 = vadd.f32 %v898, %v1731
        %v1733 = vpop.f32.mrb[0].mxu0
        %v1734 = vadd.f32 %v903, %v1733
        %v1735 = vpop.f32.mrb[0].mxu0
        %v1736 = vadd.f32 %v903, %v1735
        %1737 = vmatprep.mubr.bf16.mxu0 %v1242
        %1738 = vmatmul.mubr.bf16.gmra.mrb[0].mxu0 %v1241
        %v1739 = vpop.f32.mrb[0].mxu0
        %v1740 = vadd.f32 %v908, %v1739
        %v1741 = vpop.f32.mrb[0].mxu0
        %v1742 = vadd.f32 %v908, %v1741
        %v1743 = vpop.f32.mrb[0].mxu0
        %v1744 = vadd.f32 %v913, %v1743
        %v1745 = vpop.f32.mrb[0].mxu0
        %v1746 = vadd.f32 %v913, %v1745
        %1747 = vmatprep.mubr.bf16.mxu0 %v1244
        %1748 = vmatmul.mubr.bf16.gmra.mrb[0].mxu0 %v1243
        %v1749 = vpop.f32.mrb[0].mxu0
        %v1750 = vadd.f32 %v918, %v1749
        %v1751 = vpop.f32.mrb[0].mxu0
        %v1752 = vadd.f32 %v918, %v1751
        %v1753 = vpop.f32.mrb[0].mxu0
        %v1754 = vadd.f32 %v923, %v1753
        %v1755 = vpop.f32.mrb[0].mxu0
        %v1756 = vadd.f32 %v923, %v1755
        %1757 = vmatprep.mubr.bf16.mxu0 %v1246
        %1758 = vmatmul.mubr.bf16.gmra.mrb[0].mxu0 %v1245
        %v1759 = vpop.f32.mrb[0].mxu0
        %v1760 = vadd.f32 %v928, %v1759
        %v1761 = vpop.f32.mrb[0].mxu0
        %v1762 = vadd.f32 %v928, %v1761
        %v1763 = vpop.f32.mrb[0].mxu0
        %v1764 = vadd.f32 %v933, %v1763
        %v1765 = vpop.f32.mrb[0].mxu0
        %v1766 = vadd.f32 %v933, %v1765
        %1767 = vmatprep.mubr.bf16.mxu0 %v1248
        %1768 = vmatmul.mubr.bf16.gmra.mrb[0].mxu0 %v1247
        %v1769 = vpop.f32.mrb[0].mxu0
        %v1770 = vadd.f32 %v938, %v1769
        %v1771 = vpop.f32.mrb[0].mxu0
        %v1772 = vadd.f32 %v938, %v1771
        %v1773 = vpop.f32.mrb[0].mxu0
        %v1774 = vadd.f32 %v943, %v1773
        %v1775 = vpop.f32.mrb[0].mxu0
        %v1776 = vadd.f32 %v943, %v1775
        %1777 = vmatprep.mubr.bf16.mxu0 %v1250
        %1778 = vmatmul.mubr.bf16.gmra.mrb[0].mxu0 %v1249
        %v1779 = vpop.f32.mrb[0].mxu0
        %v1780 = vadd.f32 %v948, %v1779
        %v1781 = vpop.f32.mrb[0].mxu0
        %v1782 = vadd.f32 %v948, %v1781
        %v1783 = vpop.f32.mrb[0].mxu0
        %v1784 = vadd.f32 %v953, %v1783
        %v1785 = vpop.f32.mrb[0].mxu0
        %v1786 = vadd.f32 %v953, %v1785
        %1787 = vmatprep.mubr.bf16.mxu0 %v1252
        %1788 = vmatmul.mubr.bf16.gmra.mrb[0].mxu0 %v1251
        %v1789 = vpop.f32.mrb[0].mxu0
        %v1790 = vadd.f32 %v958, %v1789
        %v1791 = vpop.f32.mrb[0].mxu0
        %v1792 = vadd.f32 %v958, %v1791
        %v1793 = vpop.f32.mrb[0].mxu0
        %v1794 = vadd.f32 %v963, %v1793
        %v1795 = vpop.f32.mrb[0].mxu0
        %v1796 = vadd.f32 %v963, %v1795
        %1797 = vmatprep.mubr.bf16.mxu0 %v1254
        %1798 = vmatmul.mubr.bf16.gmra.mrb[0].mxu0 %v1253
        %v1799 = vpop.f32.mrb[0].mxu0
        %v1800 = vadd.f32 %v968, %v1799
        %v1801 = vpop.f32.mrb[0].mxu0
        %v1802 = vadd.f32 %v968, %v1801
        %v1803 = vpop.f32.mrb[0].mxu0
        %v1804 = vadd.f32 %v973, %v1803
        %v1805 = vpop.f32.mrb[0].mxu0
        %v1806 = vadd.f32 %v973, %v1805
        %1807 = vmatprep.mubr.bf16.mxu0 %v1256
        %1808 = vmatmul.mubr.bf16.gmra.mrb[0].mxu0 %v1255
        %v1809 = vpop.f32.mrb[0].mxu0
        %v1810 = vadd.f32 %v978, %v1809
        %v1811 = vpop.f32.mrb[0].mxu0
        %v1812 = vadd.f32 %v978, %v1811
        %v1813 = vpop.f32.mrb[0].mxu0
        %v1814 = vadd.f32 %v983, %v1813
        %v1815 = vpop.f32.mrb[0].mxu0
        %v1816 = vadd.f32 %v983, %v1815
        %1817 = vmatprep.mubr.bf16.mxu0 %v1258
        %1818 = vmatmul.mubr.bf16.gmra.mrb[0].mxu0 %v1257
        %v1819 = vpop.f32.mrb[0].mxu0
        %v1820 = vadd.f32 %v988, %v1819
        %v1821 = vpop.f32.mrb[0].mxu0
        %v1822 = vadd.f32 %v988, %v1821
        %v1823 = vpop.f32.mrb[0].mxu0
        %v1824 = vadd.f32 %v993, %v1823
        %v1825 = vpop.f32.mrb[0].mxu0
        %v1826 = vadd.f32 %v993, %v1825
        %1827 = vmatprep.mubr.bf16.mxu0 %v1260
        %1828 = vmatmul.mubr.bf16.gmra.mrb[0].mxu0 %v1259
        %v1829 = vpop.f32.mrb[0].mxu0
        %v1830 = vadd.f32 %v998, %v1829
        %v1831 = vpop.f32.mrb[0].mxu0
        %v1832 = vadd.f32 %v998, %v1831
        %v1833 = vpop.f32.mrb[0].mxu0
        %v1834 = vadd.f32 %v1003, %v1833
        %v1835 = vpop.f32.mrb[0].mxu0
        %v1836 = vadd.f32 %v1003, %v1835
        %1837 = vdwg.mxu0
        %v1838 = vpack.c.bf16 %v1524, %v1520
        %v1839 = vpack.c.bf16 %v1526, %v1522
        %v1840 = vpack.c.bf16 %v1534, %v1530
        %v1841 = vpack.c.bf16 %v1536, %v1532
        %v1842 = vpack.c.bf16 %v1544, %v1540
        %v1843 = vpack.c.bf16 %v1546, %v1542
        %v1844 = vpack.c.bf16 %v1554, %v1550
        %v1845 = vpack.c.bf16 %v1556, %v1552
        %v1846 = vpack.c.bf16 %v1564, %v1560
        %v1847 = vpack.c.bf16 %v1566, %v1562
        %v1848 = vpack.c.bf16 %v1574, %v1570
        %v1849 = vpack.c.bf16 %v1576, %v1572
        %v1850 = vpack.c.bf16 %v1584, %v1580
        %v1851 = vpack.c.bf16 %v1586, %v1582
        %v1852 = vpack.c.bf16 %v1594, %v1590
        %v1853 = vpack.c.bf16 %v1596, %v1592
        %v1854 = vpack.c.bf16 %v1604, %v1600
        %v1855 = vpack.c.bf16 %v1606, %v1602
        %v1856 = vpack.c.bf16 %v1614, %v1610
        %v1857 = vpack.c.bf16 %v1616, %v1612
        %v1858 = vpack.c.bf16 %v1624, %v1620
        %v1859 = vpack.c.bf16 %v1626, %v1622
        %v1860 = vpack.c.bf16 %v1634, %v1630
        %v1861 = vpack.c.bf16 %v1636, %v1632
        %v1862 = vpack.c.bf16 %v1644, %v1640
        %v1863 = vpack.c.bf16 %v1646, %v1642
        %v1864 = vpack.c.bf16 %v1654, %v1650
        %v1865 = vpack.c.bf16 %v1656, %v1652
        %v1866 = vpack.c.bf16 %v1664, %v1660
        %v1867 = vpack.c.bf16 %v1666, %v1662
        %v1868 = vpack.c.bf16 %v1674, %v1670
        %v1869 = vpack.c.bf16 %v1676, %v1672
        %v1870 = vpack.c.bf16 %v1684, %v1680
        %v1871 = vpack.c.bf16 %v1686, %v1682
        %v1872 = vpack.c.bf16 %v1694, %v1690
        %v1873 = vpack.c.bf16 %v1696, %v1692
        %v1874 = vpack.c.bf16 %v1704, %v1700
        %v1875 = vpack.c.bf16 %v1706, %v1702
        %v1876 = vpack.c.bf16 %v1714, %v1710
        %v1877 = vpack.c.bf16 %v1716, %v1712
        %v1878 = vpack.c.bf16 %v1724, %v1720
        %v1879 = vpack.c.bf16 %v1726, %v1722
        %v1880 = vpack.c.bf16 %v1734, %v1730
        %v1881 = vpack.c.bf16 %v1736, %v1732
        %v1882 = vpack.c.bf16 %v1744, %v1740
        %v1883 = vpack.c.bf16 %v1746, %v1742
        %v1884 = vpack.c.bf16 %v1754, %v1750
        %v1885 = vpack.c.bf16 %v1756, %v1752
        %v1886 = vpack.c.bf16 %v1764, %v1760
        %v1887 = vpack.c.bf16 %v1766, %v1762
        %v1888 = vpack.c.bf16 %v1774, %v1770
        %v1889 = vpack.c.bf16 %v1776, %v1772
        %v1890 = vpack.c.bf16 %v1784, %v1780
        %v1891 = vpack.c.bf16 %v1786, %v1782
        %v1892 = vpack.c.bf16 %v1794, %v1790
        %v1893 = vpack.c.bf16 %v1796, %v1792
        %v1894 = vpack.c.bf16 %v1804, %v1800
        %v1895 = vpack.c.bf16 %v1806, %v1802
        %v1896 = vpack.c.bf16 %v1814, %v1810
        %v1897 = vpack.c.bf16 %v1816, %v1812
        %v1898 = vpack.c.bf16 %v1824, %v1820
        %v1899 = vpack.c.bf16 %v1826, %v1822
        %v1900 = vpack.c.bf16 %v1834, %v1830
        %v1901 = vpack.c.bf16 %v1836, %v1832
        %1902 = vst [vmem:[#allocation2] sm:$0xff] %v1838
        %1903 = vst [vmem:[#allocation2 + $0x8] sm:$0xff] %v1839
        %1904 = vst [vmem:[#allocation2 + $0x10] sm:$0xff] %v1840
        %1905 = vst [vmem:[#allocation2 + $0x18] sm:$0xff] %v1841
        %1906 = vst [vmem:[#allocation2 + $0x20] sm:$0xff] %v1842
        %1907 = vst [vmem:[#allocation2 + $0x28] sm:$0xff] %v1843
        %1908 = vst [vmem:[#allocation2 + $0x30] sm:$0xff] %v1844
        %1909 = vst [vmem:[#allocation2 + $0x38] sm:$0xff] %v1845
        %1910 = vst [vmem:[#allocation2 + $0x40] sm:$0xff] %v1846
        %1911 = vst [vmem:[#allocation2 + $0x48] sm:$0xff] %v1847
        %1912 = vst [vmem:[#allocation2 + $0x50] sm:$0xff] %v1848
        %1913 = vst [vmem:[#allocation2 + $0x58] sm:$0xff] %v1849
        %1914 = vst [vmem:[#allocation2 + $0x60] sm:$0xff] %v1850
        %1915 = vst [vmem:[#allocation2 + $0x68] sm:$0xff] %v1851
        %1916 = vst [vmem:[#allocation2 + $0x70] sm:$0xff] %v1852
        %1917 = vst [vmem:[#allocation2 + $0x78] sm:$0xff] %v1853
        %1918 = vst [vmem:[#allocation2 + $0x80] sm:$0xff] %v1854
        %1919 = vst [vmem:[#allocation2 + $0x88] sm:$0xff] %v1855
        %1920 = vst [vmem:[#allocation2 + $0x90] sm:$0xff] %v1856
        %1921 = vst [vmem:[#allocation2 + $0x98] sm:$0xff] %v1857
        %1922 = vst [vmem:[#allocation2 + $0xa0] sm:$0xff] %v1858
        %1923 = vst [vmem:[#allocation2 + $0xa8] sm:$0xff] %v1859
        %1924 = vst [vmem:[#allocation2 + $0xb0] sm:$0xff] %v1860
        %1925 = vst [vmem:[#allocation2 + $0xb8] sm:$0xff] %v1861
        %1926 = vst [vmem:[#allocation2 + $0xc0] sm:$0xff] %v1862
        %1927 = vst [vmem:[#allocation2 + $0xc8] sm:$0xff] %v1863
        %1928 = vst [vmem:[#allocation2 + $0xd0] sm:$0xff] %v1864
        %1929 = vst [vmem:[#allocation2 + $0xd8] sm:$0xff] %v1865
        %1930 = vst [vmem:[#allocation2 + $0xe0] sm:$0xff] %v1866
        %1931 = vst [vmem:[#allocation2 + $0xe8] sm:$0xff] %v1867
        %1932 = vst [vmem:[#allocation2 + $0xf0] sm:$0xff] %v1868
        %1933 = vst [vmem:[#allocation2 + $0xf8] sm:$0xff] %v1869
        %1934 = vst [vmem:[#allocation2 + $0x100] sm:$0xff] %v1870
        %1935 = vst [vmem:[#allocation2 + $0x108] sm:$0xff] %v1871
        %1936 = vst [vmem:[#allocation2 + $0x110] sm:$0xff] %v1872
        %1937 = vst [vmem:[#allocation2 + $0x118] sm:$0xff] %v1873
        %1938 = vst [vmem:[#allocation2 + $0x120] sm:$0xff] %v1874
        %1939 = vst [vmem:[#allocation2 + $0x128] sm:$0xff] %v1875
        %1940 = vst [vmem:[#allocation2 + $0x130] sm:$0xff] %v1876
        %1941 = vst [vmem:[#allocation2 + $0x138] sm:$0xff] %v1877
        %1942 = vst [vmem:[#allocation2 + $0x140] sm:$0xff] %v1878
        %1943 = vst [vmem:[#allocation2 + $0x148] sm:$0xff] %v1879
        %1944 = vst [vmem:[#allocation2 + $0x150] sm:$0xff] %v1880
        %1945 = vst [vmem:[#allocation2 + $0x158] sm:$0xff] %v1881
        %1946 = vst [vmem:[#allocation2 + $0x160] sm:$0xff] %v1882
        %1947 = vst [vmem:[#allocation2 + $0x168] sm:$0xff] %v1883
        %1948 = vst [vmem:[#allocation2 + $0x170] sm:$0xff] %v1884
        %1949 = vst [vmem:[#allocation2 + $0x178] sm:$0xff] %v1885
        %1950 = vst [vmem:[#allocation2 + $0x180] sm:$0xff] %v1886
        %1951 = vst [vmem:[#allocation2 + $0x188] sm:$0xff] %v1887
        %1952 = vst [vmem:[#allocation2 + $0x190] sm:$0xff] %v1888
        %1953 = vst [vmem:[#allocation2 + $0x198] sm:$0xff] %v1889
        %1954 = vst [vmem:[#allocation2 + $0x1a0] sm:$0xff] %v1890
        %1955 = vst [vmem:[#allocation2 + $0x1a8] sm:$0xff] %v1891
        %1956 = vst [vmem:[#allocation2 + $0x1b0] sm:$0xff] %v1892
        %1957 = vst [vmem:[#allocation2 + $0x1b8] sm:$0xff] %v1893
        %1958 = vst [vmem:[#allocation2 + $0x1c0] sm:$0xff] %v1894
        %1959 = vst [vmem:[#allocation2 + $0x1c8] sm:$0xff] %v1895
        %1960 = vst [vmem:[#allocation2 + $0x1d0] sm:$0xff] %v1896
        %1961 = vst [vmem:[#allocation2 + $0x1d8] sm:$0xff] %v1897
        %1962 = vst [vmem:[#allocation2 + $0x1e0] sm:$0xff] %v1898
        %1963 = vst [vmem:[#allocation2 + $0x1e8] sm:$0xff] %v1899
        %1964 = vst [vmem:[#allocation2 + $0x1f0] sm:$0xff] %v1900
        %1965 = vst [vmem:[#allocation2 + $0x1f8] sm:$0xff] %v1901
        %v1966 = vld [vmem:[#allocation2] sm:$0xff]
        %v1967 = vld [vmem:[#allocation2 + $0x8] sm:$0xff]
        %v1968 = vld [vmem:[#allocation2 + $0x10] sm:$0xff]
        %v1969 = vld [vmem:[#allocation2 + $0x18] sm:$0xff]
        %v1970 = vld [vmem:[#allocation2 + $0x20] sm:$0xff]
        %v1971 = vld [vmem:[#allocation2 + $0x28] sm:$0xff]
        %v1972 = vld [vmem:[#allocation2 + $0x30] sm:$0xff]
        %v1973 = vld [vmem:[#allocation2 + $0x38] sm:$0xff]
        %v1974 = vld [vmem:[#allocation2 + $0x40] sm:$0xff]
        %v1975 = vld [vmem:[#allocation2 + $0x48] sm:$0xff]
        %v1976 = vld [vmem:[#allocation2 + $0x50] sm:$0xff]
        %v1977 = vld [vmem:[#allocation2 + $0x58] sm:$0xff]
        %v1978 = vld [vmem:[#allocation2 + $0x60] sm:$0xff]
        %v1979 = vld [vmem:[#allocation2 + $0x68] sm:$0xff]
        %v1980 = vld [vmem:[#allocation2 + $0x70] sm:$0xff]
        %v1981 = vld [vmem:[#allocation2 + $0x78] sm:$0xff]
        %v1982 = vld [vmem:[#allocation2 + $0x80] sm:$0xff]
        %v1983 = vld [vmem:[#allocation2 + $0x88] sm:$0xff]
        %v1984 = vld [vmem:[#allocation2 + $0x90] sm:$0xff]
        %v1985 = vld [vmem:[#allocation2 + $0x98] sm:$0xff]
        %v1986 = vld [vmem:[#allocation2 + $0xa0] sm:$0xff]
        %v1987 = vld [vmem:[#allocation2 + $0xa8] sm:$0xff]
        %v1988 = vld [vmem:[#allocation2 + $0xb0] sm:$0xff]
        %v1989 = vld [vmem:[#allocation2 + $0xb8] sm:$0xff]
        %v1990 = vld [vmem:[#allocation2 + $0xc0] sm:$0xff]
        %v1991 = vld [vmem:[#allocation2 + $0xc8] sm:$0xff]
        %v1992 = vld [vmem:[#allocation2 + $0xd0] sm:$0xff]
        %v1993 = vld [vmem:[#allocation2 + $0xd8] sm:$0xff]
        %v1994 = vld [vmem:[#allocation2 + $0xe0] sm:$0xff]
        %v1995 = vld [vmem:[#allocation2 + $0xe8] sm:$0xff]
        %v1996 = vld [vmem:[#allocation2 + $0xf0] sm:$0xff]
        %v1997 = vld [vmem:[#allocation2 + $0xf8] sm:$0xff]
        %v1998 = vld [vmem:[#allocation2 + $0x100] sm:$0xff]
        %v1999 = vld [vmem:[#allocation2 + $0x108] sm:$0xff]
        %v2000 = vld [vmem:[#allocation2 + $0x110] sm:$0xff]
        %v2001 = vld [vmem:[#allocation2 + $0x118] sm:$0xff]
        %v2002 = vld [vmem:[#allocation2 + $0x120] sm:$0xff]
        %v2003 = vld [vmem:[#allocation2 + $0x128] sm:$0xff]
        %v2004 = vld [vmem:[#allocation2 + $0x130] sm:$0xff]
        %v2005 = vld [vmem:[#allocation2 + $0x138] sm:$0xff]
        %v2006 = vld [vmem:[#allocation2 + $0x140] sm:$0xff]
        %v2007 = vld [vmem:[#allocation2 + $0x148] sm:$0xff]
        %v2008 = vld [vmem:[#allocation2 + $0x150] sm:$0xff]
        %v2009 = vld [vmem:[#allocation2 + $0x158] sm:$0xff]
        %v2010 = vld [vmem:[#allocation2 + $0x160] sm:$0xff]
        %v2011 = vld [vmem:[#allocation2 + $0x168] sm:$0xff]
        %v2012 = vld [vmem:[#allocation2 + $0x170] sm:$0xff]
        %v2013 = vld [vmem:[#allocation2 + $0x178] sm:$0xff]
        %v2014 = vld [vmem:[#allocation2 + $0x180] sm:$0xff]
        %v2015 = vld [vmem:[#allocation2 + $0x188] sm:$0xff]
        %v2016 = vld [vmem:[#allocation2 + $0x190] sm:$0xff]
        %v2017 = vld [vmem:[#allocation2 + $0x198] sm:$0xff]
        %v2018 = vld [vmem:[#allocation2 + $0x1a0] sm:$0xff]
        %v2019 = vld [vmem:[#allocation2 + $0x1a8] sm:$0xff]
        %v2020 = vld [vmem:[#allocation2 + $0x1b0] sm:$0xff]
        %v2021 = vld [vmem:[#allocation2 + $0x1b8] sm:$0xff]
        %v2022 = vld [vmem:[#allocation2 + $0x1c0] sm:$0xff]
        %v2023 = vld [vmem:[#allocation2 + $0x1c8] sm:$0xff]
        %v2024 = vld [vmem:[#allocation2 + $0x1d0] sm:$0xff]
        %v2025 = vld [vmem:[#allocation2 + $0x1d8] sm:$0xff]
        %v2026 = vld [vmem:[#allocation2 + $0x1e0] sm:$0xff]
        %v2027 = vld [vmem:[#allocation2 + $0x1e8] sm:$0xff]
        %v2028 = vld [vmem:[#allocation2 + $0x1f0] sm:$0xff]
        %v2029 = vld [vmem:[#allocation2 + $0x1f8] sm:$0xff]
        %2030 = vxpose.xlu0.c.b16.start [1/8] %v1982, 128
        %2031 = vxpose.xlu0.c.b16.cont [2/8] %v1984, 128
        %2032 = vxpose.xlu0.c.b16.cont [3/8] %v1986, 128
        %2033 = vxpose.xlu0.c.b16.cont [4/8] %v1988, 128
        %2034 = vxpose.xlu0.c.b16.cont [5/8] %v1990, 128
        %2035 = vxpose.xlu0.c.b16.cont [6/8] %v1992, 128
        %2036 = vxpose.xlu0.c.b16.cont [7/8] %v1994, 128
        %2037 = vxpose.xlu0.c.b16.end [8/8] %v1996, 128
        %v2038 = vpop.trf.xlu0
        %v2039 = vpop.trf.xlu0
        %v2040 = vpop.trf.xlu0
        %v2041 = vpop.trf.xlu0
        %v2042 = vpop.trf.xlu0
        %v2043 = vpop.trf.xlu0
        %v2044 = vpop.trf.xlu0
        %v2045 = vpop.trf.xlu0
        %2046 = vxpose.xlu0.c.b16.start [1/8] %v1983, 128
        %2047 = vxpose.xlu0.c.b16.cont [2/8] %v1985, 128
        %2048 = vxpose.xlu0.c.b16.cont [3/8] %v1987, 128
        %2049 = vxpose.xlu0.c.b16.cont [4/8] %v1989, 128
        %2050 = vxpose.xlu0.c.b16.cont [5/8] %v1991, 128
        %2051 = vxpose.xlu0.c.b16.cont [6/8] %v1993, 128
        %2052 = vxpose.xlu0.c.b16.cont [7/8] %v1995, 128
        %2053 = vxpose.xlu0.c.b16.end [8/8] %v1997, 128
        %v2054 = vpop.trf.xlu0
        %v2055 = vpop.trf.xlu0
        %v2056 = vpop.trf.xlu0
        %v2057 = vpop.trf.xlu0
        %v2058 = vpop.trf.xlu0
        %v2059 = vpop.trf.xlu0
        %v2060 = vpop.trf.xlu0
        %v2061 = vpop.trf.xlu0
        %2062 = vmatprep.subr.bf16.mxu0 %v1967
        %2063 = vmatpush1.bf16.msra.mxu0 %v1966
        %2064 = vmatprep.subr.bf16.mxu0 %v1969
        %2065 = vmatpush1.bf16.msra.mxu0 %v1968
        %2066 = vmatprep.subr.bf16.mxu0 %v1971
        %2067 = vmatpush1.bf16.msra.mxu0 %v1970
        %2068 = vmatprep.subr.bf16.mxu0 %v1973
        %2069 = vmatpush1.bf16.msra.mxu0 %v1972
        %2070 = vmatprep.subr.bf16.mxu0 %v1975
        %2071 = vmatpush1.bf16.msra.mxu0 %v1974
        %2072 = vmatprep.subr.bf16.mxu0 %v1977
        %2073 = vmatpush1.bf16.msra.mxu0 %v1976
        %2074 = vmatprep.subr.bf16.mxu0 %v1979
        %2075 = vmatpush1.bf16.msra.mxu0 %v1978
        %2076 = vmatprep.subr.bf16.mxu0 %v1981
        %2077 = vmatpush1.bf16.msra.mxu0 %v1980
        %2078 = vmatprep.subr.bf16.mxu0 0
        %2079 = vmatpush1.bf16.msra.mxu0 0
        %2080 = vmatprep.subr.bf16.mxu0 0
        %2081 = vmatpush1.bf16.msra.mxu0 0
        %2082 = vmatprep.subr.bf16.mxu0 0
        %2083 = vmatpush1.bf16.msra.mxu0 0
        %2084 = vmatprep.subr.bf16.mxu0 0
        %2085 = vmatpush1.bf16.msra.mxu0 0
        %2086 = vmatprep.subr.bf16.mxu0 0
        %2087 = vmatpush1.bf16.msra.mxu0 0
        %2088 = vmatprep.subr.bf16.mxu0 0
        %2089 = vmatpush1.bf16.msra.mxu0 0
        %2090 = vmatprep.subr.bf16.mxu0 0
        %2091 = vmatpush1.bf16.msra.mxu0 0
        %2092 = vmatprep.subr.bf16.mxu0 0
        %2093 = vmatpush1.bf16.msra.mxu0 0
        %2094 = vmatprep.mubr.bf16.mxu0 0
        %2095 = vmatmul.mubr.bf16.gmra.mrb[0].mxu0 %v2038
        %v2096 = vpop.f32.mrb[0].mxu0
        %v2097 = vadd.f32 0.0, %v2096
        %v2098 = vpop.f32.mrb[0].mxu0
        %v2099 = vadd.f32 0.0, %v2098
        %v2100 = vpop.f32.mrb[0].mxu0
        %v2101 = vadd.f32 0.0, %v2100
        %v2102 = vpop.f32.mrb[0].mxu0
        %v2103 = vadd.f32 0.0, %v2102
        %2104 = vmatprep.mubr.bf16.mxu0 0
        %2105 = vmatmul.mubr.bf16.gmra.mrb[0].mxu0 %v2039
        %v2106 = vpop.f32.mrb[0].mxu0
        %v2107 = vadd.f32 0.0, %v2106
        %v2108 = vpop.f32.mrb[0].mxu0
        %v2109 = vadd.f32 0.0, %v2108
        %v2110 = vpop.f32.mrb[0].mxu0
        %v2111 = vadd.f32 0.0, %v2110
        %v2112 = vpop.f32.mrb[0].mxu0
        %v2113 = vadd.f32 0.0, %v2112
        %2114 = vmatprep.mubr.bf16.mxu0 0
        %2115 = vmatmul.mubr.bf16.gmra.mrb[0].mxu0 %v2040
        %v2116 = vpop.f32.mrb[0].mxu0
        %v2117 = vadd.f32 0.0, %v2116
        %v2118 = vpop.f32.mrb[0].mxu0
        %v2119 = vadd.f32 0.0, %v2118
        %v2120 = vpop.f32.mrb[0].mxu0
        %v2121 = vadd.f32 0.0, %v2120
        %v2122 = vpop.f32.mrb[0].mxu0
        %v2123 = vadd.f32 0.0, %v2122
        %2124 = vmatprep.mubr.bf16.mxu0 0
        %2125 = vmatmul.mubr.bf16.gmra.mrb[0].mxu0 %v2041
        %v2126 = vpop.f32.mrb[0].mxu0
        %v2127 = vadd.f32 0.0, %v2126
        %v2128 = vpop.f32.mrb[0].mxu0
        %v2129 = vadd.f32 0.0, %v2128
        %v2130 = vpop.f32.mrb[0].mxu0
        %v2131 = vadd.f32 0.0, %v2130
        %v2132 = vpop.f32.mrb[0].mxu0
        %v2133 = vadd.f32 0.0, %v2132
        %2134 = vmatprep.mubr.bf16.mxu0 0
        %2135 = vmatmul.mubr.bf16.gmra.mrb[0].mxu0 %v2042
        %v2136 = vpop.f32.mrb[0].mxu0
        %v2137 = vadd.f32 0.0, %v2136
        %v2138 = vpop.f32.mrb[0].mxu0
        %v2139 = vadd.f32 0.0, %v2138
        %v2140 = vpop.f32.mrb[0].mxu0
        %v2141 = vadd.f32 0.0, %v2140
        %v2142 = vpop.f32.mrb[0].mxu0
        %v2143 = vadd.f32 0.0, %v2142
        %2144 = vmatprep.mubr.bf16.mxu0 0
        %2145 = vmatmul.mubr.bf16.gmra.mrb[0].mxu0 %v2043
        %v2146 = vpop.f32.mrb[0].mxu0
        %v2147 = vadd.f32 0.0, %v2146
        %v2148 = vpop.f32.mrb[0].mxu0
        %v2149 = vadd.f32 0.0, %v2148
        %v2150 = vpop.f32.mrb[0].mxu0
        %v2151 = vadd.f32 0.0, %v2150
        %v2152 = vpop.f32.mrb[0].mxu0
        %v2153 = vadd.f32 0.0, %v2152
        %2154 = vmatprep.mubr.bf16.mxu0 0
        %2155 = vmatmul.mubr.bf16.gmra.mrb[0].mxu0 %v2044
        %v2156 = vpop.f32.mrb[0].mxu0
        %v2157 = vadd.f32 0.0, %v2156
        %v2158 = vpop.f32.mrb[0].mxu0
        %v2159 = vadd.f32 0.0, %v2158
        %v2160 = vpop.f32.mrb[0].mxu0
        %v2161 = vadd.f32 0.0, %v2160
        %v2162 = vpop.f32.mrb[0].mxu0
        %v2163 = vadd.f32 0.0, %v2162
        %2164 = vmatprep.mubr.bf16.mxu0 0
        %2165 = vmatmul.mubr.bf16.gmra.mrb[0].mxu0 %v2045
        %v2166 = vpop.f32.mrb[0].mxu0
        %v2167 = vadd.f32 0.0, %v2166
        %v2168 = vpop.f32.mrb[0].mxu0
        %v2169 = vadd.f32 0.0, %v2168
        %v2170 = vpop.f32.mrb[0].mxu0
        %v2171 = vadd.f32 0.0, %v2170
        %v2172 = vpop.f32.mrb[0].mxu0
        %v2173 = vadd.f32 0.0, %v2172
        %2174 = vmatprep.mubr.bf16.mxu0 0
        %2175 = vmatmul.mubr.bf16.gmra.mrb[0].mxu0 %v2054
        %v2176 = vpop.f32.mrb[0].mxu0
        %v2177 = vadd.f32 0.0, %v2176
        %v2178 = vpop.f32.mrb[0].mxu0
        %v2179 = vadd.f32 0.0, %v2178
        %v2180 = vpop.f32.mrb[0].mxu0
        %v2181 = vadd.f32 0.0, %v2180
        %v2182 = vpop.f32.mrb[0].mxu0
        %v2183 = vadd.f32 0.0, %v2182
        %2184 = vmatprep.mubr.bf16.mxu0 0
        %2185 = vmatmul.mubr.bf16.gmra.mrb[0].mxu0 %v2055
        %v2186 = vpop.f32.mrb[0].mxu0
        %v2187 = vadd.f32 0.0, %v2186
        %v2188 = vpop.f32.mrb[0].mxu0
        %v2189 = vadd.f32 0.0, %v2188
        %v2190 = vpop.f32.mrb[0].mxu0
        %v2191 = vadd.f32 0.0, %v2190
        %v2192 = vpop.f32.mrb[0].mxu0
        %v2193 = vadd.f32 0.0, %v2192
        %2194 = vmatprep.mubr.bf16.mxu0 0
        %2195 = vmatmul.mubr.bf16.gmra.mrb[0].mxu0 %v2056
        %v2196 = vpop.f32.mrb[0].mxu0
        %v2197 = vadd.f32 0.0, %v2196
        %v2198 = vpop.f32.mrb[0].mxu0
        %v2199 = vadd.f32 0.0, %v2198
        %v2200 = vpop.f32.mrb[0].mxu0
        %v2201 = vadd.f32 0.0, %v2200
        %v2202 = vpop.f32.mrb[0].mxu0
        %v2203 = vadd.f32 0.0, %v2202
        %2204 = vmatprep.mubr.bf16.mxu0 0
        %2205 = vmatmul.mubr.bf16.gmra.mrb[0].mxu0 %v2057
        %v2206 = vpop.f32.mrb[0].mxu0
        %v2207 = vadd.f32 0.0, %v2206
        %v2208 = vpop.f32.mrb[0].mxu0
        %v2209 = vadd.f32 0.0, %v2208
        %v2210 = vpop.f32.mrb[0].mxu0
        %v2211 = vadd.f32 0.0, %v2210
        %v2212 = vpop.f32.mrb[0].mxu0
        %v2213 = vadd.f32 0.0, %v2212
        %2214 = vmatprep.mubr.bf16.mxu0 0
        %2215 = vmatmul.mubr.bf16.gmra.mrb[0].mxu0 %v2058
        %v2216 = vpop.f32.mrb[0].mxu0
        %v2217 = vadd.f32 0.0, %v2216
        %v2218 = vpop.f32.mrb[0].mxu0
        %v2219 = vadd.f32 0.0, %v2218
        %v2220 = vpop.f32.mrb[0].mxu0
        %v2221 = vadd.f32 0.0, %v2220
        %v2222 = vpop.f32.mrb[0].mxu0
        %v2223 = vadd.f32 0.0, %v2222
        %2224 = vmatprep.mubr.bf16.mxu0 0
        %2225 = vmatmul.mubr.bf16.gmra.mrb[0].mxu0 %v2059
        %v2226 = vpop.f32.mrb[0].mxu0
        %v2227 = vadd.f32 0.0, %v2226
        %v2228 = vpop.f32.mrb[0].mxu0
        %v2229 = vadd.f32 0.0, %v2228
        %v2230 = vpop.f32.mrb[0].mxu0
        %v2231 = vadd.f32 0.0, %v2230
        %v2232 = vpop.f32.mrb[0].mxu0
        %v2233 = vadd.f32 0.0, %v2232
        %2234 = vmatprep.mubr.bf16.mxu0 0
        %2235 = vmatmul.mubr.bf16.gmra.mrb[0].mxu0 %v2060
        %v2236 = vpop.f32.mrb[0].mxu0
        %v2237 = vadd.f32 0.0, %v2236
        %v2238 = vpop.f32.mrb[0].mxu0
        %v2239 = vadd.f32 0.0, %v2238
        %v2240 = vpop.f32.mrb[0].mxu0
        %v2241 = vadd.f32 0.0, %v2240
        %v2242 = vpop.f32.mrb[0].mxu0
        %v2243 = vadd.f32 0.0, %v2242
        %2244 = vmatprep.mubr.bf16.mxu0 0
        %2245 = vmatmul.mubr.bf16.gmra.mrb[0].mxu0 %v2061
        %v2246 = vpop.f32.mrb[0].mxu0
        %v2247 = vadd.f32 0.0, %v2246
        %v2248 = vpop.f32.mrb[0].mxu0
        %v2249 = vadd.f32 0.0, %v2248
        %v2250 = vpop.f32.mrb[0].mxu0
        %v2251 = vadd.f32 0.0, %v2250
        %v2252 = vpop.f32.mrb[0].mxu0
        %v2253 = vadd.f32 0.0, %v2252
        %2254 = vdwg.mxu0
        %v2255 = vmax.f32 %v2097, %v2099
        %2256 = vmax.xlane.f32.xlu0 %v2255
        %v2257 = vpop.xlane.xlu0 %2256
        %v2258 = vmax.f32 %v2101, %v2103
        %2259 = vmax.xlane.f32.xlu0 %v2258
        %v2260 = vpop.xlane.xlu0 %2259
        %v2261 = vmax.f32 %v2107, %v2109
        %2262 = vmax.xlane.f32.xlu0 %v2261
        %v2263 = vpop.xlane.xlu0 %2262
        %v2264 = vmax.f32 %v2111, %v2113
        %2265 = vmax.xlane.f32.xlu0 %v2264
        %v2266 = vpop.xlane.xlu0 %2265
        %v2267 = vmax.f32 %v2117, %v2119
        %2268 = vmax.xlane.f32.xlu0 %v2267
        %v2269 = vpop.xlane.xlu0 %2268
        %v2270 = vmax.f32 %v2121, %v2123
        %2271 = vmax.xlane.f32.xlu0 %v2270
        %v2272 = vpop.xlane.xlu0 %2271
        %v2273 = vmax.f32 %v2127, %v2129
        %2274 = vmax.xlane.f32.xlu0 %v2273
        %v2275 = vpop.xlane.xlu0 %2274
        %v2276 = vmax.f32 %v2131, %v2133
        %2277 = vmax.xlane.f32.xlu0 %v2276
        %v2278 = vpop.xlane.xlu0 %2277
        %v2279 = vmax.f32 %v2137, %v2139
        %2280 = vmax.xlane.f32.xlu0 %v2279
        %v2281 = vpop.xlane.xlu0 %2280
        %v2282 = vmax.f32 %v2141, %v2143
        %2283 = vmax.xlane.f32.xlu0 %v2282
        %v2284 = vpop.xlane.xlu0 %2283
        %v2285 = vmax.f32 %v2147, %v2149
        %2286 = vmax.xlane.f32.xlu0 %v2285
        %v2287 = vpop.xlane.xlu0 %2286
        %v2288 = vmax.f32 %v2151, %v2153
        %2289 = vmax.xlane.f32.xlu0 %v2288
        %v2290 = vpop.xlane.xlu0 %2289
        %v2291 = vmax.f32 %v2157, %v2159
        %2292 = vmax.xlane.f32.xlu0 %v2291
        %v2293 = vpop.xlane.xlu0 %2292
        %v2294 = vmax.f32 %v2161, %v2163
        %2295 = vmax.xlane.f32.xlu0 %v2294
        %v2296 = vpop.xlane.xlu0 %2295
        %v2297 = vmax.f32 %v2167, %v2169
        %2298 = vmax.xlane.f32.xlu0 %v2297
        %v2299 = vpop.xlane.xlu0 %2298
        %v2300 = vmax.f32 %v2171, %v2173
        %2301 = vmax.xlane.f32.xlu0 %v2300
        %v2302 = vpop.xlane.xlu0 %2301
        %v2303 = vmax.f32 %v2177, %v2179
        %2304 = vmax.xlane.f32.xlu0 %v2303
        %v2305 = vpop.xlane.xlu0 %2304
        %v2306 = vmax.f32 %v2181, %v2183
        %2307 = vmax.xlane.f32.xlu0 %v2306
        %v2308 = vpop.xlane.xlu0 %2307
        %v2309 = vmax.f32 %v2187, %v2189
        %2310 = vmax.xlane.f32.xlu0 %v2309
        %v2311 = vpop.xlane.xlu0 %2310
        %v2312 = vmax.f32 %v2191, %v2193
        %2313 = vmax.xlane.f32.xlu0 %v2312
        %v2314 = vpop.xlane.xlu0 %2313
        %v2315 = vmax.f32 %v2197, %v2199
        %2316 = vmax.xlane.f32.xlu0 %v2315
        %v2317 = vpop.xlane.xlu0 %2316
        %v2318 = vmax.f32 %v2201, %v2203
        %2319 = vmax.xlane.f32.xlu0 %v2318
        %v2320 = vpop.xlane.xlu0 %2319
        %v2321 = vmax.f32 %v2207, %v2209
        %2322 = vmax.xlane.f32.xlu0 %v2321
        %v2323 = vpop.xlane.xlu0 %2322
        %v2324 = vmax.f32 %v2211, %v2213
        %2325 = vmax.xlane.f32.xlu0 %v2324
        %v2326 = vpop.xlane.xlu0 %2325
        %v2327 = vmax.f32 %v2217, %v2219
        %2328 = vmax.xlane.f32.xlu0 %v2327
        %v2329 = vpop.xlane.xlu0 %2328
        %v2330 = vmax.f32 %v2221, %v2223
        %2331 = vmax.xlane.f32.xlu0 %v2330
        %v2332 = vpop.xlane.xlu0 %2331
        %v2333 = vmax.f32 %v2227, %v2229
        %2334 = vmax.xlane.f32.xlu0 %v2333
        %v2335 = vpop.xlane.xlu0 %2334
        %v2336 = vmax.f32 %v2231, %v2233
        %2337 = vmax.xlane.f32.xlu0 %v2336
        %v2338 = vpop.xlane.xlu0 %2337
        %v2339 = vmax.f32 %v2237, %v2239
        %2340 = vmax.xlane.f32.xlu0 %v2339
        %v2341 = vpop.xlane.xlu0 %2340
        %v2342 = vmax.f32 %v2241, %v2243
        %2343 = vmax.xlane.f32.xlu0 %v2342
        %v2344 = vpop.xlane.xlu0 %2343
        %v2345 = vmax.f32 %v2247, %v2249
        %2346 = vmax.xlane.f32.xlu0 %v2345
        %v2347 = vpop.xlane.xlu0 %2346
        %v2348 = vmax.f32 %v2251, %v2253
        %2349 = vmax.xlane.f32.xlu0 %v2348
        %v2350 = vpop.xlane.xlu0 %2349
        %v2351 = vsub.f32 %v2097, %v2257
        %v2352 = vsub.f32 %v2099, %v2257
        %v2353 = vsub.f32 %v2101, %v2260
        %v2354 = vsub.f32 %v2103, %v2260
        %v2355 = vsub.f32 %v2107, %v2263
        %v2356 = vsub.f32 %v2109, %v2263
        %v2357 = vsub.f32 %v2111, %v2266
        %v2358 = vsub.f32 %v2113, %v2266
        %v2359 = vsub.f32 %v2117, %v2269
        %v2360 = vsub.f32 %v2119, %v2269
        %v2361 = vsub.f32 %v2121, %v2272
        %v2362 = vsub.f32 %v2123, %v2272
        %v2363 = vsub.f32 %v2127, %v2275
        %v2364 = vsub.f32 %v2129, %v2275
        %v2365 = vsub.f32 %v2131, %v2278
        %v2366 = vsub.f32 %v2133, %v2278
        %v2367 = vsub.f32 %v2137, %v2281
        %v2368 = vsub.f32 %v2139, %v2281
        %v2369 = vsub.f32 %v2141, %v2284
        %v2370 = vsub.f32 %v2143, %v2284
        %v2371 = vsub.f32 %v2147, %v2287
        %v2372 = vsub.f32 %v2149, %v2287
        %v2373 = vsub.f32 %v2151, %v2290
        %v2374 = vsub.f32 %v2153, %v2290
        %v2375 = vsub.f32 %v2157, %v2293
        %v2376 = vsub.f32 %v2159, %v2293
        %v2377 = vsub.f32 %v2161, %v2296
        %v2378 = vsub.f32 %v2163, %v2296
        %v2379 = vsub.f32 %v2167, %v2299
        %v2380 = vsub.f32 %v2169, %v2299
        %v2381 = vsub.f32 %v2171, %v2302
        %v2382 = vsub.f32 %v2173, %v2302
        %v2383 = vsub.f32 %v2177, %v2305
        %v2384 = vsub.f32 %v2179, %v2305
        %v2385 = vsub.f32 %v2181, %v2308
        %v2386 = vsub.f32 %v2183, %v2308
        %v2387 = vsub.f32 %v2187, %v2311
        %v2388 = vsub.f32 %v2189, %v2311
        %v2389 = vsub.f32 %v2191, %v2314
        %v2390 = vsub.f32 %v2193, %v2314
        %v2391 = vsub.f32 %v2197, %v2317
        %v2392 = vsub.f32 %v2199, %v2317
        %v2393 = vsub.f32 %v2201, %v2320
        %v2394 = vsub.f32 %v2203, %v2320
        %v2395 = vsub.f32 %v2207, %v2323
        %v2396 = vsub.f32 %v2209, %v2323
        %v2397 = vsub.f32 %v2211, %v2326
        %v2398 = vsub.f32 %v2213, %v2326
        %v2399 = vsub.f32 %v2217, %v2329
        %v2400 = vsub.f32 %v2219, %v2329
        %v2401 = vsub.f32 %v2221, %v2332
        %v2402 = vsub.f32 %v2223, %v2332
        %v2403 = vsub.f32 %v2227, %v2335
        %v2404 = vsub.f32 %v2229, %v2335
        %v2405 = vsub.f32 %v2231, %v2338
        %v2406 = vsub.f32 %v2233, %v2338
        %v2407 = vsub.f32 %v2237, %v2341
        %v2408 = vsub.f32 %v2239, %v2341
        %v2409 = vsub.f32 %v2241, %v2344
        %v2410 = vsub.f32 %v2243, %v2344
        %v2411 = vsub.f32 %v2247, %v2347
        %v2412 = vsub.f32 %v2249, %v2347
        %v2413 = vsub.f32 %v2251, %v2350
        %v2414 = vsub.f32 %v2253, %v2350
        %v2415 = vmul.f32 %v2351, 1.442695
        %v2416 = vpow.pop %v2415
        %v2417 = vmul.f32 %v2352, 1.442695
        %v2418 = vpow.pop %v2417
        %v2419 = vmul.f32 %v2353, 1.442695
        %v2420 = vpow.pop %v2419
        %v2421 = vmul.f32 %v2354, 1.442695
        %v2422 = vpow.pop %v2421
        %v2423 = vmul.f32 %v2355, 1.442695
        %v2424 = vpow.pop %v2423
        %v2425 = vmul.f32 %v2356, 1.442695
        %v2426 = vpow.pop %v2425
        %v2427 = vmul.f32 %v2357, 1.442695
        %v2428 = vpow.pop %v2427
        %v2429 = vmul.f32 %v2358, 1.442695
        %v2430 = vpow.pop %v2429
        %v2431 = vmul.f32 %v2359, 1.442695
        %v2432 = vpow.pop %v2431
        %v2433 = vmul.f32 %v2360, 1.442695
        %v2434 = vpow.pop %v2433
        %v2435 = vmul.f32 %v2361, 1.442695
        %v2436 = vpow.pop %v2435
        %v2437 = vmul.f32 %v2362, 1.442695
        %v2438 = vpow.pop %v2437
        %v2439 = vmul.f32 %v2363, 1.442695
        %v2440 = vpow.pop %v2439
        %v2441 = vmul.f32 %v2364, 1.442695
        %v2442 = vpow.pop %v2441
        %v2443 = vmul.f32 %v2365, 1.442695
        %v2444 = vpow.pop %v2443
        %v2445 = vmul.f32 %v2366, 1.442695
        %v2446 = vpow.pop %v2445
        %v2447 = vmul.f32 %v2367, 1.442695
        %v2448 = vpow.pop %v2447
        %v2449 = vmul.f32 %v2368, 1.442695
        %v2450 = vpow.pop %v2449
        %v2451 = vmul.f32 %v2369, 1.442695
        %v2452 = vpow.pop %v2451
        %v2453 = vmul.f32 %v2370, 1.442695
        %v2454 = vpow.pop %v2453
        %v2455 = vmul.f32 %v2371, 1.442695
        %v2456 = vpow.pop %v2455
        %v2457 = vmul.f32 %v2372, 1.442695
        %v2458 = vpow.pop %v2457
        %v2459 = vmul.f32 %v2373, 1.442695
        %v2460 = vpow.pop %v2459
        %v2461 = vmul.f32 %v2374, 1.442695
        %v2462 = vpow.pop %v2461
        %v2463 = vmul.f32 %v2375, 1.442695
        %v2464 = vpow.pop %v2463
        %v2465 = vmul.f32 %v2376, 1.442695
        %v2466 = vpow.pop %v2465
        %v2467 = vmul.f32 %v2377, 1.442695
        %v2468 = vpow.pop %v2467
        %v2469 = vmul.f32 %v2378, 1.442695
        %v2470 = vpow.pop %v2469
        %v2471 = vmul.f32 %v2379, 1.442695
        %v2472 = vpow.pop %v2471
        %v2473 = vmul.f32 %v2380, 1.442695
        %v2474 = vpow.pop %v2473
        %v2475 = vmul.f32 %v2381, 1.442695
        %v2476 = vpow.pop %v2475
        %v2477 = vmul.f32 %v2382, 1.442695
        %v2478 = vpow.pop %v2477
        %v2479 = vmul.f32 %v2383, 1.442695
        %v2480 = vpow.pop %v2479
        %v2481 = vmul.f32 %v2384, 1.442695
        %v2482 = vpow.pop %v2481
        %v2483 = vmul.f32 %v2385, 1.442695
        %v2484 = vpow.pop %v2483
        %v2485 = vmul.f32 %v2386, 1.442695
        %v2486 = vpow.pop %v2485
        %v2487 = vmul.f32 %v2387, 1.442695
        %v2488 = vpow.pop %v2487
        %v2489 = vmul.f32 %v2388, 1.442695
        %v2490 = vpow.pop %v2489
        %v2491 = vmul.f32 %v2389, 1.442695
        %v2492 = vpow.pop %v2491
        %v2493 = vmul.f32 %v2390, 1.442695
        %v2494 = vpow.pop %v2493
        %v2495 = vmul.f32 %v2391, 1.442695
        %v2496 = vpow.pop %v2495
        %v2497 = vmul.f32 %v2392, 1.442695
        %v2498 = vpow.pop %v2497
        %v2499 = vmul.f32 %v2393, 1.442695
        %v2500 = vpow.pop %v2499
        %v2501 = vmul.f32 %v2394, 1.442695
        %v2502 = vpow.pop %v2501
        %v2503 = vmul.f32 %v2395, 1.442695
        %v2504 = vpow.pop %v2503
        %v2505 = vmul.f32 %v2396, 1.442695
        %v2506 = vpow.pop %v2505
        %v2507 = vmul.f32 %v2397, 1.442695
        %v2508 = vpow.pop %v2507
        %v2509 = vmul.f32 %v2398, 1.442695
        %v2510 = vpow.pop %v2509
        %v2511 = vmul.f32 %v2399, 1.442695
        %v2512 = vpow.pop %v2511
        %v2513 = vmul.f32 %v2400, 1.442695
        %v2514 = vpow.pop %v2513
        %v2515 = vmul.f32 %v2401, 1.442695
        %v2516 = vpow.pop %v2515
        %v2517 = vmul.f32 %v2402, 1.442695
        %v2518 = vpow.pop %v2517
        %v2519 = vmul.f32 %v2403, 1.442695
        %v2520 = vpow.pop %v2519
        %v2521 = vmul.f32 %v2404, 1.442695
        %v2522 = vpow.pop %v2521
        %v2523 = vmul.f32 %v2405, 1.442695
        %v2524 = vpow.pop %v2523
        %v2525 = vmul.f32 %v2406, 1.442695
        %v2526 = vpow.pop %v2525
        %v2527 = vmul.f32 %v2407, 1.442695
        %v2528 = vpow.pop %v2527
        %v2529 = vmul.f32 %v2408, 1.442695
        %v2530 = vpow.pop %v2529
        %v2531 = vmul.f32 %v2409, 1.442695
        %v2532 = vpow.pop %v2531
        %v2533 = vmul.f32 %v2410, 1.442695
        %v2534 = vpow.pop %v2533
        %v2535 = vmul.f32 %v2411, 1.442695
        %v2536 = vpow.pop %v2535
        %v2537 = vmul.f32 %v2412, 1.442695
        %v2538 = vpow.pop %v2537
        %v2539 = vmul.f32 %v2413, 1.442695
        %v2540 = vpow.pop %v2539
        %v2541 = vmul.f32 %v2414, 1.442695
        %v2542 = vpow.pop %v2541
        %v2543 = vadd.f32 %v2416, %v2418
        %2544 = vadd.xlane.f32.xlu0 %v2543
        %v2545 = vpop.xlane.xlu0 %2544
        %v2546 = vadd.f32 %v2420, %v2422
        %2547 = vadd.xlane.f32.xlu0 %v2546
        %v2548 = vpop.xlane.xlu0 %2547
        %v2549 = vadd.f32 %v2424, %v2426
        %2550 = vadd.xlane.f32.xlu0 %v2549
        %v2551 = vpop.xlane.xlu0 %2550
        %v2552 = vadd.f32 %v2428, %v2430
        %2553 = vadd.xlane.f32.xlu0 %v2552
        %v2554 = vpop.xlane.xlu0 %2553
        %v2555 = vadd.f32 %v2432, %v2434
        %2556 = vadd.xlane.f32.xlu0 %v2555
        %v2557 = vpop.xlane.xlu0 %2556
        %v2558 = vadd.f32 %v2436, %v2438
        %2559 = vadd.xlane.f32.xlu0 %v2558
        %v2560 = vpop.xlane.xlu0 %2559
        %v2561 = vadd.f32 %v2440, %v2442
        %2562 = vadd.xlane.f32.xlu0 %v2561
        %v2563 = vpop.xlane.xlu0 %2562
        %v2564 = vadd.f32 %v2444, %v2446
        %2565 = vadd.xlane.f32.xlu0 %v2564
        %v2566 = vpop.xlane.xlu0 %2565
        %v2567 = vadd.f32 %v2448, %v2450
        %2568 = vadd.xlane.f32.xlu0 %v2567
        %v2569 = vpop.xlane.xlu0 %2568
        %v2570 = vadd.f32 %v2452, %v2454
        %2571 = vadd.xlane.f32.xlu0 %v2570
        %v2572 = vpop.xlane.xlu0 %2571
        %v2573 = vadd.f32 %v2456, %v2458
        %2574 = vadd.xlane.f32.xlu0 %v2573
        %v2575 = vpop.xlane.xlu0 %2574
        %v2576 = vadd.f32 %v2460, %v2462
        %2577 = vadd.xlane.f32.xlu0 %v2576
        %v2578 = vpop.xlane.xlu0 %2577
        %v2579 = vadd.f32 %v2464, %v2466
        %2580 = vadd.xlane.f32.xlu0 %v2579
        %v2581 = vpop.xlane.xlu0 %2580
        %v2582 = vadd.f32 %v2468, %v2470
        %2583 = vadd.xlane.f32.xlu0 %v2582
        %v2584 = vpop.xlane.xlu0 %2583
        %v2585 = vadd.f32 %v2472, %v2474
        %2586 = vadd.xlane.f32.xlu0 %v2585
        %v2587 = vpop.xlane.xlu0 %2586
        %v2588 = vadd.f32 %v2476, %v2478
        %2589 = vadd.xlane.f32.xlu0 %v2588
        %v2590 = vpop.xlane.xlu0 %2589
        %v2591 = vadd.f32 %v2480, %v2482
        %2592 = vadd.xlane.f32.xlu0 %v2591
        %v2593 = vpop.xlane.xlu0 %2592
        %v2594 = vadd.f32 %v2484, %v2486
        %2595 = vadd.xlane.f32.xlu0 %v2594
        %v2596 = vpop.xlane.xlu0 %2595
        %v2597 = vadd.f32 %v2488, %v2490
        %2598 = vadd.xlane.f32.xlu0 %v2597
        %v2599 = vpop.xlane.xlu0 %2598
        %v2600 = vadd.f32 %v2492, %v2494
        %2601 = vadd.xlane.f32.xlu0 %v2600
        %v2602 = vpop.xlane.xlu0 %2601
        %v2603 = vadd.f32 %v2496, %v2498
        %2604 = vadd.xlane.f32.xlu0 %v2603
        %v2605 = vpop.xlane.xlu0 %2604
        %v2606 = vadd.f32 %v2500, %v2502
        %2607 = vadd.xlane.f32.xlu0 %v2606
        %v2608 = vpop.xlane.xlu0 %2607
        %v2609 = vadd.f32 %v2504, %v2506
        %2610 = vadd.xlane.f32.xlu0 %v2609
        %v2611 = vpop.xlane.xlu0 %2610
        %v2612 = vadd.f32 %v2508, %v2510
        %2613 = vadd.xlane.f32.xlu0 %v2612
        %v2614 = vpop.xlane.xlu0 %2613
        %v2615 = vadd.f32 %v2512, %v2514
        %2616 = vadd.xlane.f32.xlu0 %v2615
        %v2617 = vpop.xlane.xlu0 %2616
        %v2618 = vadd.f32 %v2516, %v2518
        %2619 = vadd.xlane.f32.xlu0 %v2618
        %v2620 = vpop.xlane.xlu0 %2619
        %v2621 = vadd.f32 %v2520, %v2522
        %2622 = vadd.xlane.f32.xlu0 %v2621
        %v2623 = vpop.xlane.xlu0 %2622
        %v2624 = vadd.f32 %v2524, %v2526
        %2625 = vadd.xlane.f32.xlu0 %v2624
        %v2626 = vpop.xlane.xlu0 %2625
        %v2627 = vadd.f32 %v2528, %v2530
        %2628 = vadd.xlane.f32.xlu0 %v2627
        %v2629 = vpop.xlane.xlu0 %2628
        %v2630 = vadd.f32 %v2532, %v2534
        %2631 = vadd.xlane.f32.xlu0 %v2630
        %v2632 = vpop.xlane.xlu0 %2631
        %v2633 = vadd.f32 %v2536, %v2538
        %2634 = vadd.xlane.f32.xlu0 %v2633
        %v2635 = vpop.xlane.xlu0 %2634
        %v2636 = vadd.f32 %v2540, %v2542
        %2637 = vadd.xlane.f32.xlu0 %v2636
        %v2638 = vpop.xlane.xlu0 %2637
        %v2639 = vrcp.pop %v2545
        %v2640 = vrcp.pop %v2548
        %v2641 = vrcp.pop %v2551
        %v2642 = vrcp.pop %v2554
        %v2643 = vrcp.pop %v2557
        %v2644 = vrcp.pop %v2560
        %v2645 = vrcp.pop %v2563
        %v2646 = vrcp.pop %v2566
        %v2647 = vrcp.pop %v2569
        %v2648 = vrcp.pop %v2572
        %v2649 = vrcp.pop %v2575
        %v2650 = vrcp.pop %v2578
        %v2651 = vrcp.pop %v2581
        %v2652 = vrcp.pop %v2584
        %v2653 = vrcp.pop %v2587
        %v2654 = vrcp.pop %v2590
        %v2655 = vrcp.pop %v2593
        %v2656 = vrcp.pop %v2596
        %v2657 = vrcp.pop %v2599
        %v2658 = vrcp.pop %v2602
        %v2659 = vrcp.pop %v2605
        %v2660 = vrcp.pop %v2608
        %v2661 = vrcp.pop %v2611
        %v2662 = vrcp.pop %v2614
        %v2663 = vrcp.pop %v2617
        %v2664 = vrcp.pop %v2620
        %v2665 = vrcp.pop %v2623
        %v2666 = vrcp.pop %v2626
        %v2667 = vrcp.pop %v2629
        %v2668 = vrcp.pop %v2632
        %v2669 = vrcp.pop %v2635
        %v2670 = vrcp.pop %v2638
        %v2671 = vmul.f32 %v2416, %v2639
        %v2672 = vmul.f32 %v2418, %v2639
        %v2673 = vmul.f32 %v2420, %v2640
        %v2674 = vmul.f32 %v2422, %v2640
        %v2675 = vmul.f32 %v2424, %v2641
        %v2676 = vmul.f32 %v2426, %v2641
        %v2677 = vmul.f32 %v2428, %v2642
        %v2678 = vmul.f32 %v2430, %v2642
        %v2679 = vmul.f32 %v2432, %v2643
        %v2680 = vmul.f32 %v2434, %v2643
        %v2681 = vmul.f32 %v2436, %v2644
        %v2682 = vmul.f32 %v2438, %v2644
        %v2683 = vmul.f32 %v2440, %v2645
        %v2684 = vmul.f32 %v2442, %v2645
        %v2685 = vmul.f32 %v2444, %v2646
        %v2686 = vmul.f32 %v2446, %v2646
        %v2687 = vmul.f32 %v2448, %v2647
        %v2688 = vmul.f32 %v2450, %v2647
        %v2689 = vmul.f32 %v2452, %v2648
        %v2690 = vmul.f32 %v2454, %v2648
        %v2691 = vmul.f32 %v2456, %v2649
        %v2692 = vmul.f32 %v2458, %v2649
        %v2693 = vmul.f32 %v2460, %v2650
        %v2694 = vmul.f32 %v2462, %v2650
        %v2695 = vmul.f32 %v2464, %v2651
        %v2696 = vmul.f32 %v2466, %v2651
        %v2697 = vmul.f32 %v2468, %v2652
        %v2698 = vmul.f32 %v2470, %v2652
        %v2699 = vmul.f32 %v2472, %v2653
        %v2700 = vmul.f32 %v2474, %v2653
        %v2701 = vmul.f32 %v2476, %v2654
        %v2702 = vmul.f32 %v2478, %v2654
        %v2703 = vmul.f32 %v2480, %v2655
        %v2704 = vmul.f32 %v2482, %v2655
        %v2705 = vmul.f32 %v2484, %v2656
        %v2706 = vmul.f32 %v2486, %v2656
        %v2707 = vmul.f32 %v2488, %v2657
        %v2708 = vmul.f32 %v2490, %v2657
        %v2709 = vmul.f32 %v2492, %v2658
        %v2710 = vmul.f32 %v2494, %v2658
        %v2711 = vmul.f32 %v2496, %v2659
        %v2712 = vmul.f32 %v2498, %v2659
        %v2713 = vmul.f32 %v2500, %v2660
        %v2714 = vmul.f32 %v2502, %v2660
        %v2715 = vmul.f32 %v2504, %v2661
        %v2716 = vmul.f32 %v2506, %v2661
        %v2717 = vmul.f32 %v2508, %v2662
        %v2718 = vmul.f32 %v2510, %v2662
        %v2719 = vmul.f32 %v2512, %v2663
        %v2720 = vmul.f32 %v2514, %v2663
        %v2721 = vmul.f32 %v2516, %v2664
        %v2722 = vmul.f32 %v2518, %v2664
        %v2723 = vmul.f32 %v2520, %v2665
        %v2724 = vmul.f32 %v2522, %v2665
        %v2725 = vmul.f32 %v2524, %v2666
        %v2726 = vmul.f32 %v2526, %v2666
        %v2727 = vmul.f32 %v2528, %v2667
        %v2728 = vmul.f32 %v2530, %v2667
        %v2729 = vmul.f32 %v2532, %v2668
        %v2730 = vmul.f32 %v2534, %v2668
        %v2731 = vmul.f32 %v2536, %v2669
        %v2732 = vmul.f32 %v2538, %v2669
        %v2733 = vmul.f32 %v2540, %v2670
        %v2734 = vmul.f32 %v2542, %v2670
        %v2735 = vpack.c.bf16 %v2673, %v2671
        %v2736 = vpack.c.bf16 %v2674, %v2672
        %v2737 = vpack.c.bf16 %v2677, %v2675
        %v2738 = vpack.c.bf16 %v2678, %v2676
        %v2739 = vpack.c.bf16 %v2681, %v2679
        %v2740 = vpack.c.bf16 %v2682, %v2680
        %v2741 = vpack.c.bf16 %v2685, %v2683
        %v2742 = vpack.c.bf16 %v2686, %v2684
        %v2743 = vpack.c.bf16 %v2689, %v2687
        %v2744 = vpack.c.bf16 %v2690, %v2688
        %v2745 = vpack.c.bf16 %v2693, %v2691
        %v2746 = vpack.c.bf16 %v2694, %v2692
        %v2747 = vpack.c.bf16 %v2697, %v2695
        %v2748 = vpack.c.bf16 %v2698, %v2696
        %v2749 = vpack.c.bf16 %v2701, %v2699
        %v2750 = vpack.c.bf16 %v2702, %v2700
        %v2751 = vpack.c.bf16 %v2705, %v2703
        %v2752 = vpack.c.bf16 %v2706, %v2704
        %v2753 = vpack.c.bf16 %v2709, %v2707
        %v2754 = vpack.c.bf16 %v2710, %v2708
        %v2755 = vpack.c.bf16 %v2713, %v2711
        %v2756 = vpack.c.bf16 %v2714, %v2712
        %v2757 = vpack.c.bf16 %v2717, %v2715
        %v2758 = vpack.c.bf16 %v2718, %v2716
        %v2759 = vpack.c.bf16 %v2721, %v2719
        %v2760 = vpack.c.bf16 %v2722, %v2720
        %v2761 = vpack.c.bf16 %v2725, %v2723
        %v2762 = vpack.c.bf16 %v2726, %v2724
        %v2763 = vpack.c.bf16 %v2729, %v2727
        %v2764 = vpack.c.bf16 %v2730, %v2728
        %v2765 = vpack.c.bf16 %v2733, %v2731
        %v2766 = vpack.c.bf16 %v2734, %v2732
        %2767 = vmatprep.subr.bf16.mxu0 %v2736
        %2768 = vmatpush1.bf16.xpose.msra.mxu0 %v2735
        %2769 = vmatprep.subr.bf16.mxu0 %v2738
        %2770 = vmatpush1.bf16.xpose.msra.mxu0 %v2737
        %2771 = vmatprep.subr.bf16.mxu0 %v2740
        %2772 = vmatpush1.bf16.xpose.msra.mxu0 %v2739
        %2773 = vmatprep.subr.bf16.mxu0 %v2742
        %2774 = vmatpush1.bf16.xpose.msra.mxu0 %v2741
        %2775 = vmatprep.subr.bf16.mxu0 %v2744
        %2776 = vmatpush1.bf16.xpose.msra.mxu0 %v2743
        %2777 = vmatprep.subr.bf16.mxu0 %v2746
        %2778 = vmatpush1.bf16.xpose.msra.mxu0 %v2745
        %2779 = vmatprep.subr.bf16.mxu0 %v2748
        %2780 = vmatpush1.bf16.xpose.msra.mxu0 %v2747
        %2781 = vmatprep.subr.bf16.mxu0 %v2750
        %2782 = vmatpush1.bf16.xpose.msra.mxu0 %v2749
        %2783 = vmatprep.subr.bf16.mxu0 %v2752
        %2784 = vmatpush1.bf16.xpose.msra.mxu0 %v2751
        %2785 = vmatprep.subr.bf16.mxu0 %v2754
        %2786 = vmatpush1.bf16.xpose.msra.mxu0 %v2753
        %2787 = vmatprep.subr.bf16.mxu0 %v2756
        %2788 = vmatpush1.bf16.xpose.msra.mxu0 %v2755
        %2789 = vmatprep.subr.bf16.mxu0 %v2758
        %2790 = vmatpush1.bf16.xpose.msra.mxu0 %v2757
        %2791 = vmatprep.subr.bf16.mxu0 %v2760
        %2792 = vmatpush1.bf16.xpose.msra.mxu0 %v2759
        %2793 = vmatprep.subr.bf16.mxu0 %v2762
        %2794 = vmatpush1.bf16.xpose.msra.mxu0 %v2761
        %2795 = vmatprep.subr.bf16.mxu0 %v2764
        %2796 = vmatpush1.bf16.xpose.msra.mxu0 %v2763
        %2797 = vmatprep.subr.bf16.mxu0 %v2766
        %2798 = vmatpush1.bf16.xpose.msra.mxu0 %v2765
        %2799 = vmatprep.mubr.bf16.mxu0 %v1999
        %2800 = vmatmul.mubr.bf16.gmra.mrb[0].mxu0 %v1998
        %v2801 = vpop.f32.mrb[0].mxu0
        %v2802 = vadd.f32 0.0, %v2801
        %v2803 = vpop.f32.mrb[0].mxu0
        %v2804 = vadd.f32 0.0, %v2803
        %v2805 = vpop.f32.mrb[0].mxu0
        %v2806 = vadd.f32 0.0, %v2805
        %v2807 = vpop.f32.mrb[0].mxu0
        %v2808 = vadd.f32 0.0, %v2807
        %2809 = vmatprep.mubr.bf16.mxu0 %v2001
        %2810 = vmatmul.mubr.bf16.gmra.mrb[0].mxu0 %v2000
        %v2811 = vpop.f32.mrb[0].mxu0
        %v2812 = vadd.f32 0.0, %v2811
        %v2813 = vpop.f32.mrb[0].mxu0
        %v2814 = vadd.f32 0.0, %v2813
        %v2815 = vpop.f32.mrb[0].mxu0
        %v2816 = vadd.f32 0.0, %v2815
        %v2817 = vpop.f32.mrb[0].mxu0
        %v2818 = vadd.f32 0.0, %v2817
        %2819 = vmatprep.mubr.bf16.mxu0 %v2003
        %2820 = vmatmul.mubr.bf16.gmra.mrb[0].mxu0 %v2002
        %v2821 = vpop.f32.mrb[0].mxu0
        %v2822 = vadd.f32 0.0, %v2821
        %v2823 = vpop.f32.mrb[0].mxu0
        %v2824 = vadd.f32 0.0, %v2823
        %v2825 = vpop.f32.mrb[0].mxu0
        %v2826 = vadd.f32 0.0, %v2825
        %v2827 = vpop.f32.mrb[0].mxu0
        %v2828 = vadd.f32 0.0, %v2827
        %2829 = vmatprep.mubr.bf16.mxu0 %v2005
        %2830 = vmatmul.mubr.bf16.gmra.mrb[0].mxu0 %v2004
        %v2831 = vpop.f32.mrb[0].mxu0
        %v2832 = vadd.f32 0.0, %v2831
        %v2833 = vpop.f32.mrb[0].mxu0
        %v2834 = vadd.f32 0.0, %v2833
        %v2835 = vpop.f32.mrb[0].mxu0
        %v2836 = vadd.f32 0.0, %v2835
        %v2837 = vpop.f32.mrb[0].mxu0
        %v2838 = vadd.f32 0.0, %v2837
        %2839 = vmatprep.mubr.bf16.mxu0 %v2007
        %2840 = vmatmul.mubr.bf16.gmra.mrb[0].mxu0 %v2006
        %v2841 = vpop.f32.mrb[0].mxu0
        %v2842 = vadd.f32 0.0, %v2841
        %v2843 = vpop.f32.mrb[0].mxu0
        %v2844 = vadd.f32 0.0, %v2843
        %v2845 = vpop.f32.mrb[0].mxu0
        %v2846 = vadd.f32 0.0, %v2845
        %v2847 = vpop.f32.mrb[0].mxu0
        %v2848 = vadd.f32 0.0, %v2847
        %2849 = vmatprep.mubr.bf16.mxu0 %v2009
        %2850 = vmatmul.mubr.bf16.gmra.mrb[0].mxu0 %v2008
        %v2851 = vpop.f32.mrb[0].mxu0
        %v2852 = vadd.f32 0.0, %v2851
        %v2853 = vpop.f32.mrb[0].mxu0
        %v2854 = vadd.f32 0.0, %v2853
        %v2855 = vpop.f32.mrb[0].mxu0
        %v2856 = vadd.f32 0.0, %v2855
        %v2857 = vpop.f32.mrb[0].mxu0
        %v2858 = vadd.f32 0.0, %v2857
        %2859 = vmatprep.mubr.bf16.mxu0 %v2011
        %2860 = vmatmul.mubr.bf16.gmra.mrb[0].mxu0 %v2010
        %v2861 = vpop.f32.mrb[0].mxu0
        %v2862 = vadd.f32 0.0, %v2861
        %v2863 = vpop.f32.mrb[0].mxu0
        %v2864 = vadd.f32 0.0, %v2863
        %v2865 = vpop.f32.mrb[0].mxu0
        %v2866 = vadd.f32 0.0, %v2865
        %v2867 = vpop.f32.mrb[0].mxu0
        %v2868 = vadd.f32 0.0, %v2867
        %2869 = vmatprep.mubr.bf16.mxu0 %v2013
        %2870 = vmatmul.mubr.bf16.gmra.mrb[0].mxu0 %v2012
        %v2871 = vpop.f32.mrb[0].mxu0
        %v2872 = vadd.f32 0.0, %v2871
        %v2873 = vpop.f32.mrb[0].mxu0
        %v2874 = vadd.f32 0.0, %v2873
        %v2875 = vpop.f32.mrb[0].mxu0
        %v2876 = vadd.f32 0.0, %v2875
        %v2877 = vpop.f32.mrb[0].mxu0
        %v2878 = vadd.f32 0.0, %v2877
        %2879 = vmatprep.mubr.bf16.mxu0 %v2015
        %2880 = vmatmul.mubr.bf16.gmra.mrb[0].mxu0 %v2014
        %v2881 = vpop.f32.mrb[0].mxu0
        %v2882 = vadd.f32 0.0, %v2881
        %v2883 = vpop.f32.mrb[0].mxu0
        %v2884 = vadd.f32 0.0, %v2883
        %v2885 = vpop.f32.mrb[0].mxu0
        %v2886 = vadd.f32 0.0, %v2885
        %v2887 = vpop.f32.mrb[0].mxu0
        %v2888 = vadd.f32 0.0, %v2887
        %2889 = vmatprep.mubr.bf16.mxu0 %v2017
        %2890 = vmatmul.mubr.bf16.gmra.mrb[0].mxu0 %v2016
        %v2891 = vpop.f32.mrb[0].mxu0
        %v2892 = vadd.f32 0.0, %v2891
        %v2893 = vpop.f32.mrb[0].mxu0
        %v2894 = vadd.f32 0.0, %v2893
        %v2895 = vpop.f32.mrb[0].mxu0
        %v2896 = vadd.f32 0.0, %v2895
        %v2897 = vpop.f32.mrb[0].mxu0
        %v2898 = vadd.f32 0.0, %v2897
        %2899 = vmatprep.mubr.bf16.mxu0 %v2019
        %2900 = vmatmul.mubr.bf16.gmra.mrb[0].mxu0 %v2018
        %v2901 = vpop.f32.mrb[0].mxu0
        %v2902 = vadd.f32 0.0, %v2901
        %v2903 = vpop.f32.mrb[0].mxu0
        %v2904 = vadd.f32 0.0, %v2903
        %v2905 = vpop.f32.mrb[0].mxu0
        %v2906 = vadd.f32 0.0, %v2905
        %v2907 = vpop.f32.mrb[0].mxu0
        %v2908 = vadd.f32 0.0, %v2907
        %2909 = vmatprep.mubr.bf16.mxu0 %v2021
        %2910 = vmatmul.mubr.bf16.gmra.mrb[0].mxu0 %v2020
        %v2911 = vpop.f32.mrb[0].mxu0
        %v2912 = vadd.f32 0.0, %v2911
        %v2913 = vpop.f32.mrb[0].mxu0
        %v2914 = vadd.f32 0.0, %v2913
        %v2915 = vpop.f32.mrb[0].mxu0
        %v2916 = vadd.f32 0.0, %v2915
        %v2917 = vpop.f32.mrb[0].mxu0
        %v2918 = vadd.f32 0.0, %v2917
        %2919 = vmatprep.mubr.bf16.mxu0 %v2023
        %2920 = vmatmul.mubr.bf16.gmra.mrb[0].mxu0 %v2022
        %v2921 = vpop.f32.mrb[0].mxu0
        %v2922 = vadd.f32 0.0, %v2921
        %v2923 = vpop.f32.mrb[0].mxu0
        %v2924 = vadd.f32 0.0, %v2923
        %v2925 = vpop.f32.mrb[0].mxu0
        %v2926 = vadd.f32 0.0, %v2925
        %v2927 = vpop.f32.mrb[0].mxu0
        %v2928 = vadd.f32 0.0, %v2927
        %2929 = vmatprep.mubr.bf16.mxu0 %v2025
        %2930 = vmatmul.mubr.bf16.gmra.mrb[0].mxu0 %v2024
        %v2931 = vpop.f32.mrb[0].mxu0
        %v2932 = vadd.f32 0.0, %v2931
        %v2933 = vpop.f32.mrb[0].mxu0
        %v2934 = vadd.f32 0.0, %v2933
        %v2935 = vpop.f32.mrb[0].mxu0
        %v2936 = vadd.f32 0.0, %v2935
        %v2937 = vpop.f32.mrb[0].mxu0
        %v2938 = vadd.f32 0.0, %v2937
        %2939 = vmatprep.mubr.bf16.mxu0 %v2027
        %2940 = vmatmul.mubr.bf16.gmra.mrb[0].mxu0 %v2026
        %v2941 = vpop.f32.mrb[0].mxu0
        %v2942 = vadd.f32 0.0, %v2941
        %v2943 = vpop.f32.mrb[0].mxu0
        %v2944 = vadd.f32 0.0, %v2943
        %v2945 = vpop.f32.mrb[0].mxu0
        %v2946 = vadd.f32 0.0, %v2945
        %v2947 = vpop.f32.mrb[0].mxu0
        %v2948 = vadd.f32 0.0, %v2947
        %2949 = vmatprep.mubr.bf16.mxu0 %v2029
        %2950 = vmatmul.mubr.bf16.gmra.mrb[0].mxu0 %v2028
        %v2951 = vpop.f32.mrb[0].mxu0
        %v2952 = vadd.f32 0.0, %v2951
        %v2953 = vpop.f32.mrb[0].mxu0
        %v2954 = vadd.f32 0.0, %v2953
        %v2955 = vpop.f32.mrb[0].mxu0
        %v2956 = vadd.f32 0.0, %v2955
        %v2957 = vpop.f32.mrb[0].mxu0
        %v2958 = vadd.f32 0.0, %v2957
        %2959 = vdwg.mxu0
        %v2960 = vpack.c.bf16 %v2806, %v2802
        %v2961 = vpack.c.bf16 %v2808, %v2804
        %v2962 = vpack.c.bf16 %v2816, %v2812
        %v2963 = vpack.c.bf16 %v2818, %v2814
        %v2964 = vpack.c.bf16 %v2826, %v2822
        %v2965 = vpack.c.bf16 %v2828, %v2824
        %v2966 = vpack.c.bf16 %v2836, %v2832
        %v2967 = vpack.c.bf16 %v2838, %v2834
        %v2968 = vpack.c.bf16 %v2846, %v2842
        %v2969 = vpack.c.bf16 %v2848, %v2844
        %v2970 = vpack.c.bf16 %v2856, %v2852
        %v2971 = vpack.c.bf16 %v2858, %v2854
        %v2972 = vpack.c.bf16 %v2866, %v2862
        %v2973 = vpack.c.bf16 %v2868, %v2864
        %v2974 = vpack.c.bf16 %v2876, %v2872
        %v2975 = vpack.c.bf16 %v2878, %v2874
        %v2976 = vpack.c.bf16 %v2886, %v2882
        %v2977 = vpack.c.bf16 %v2888, %v2884
        %v2978 = vpack.c.bf16 %v2896, %v2892
        %v2979 = vpack.c.bf16 %v2898, %v2894
        %v2980 = vpack.c.bf16 %v2906, %v2902
        %v2981 = vpack.c.bf16 %v2908, %v2904
        %v2982 = vpack.c.bf16 %v2916, %v2912
        %v2983 = vpack.c.bf16 %v2918, %v2914
        %v2984 = vpack.c.bf16 %v2926, %v2922
        %v2985 = vpack.c.bf16 %v2928, %v2924
        %v2986 = vpack.c.bf16 %v2936, %v2932
        %v2987 = vpack.c.bf16 %v2938, %v2934
        %v2988 = vpack.c.bf16 %v2946, %v2942
        %v2989 = vpack.c.bf16 %v2948, %v2944
        %v2990 = vpack.c.bf16 %v2956, %v2952
        %v2991 = vpack.c.bf16 %v2958, %v2954
        %2992 = vst [vmem:[#allocation3] sm:$0xff] %v2960
        %2993 = vst [vmem:[#allocation3 + $0x8] sm:$0xff] %v2961
        %2994 = vst [vmem:[#allocation3 + $0x10] sm:$0xff] %v2962
        %2995 = vst [vmem:[#allocation3 + $0x18] sm:$0xff] %v2963
        %2996 = vst [vmem:[#allocation3 + $0x20] sm:$0xff] %v2964
        %2997 = vst [vmem:[#allocation3 + $0x28] sm:$0xff] %v2965
        %2998 = vst [vmem:[#allocation3 + $0x30] sm:$0xff] %v2966
        %2999 = vst [vmem:[#allocation3 + $0x38] sm:$0xff] %v2967
        %3000 = vst [vmem:[#allocation3 + $0x40] sm:$0xff] %v2968
        %3001 = vst [vmem:[#allocation3 + $0x48] sm:$0xff] %v2969
        %3002 = vst [vmem:[#allocation3 + $0x50] sm:$0xff] %v2970
        %3003 = vst [vmem:[#allocation3 + $0x58] sm:$0xff] %v2971
        %3004 = vst [vmem:[#allocation3 + $0x60] sm:$0xff] %v2972
        %3005 = vst [vmem:[#allocation3 + $0x68] sm:$0xff] %v2973
        %3006 = vst [vmem:[#allocation3 + $0x70] sm:$0xff] %v2974
        %3007 = vst [vmem:[#allocation3 + $0x78] sm:$0xff] %v2975
        %3008 = vst [vmem:[#allocation3 + $0x80] sm:$0xff] %v2976
        %3009 = vst [vmem:[#allocation3 + $0x88] sm:$0xff] %v2977
        %3010 = vst [vmem:[#allocation3 + $0x90] sm:$0xff] %v2978
        %3011 = vst [vmem:[#allocation3 + $0x98] sm:$0xff] %v2979
        %3012 = vst [vmem:[#allocation3 + $0xa0] sm:$0xff] %v2980
        %3013 = vst [vmem:[#allocation3 + $0xa8] sm:$0xff] %v2981
        %3014 = vst [vmem:[#allocation3 + $0xb0] sm:$0xff] %v2982
        %3015 = vst [vmem:[#allocation3 + $0xb8] sm:$0xff] %v2983
        %3016 = vst [vmem:[#allocation3 + $0xc0] sm:$0xff] %v2984
        %3017 = vst [vmem:[#allocation3 + $0xc8] sm:$0xff] %v2985
        %3018 = vst [vmem:[#allocation3 + $0xd0] sm:$0xff] %v2986
        %3019 = vst [vmem:[#allocation3 + $0xd8] sm:$0xff] %v2987
        %3020 = vst [vmem:[#allocation3 + $0xe0] sm:$0xff] %v2988
        %3021 = vst [vmem:[#allocation3 + $0xe8] sm:$0xff] %v2989
        %3022 = vst [vmem:[#allocation3 + $0xf0] sm:$0xff] %v2990
        %3023 = vst [vmem:[#allocation3 + $0xf8] sm:$0xff] %v2991
        %v3024 = vld [vmem:[%s2 + $0x80] sm:$0xff]
        %v3025 = vld [vmem:[%s2 + $0x88] sm:$0xff]
        %v3026 = vld [vmem:[%s2 + $0x90] sm:$0xff]
        %v3027 = vld [vmem:[%s2 + $0x98] sm:$0xff]
        %v3028 = vld [vmem:[%s2 + $0xa0] sm:$0xff]
        %v3029 = vld [vmem:[%s2 + $0xa8] sm:$0xff]
        %v3030 = vld [vmem:[%s2 + $0xb0] sm:$0xff]
        %v3031 = vld [vmem:[%s2 + $0xb8] sm:$0xff]
        %v3032 = vld [vmem:[%s2 + $0xc0] sm:$0xff]
        %v3033 = vld [vmem:[%s2 + $0xc8] sm:$0xff]
        %v3034 = vld [vmem:[%s2 + $0xd0] sm:$0xff]
        %v3035 = vld [vmem:[%s2 + $0xd8] sm:$0xff]
        %v3036 = vld [vmem:[%s2 + $0xe0] sm:$0xff]
        %v3037 = vld [vmem:[%s2 + $0xe8] sm:$0xff]
        %v3038 = vld [vmem:[%s2 + $0xf0] sm:$0xff]
        %v3039 = vld [vmem:[%s2 + $0xf8] sm:$0xff]
        %v3040 = vld [vmem:[%s2 + $0x100] sm:$0xff]
        %v3041 = vld [vmem:[%s2 + $0x108] sm:$0xff]
        %v3042 = vld [vmem:[%s2 + $0x110] sm:$0xff]
        %v3043 = vld [vmem:[%s2 + $0x118] sm:$0xff]
        %v3044 = vld [vmem:[%s2 + $0x120] sm:$0xff]
        %v3045 = vld [vmem:[%s2 + $0x128] sm:$0xff]
        %v3046 = vld [vmem:[%s2 + $0x130] sm:$0xff]
        %v3047 = vld [vmem:[%s2 + $0x138] sm:$0xff]
        %v3048 = vld [vmem:[%s2 + $0x140] sm:$0xff]
        %v3049 = vld [vmem:[%s2 + $0x148] sm:$0xff]
        %v3050 = vld [vmem:[%s2 + $0x150] sm:$0xff]
        %v3051 = vld [vmem:[%s2 + $0x158] sm:$0xff]
        %v3052 = vld [vmem:[%s2 + $0x160] sm:$0xff]
        %v3053 = vld [vmem:[%s2 + $0x168] sm:$0xff]
        %v3054 = vld [vmem:[%s2 + $0x170] sm:$0xff]
        %v3055 = vld [vmem:[%s2 + $0x178] sm:$0xff]
        %v3056 = vld [vmem:[%s2 + $0x180] sm:$0xff]
        %v3057 = vld [vmem:[%s2 + $0x188] sm:$0xff]
        %v3058 = vld [vmem:[%s2 + $0x190] sm:$0xff]
        %v3059 = vld [vmem:[%s2 + $0x198] sm:$0xff]
        %v3060 = vld [vmem:[%s2 + $0x1a0] sm:$0xff]
        %v3061 = vld [vmem:[%s2 + $0x1a8] sm:$0xff]
        %v3062 = vld [vmem:[%s2 + $0x1b0] sm:$0xff]
        %v3063 = vld [vmem:[%s2 + $0x1b8] sm:$0xff]
        %v3064 = vld [vmem:[%s2 + $0x1c0] sm:$0xff]
        %v3065 = vld [vmem:[%s2 + $0x1c8] sm:$0xff]
        %v3066 = vld [vmem:[%s2 + $0x1d0] sm:$0xff]
        %v3067 = vld [vmem:[%s2 + $0x1d8] sm:$0xff]
        %v3068 = vld [vmem:[%s2 + $0x1e0] sm:$0xff]
        %v3069 = vld [vmem:[%s2 + $0x1e8] sm:$0xff]
        %v3070 = vld [vmem:[%s2 + $0x1f0] sm:$0xff]
        %v3071 = vld [vmem:[%s2 + $0x1f8] sm:$0xff]
        %v3072 = vld [vmem:[#allocation3] sm:$0xff]
        %v3073 = vld [vmem:[#allocation3 + $0x8] sm:$0xff]
        %v3074 = vld [vmem:[#allocation3 + $0x10] sm:$0xff]
        %v3075 = vld [vmem:[#allocation3 + $0x18] sm:$0xff]
        %v3076 = vld [vmem:[#allocation3 + $0x20] sm:$0xff]
        %v3077 = vld [vmem:[#allocation3 + $0x28] sm:$0xff]
        %v3078 = vld [vmem:[#allocation3 + $0x30] sm:$0xff]
        %v3079 = vld [vmem:[#allocation3 + $0x38] sm:$0xff]
        %v3080 = vld [vmem:[#allocation3 + $0x40] sm:$0xff]
        %v3081 = vld [vmem:[#allocation3 + $0x48] sm:$0xff]
        %v3082 = vld [vmem:[#allocation3 + $0x50] sm:$0xff]
        %v3083 = vld [vmem:[#allocation3 + $0x58] sm:$0xff]
        %v3084 = vld [vmem:[#allocation3 + $0x60] sm:$0xff]
        %v3085 = vld [vmem:[#allocation3 + $0x68] sm:$0xff]
        %v3086 = vld [vmem:[#allocation3 + $0x70] sm:$0xff]
        %v3087 = vld [vmem:[#allocation3 + $0x78] sm:$0xff]
        %v3088 = vld [vmem:[#allocation3 + $0x80] sm:$0xff]
        %v3089 = vld [vmem:[#allocation3 + $0x88] sm:$0xff]
        %v3090 = vld [vmem:[#allocation3 + $0x90] sm:$0xff]
        %v3091 = vld [vmem:[#allocation3 + $0x98] sm:$0xff]
        %v3092 = vld [vmem:[#allocation3 + $0xa0] sm:$0xff]
        %v3093 = vld [vmem:[#allocation3 + $0xa8] sm:$0xff]
        %v3094 = vld [vmem:[#allocation3 + $0xb0] sm:$0xff]
        %v3095 = vld [vmem:[#allocation3 + $0xb8] sm:$0xff]
        %v3096 = vld [vmem:[#allocation3 + $0xc0] sm:$0xff]
        %v3097 = vld [vmem:[#allocation3 + $0xc8] sm:$0xff]
        %v3098 = vld [vmem:[#allocation3 + $0xd0] sm:$0xff]
        %v3099 = vld [vmem:[#allocation3 + $0xd8] sm:$0xff]
        %v3100 = vld [vmem:[#allocation3 + $0xe0] sm:$0xff]
        %v3101 = vld [vmem:[#allocation3 + $0xe8] sm:$0xff]
        %v3102 = vld [vmem:[#allocation3 + $0xf0] sm:$0xff]
        %v3103 = vld [vmem:[#allocation3 + $0xf8] sm:$0xff]
        %v3104 = vld [vmem:[%s3 + $0x80] sm:$0xff]
        %v3105 = vld [vmem:[%s3 + $0x88] sm:$0xff]
        %v3106 = vld [vmem:[%s3 + $0x90] sm:$0xff]
        %v3107 = vld [vmem:[%s3 + $0x98] sm:$0xff]
        %v3108 = vld [vmem:[%s3 + $0xa0] sm:$0xff]
        %v3109 = vld [vmem:[%s3 + $0xa8] sm:$0xff]
        %v3110 = vld [vmem:[%s3 + $0xb0] sm:$0xff]
        %v3111 = vld [vmem:[%s3 + $0xb8] sm:$0xff]
        %v3112 = vld [vmem:[%s3 + $0xc0] sm:$0xff]
        %v3113 = vld [vmem:[%s3 + $0xc8] sm:$0xff]
        %v3114 = vld [vmem:[%s3 + $0xd0] sm:$0xff]
        %v3115 = vld [vmem:[%s3 + $0xd8] sm:$0xff]
        %v3116 = vld [vmem:[%s3 + $0xe0] sm:$0xff]
        %v3117 = vld [vmem:[%s3 + $0xe8] sm:$0xff]
        %v3118 = vld [vmem:[%s3 + $0xf0] sm:$0xff]
        %v3119 = vld [vmem:[%s3 + $0xf8] sm:$0xff]
        %v3120 = vld [vmem:[%s3 + $0x100] sm:$0xff]
        %v3121 = vld [vmem:[%s3 + $0x108] sm:$0xff]
        %v3122 = vld [vmem:[%s3 + $0x110] sm:$0xff]
        %v3123 = vld [vmem:[%s3 + $0x118] sm:$0xff]
        %v3124 = vld [vmem:[%s3 + $0x120] sm:$0xff]
        %v3125 = vld [vmem:[%s3 + $0x128] sm:$0xff]
        %v3126 = vld [vmem:[%s3 + $0x130] sm:$0xff]
        %v3127 = vld [vmem:[%s3 + $0x138] sm:$0xff]
        %v3128 = vld [vmem:[%s3 + $0x140] sm:$0xff]
        %v3129 = vld [vmem:[%s3 + $0x148] sm:$0xff]
        %v3130 = vld [vmem:[%s3 + $0x150] sm:$0xff]
        %v3131 = vld [vmem:[%s3 + $0x158] sm:$0xff]
        %v3132 = vld [vmem:[%s3 + $0x160] sm:$0xff]
        %v3133 = vld [vmem:[%s3 + $0x168] sm:$0xff]
        %v3134 = vld [vmem:[%s3 + $0x170] sm:$0xff]
        %v3135 = vld [vmem:[%s3 + $0x178] sm:$0xff]
        %v3136 = vld [vmem:[%s3 + $0x180] sm:$0xff]
        %v3137 = vld [vmem:[%s3 + $0x188] sm:$0xff]
        %v3138 = vld [vmem:[%s3 + $0x190] sm:$0xff]
        %v3139 = vld [vmem:[%s3 + $0x198] sm:$0xff]
        %v3140 = vld [vmem:[%s3 + $0x1a0] sm:$0xff]
        %v3141 = vld [vmem:[%s3 + $0x1a8] sm:$0xff]
        %v3142 = vld [vmem:[%s3 + $0x1b0] sm:$0xff]
        %v3143 = vld [vmem:[%s3 + $0x1b8] sm:$0xff]
        %v3144 = vld [vmem:[%s3 + $0x1c0] sm:$0xff]
        %v3145 = vld [vmem:[%s3 + $0x1c8] sm:$0xff]
        %v3146 = vld [vmem:[%s3 + $0x1d0] sm:$0xff]
        %v3147 = vld [vmem:[%s3 + $0x1d8] sm:$0xff]
        %v3148 = vld [vmem:[%s3 + $0x1e0] sm:$0xff]
        %v3149 = vld [vmem:[%s3 + $0x1e8] sm:$0xff]
        %v3150 = vld [vmem:[%s3 + $0x1f0] sm:$0xff]
        %v3151 = vld [vmem:[%s3 + $0x1f8] sm:$0xff]
        %3153 = vset.pattern.permute.xlu0 0
        %3154 = vperm.xlu0 %3153, %v3104
        %v3155 = vpop.permute.xlu0 %3154
        %3158 = vset.pattern.permute.xlu0 0
        %3159 = vperm.xlu0 %3158, %v3105
        %v3160 = vpop.permute.xlu0 %3159
        %3163 = vset.pattern.permute.xlu0 0
        %3164 = vperm.xlu0 %3163, %v3106
        %v3165 = vpop.permute.xlu0 %3164
        %3168 = vset.pattern.permute.xlu0 0
        %3169 = vperm.xlu0 %3168, %v3107
        %v3170 = vpop.permute.xlu0 %3169
        %3173 = vset.pattern.permute.xlu0 0
        %3174 = vperm.xlu0 %3173, %v3108
        %v3175 = vpop.permute.xlu0 %3174
        %3178 = vset.pattern.permute.xlu0 0
        %3179 = vperm.xlu0 %3178, %v3109
        %v3180 = vpop.permute.xlu0 %3179
        %3183 = vset.pattern.permute.xlu0 0
        %3184 = vperm.xlu0 %3183, %v3110
        %v3185 = vpop.permute.xlu0 %3184
        %3188 = vset.pattern.permute.xlu0 0
        %3189 = vperm.xlu0 %3188, %v3111
        %v3190 = vpop.permute.xlu0 %3189
        %3193 = vset.pattern.permute.xlu0 0
        %3194 = vperm.xlu0 %3193, %v3112
        %v3195 = vpop.permute.xlu0 %3194
        %3198 = vset.pattern.permute.xlu0 0
        %3199 = vperm.xlu0 %3198, %v3113
        %v3200 = vpop.permute.xlu0 %3199
        %3203 = vset.pattern.permute.xlu0 0
        %3204 = vperm.xlu0 %3203, %v3114
        %v3205 = vpop.permute.xlu0 %3204
        %3208 = vset.pattern.permute.xlu0 0
        %3209 = vperm.xlu0 %3208, %v3115
        %v3210 = vpop.permute.xlu0 %3209
        %3213 = vset.pattern.permute.xlu0 0
        %3214 = vperm.xlu0 %3213, %v3116
        %v3215 = vpop.permute.xlu0 %3214
        %3218 = vset.pattern.permute.xlu0 0
        %3219 = vperm.xlu0 %3218, %v3117
        %v3220 = vpop.permute.xlu0 %3219
        %3223 = vset.pattern.permute.xlu0 0
        %3224 = vperm.xlu0 %3223, %v3118
        %v3225 = vpop.permute.xlu0 %3224
        %3228 = vset.pattern.permute.xlu0 0
        %3229 = vperm.xlu0 %3228, %v3119
        %v3230 = vpop.permute.xlu0 %3229
        %3233 = vset.pattern.permute.xlu0 0
        %3234 = vperm.xlu0 %3233, %v3120
        %v3235 = vpop.permute.xlu0 %3234
        %3238 = vset.pattern.permute.xlu0 0
        %3239 = vperm.xlu0 %3238, %v3121
        %v3240 = vpop.permute.xlu0 %3239
        %3243 = vset.pattern.permute.xlu0 0
        %3244 = vperm.xlu0 %3243, %v3122
        %v3245 = vpop.permute.xlu0 %3244
        %3248 = vset.pattern.permute.xlu0 0
        %3249 = vperm.xlu0 %3248, %v3123
        %v3250 = vpop.permute.xlu0 %3249
        %3253 = vset.pattern.permute.xlu0 0
        %3254 = vperm.xlu0 %3253, %v3124
        %v3255 = vpop.permute.xlu0 %3254
        %3258 = vset.pattern.permute.xlu0 0
        %3259 = vperm.xlu0 %3258, %v3125
        %v3260 = vpop.permute.xlu0 %3259
        %3263 = vset.pattern.permute.xlu0 0
        %3264 = vperm.xlu0 %3263, %v3126
        %v3265 = vpop.permute.xlu0 %3264
        %3268 = vset.pattern.permute.xlu0 0
        %3269 = vperm.xlu0 %3268, %v3127
        %v3270 = vpop.permute.xlu0 %3269
        %3273 = vset.pattern.permute.xlu0 0
        %3274 = vperm.xlu0 %3273, %v3128
        %v3275 = vpop.permute.xlu0 %3274
        %3278 = vset.pattern.permute.xlu0 0
        %3279 = vperm.xlu0 %3278, %v3129
        %v3280 = vpop.permute.xlu0 %3279
        %3283 = vset.pattern.permute.xlu0 0
        %3284 = vperm.xlu0 %3283, %v3130
        %v3285 = vpop.permute.xlu0 %3284
        %3288 = vset.pattern.permute.xlu0 0
        %3289 = vperm.xlu0 %3288, %v3131
        %v3290 = vpop.permute.xlu0 %3289
        %3293 = vset.pattern.permute.xlu0 0
        %3294 = vperm.xlu0 %3293, %v3132
        %v3295 = vpop.permute.xlu0 %3294
        %3298 = vset.pattern.permute.xlu0 0
        %3299 = vperm.xlu0 %3298, %v3133
        %v3300 = vpop.permute.xlu0 %3299
        %3303 = vset.pattern.permute.xlu0 0
        %3304 = vperm.xlu0 %3303, %v3134
        %v3305 = vpop.permute.xlu0 %3304
        %3308 = vset.pattern.permute.xlu0 0
        %3309 = vperm.xlu0 %3308, %v3135
        %v3310 = vpop.permute.xlu0 %3309
        %3313 = vset.pattern.permute.xlu0 0
        %3314 = vperm.xlu0 %3313, %v3136
        %v3315 = vpop.permute.xlu0 %3314
        %3318 = vset.pattern.permute.xlu0 0
        %3319 = vperm.xlu0 %3318, %v3137
        %v3320 = vpop.permute.xlu0 %3319
        %3323 = vset.pattern.permute.xlu0 0
        %3324 = vperm.xlu0 %3323, %v3138
        %v3325 = vpop.permute.xlu0 %3324
        %3328 = vset.pattern.permute.xlu0 0
        %3329 = vperm.xlu0 %3328, %v3139
        %v3330 = vpop.permute.xlu0 %3329
        %3333 = vset.pattern.permute.xlu0 0
        %3334 = vperm.xlu0 %3333, %v3140
        %v3335 = vpop.permute.xlu0 %3334
        %3338 = vset.pattern.permute.xlu0 0
        %3339 = vperm.xlu0 %3338, %v3141
        %v3340 = vpop.permute.xlu0 %3339
        %3343 = vset.pattern.permute.xlu0 0
        %3344 = vperm.xlu0 %3343, %v3142
        %v3345 = vpop.permute.xlu0 %3344
        %3348 = vset.pattern.permute.xlu0 0
        %3349 = vperm.xlu0 %3348, %v3143
        %v3350 = vpop.permute.xlu0 %3349
        %3353 = vset.pattern.permute.xlu0 0
        %3354 = vperm.xlu0 %3353, %v3144
        %v3355 = vpop.permute.xlu0 %3354
        %3358 = vset.pattern.permute.xlu0 0
        %3359 = vperm.xlu0 %3358, %v3145
        %v3360 = vpop.permute.xlu0 %3359
        %3363 = vset.pattern.permute.xlu0 0
        %3364 = vperm.xlu0 %3363, %v3146
        %v3365 = vpop.permute.xlu0 %3364
        %3368 = vset.pattern.permute.xlu0 0
        %3369 = vperm.xlu0 %3368, %v3147
        %v3370 = vpop.permute.xlu0 %3369
        %3373 = vset.pattern.permute.xlu0 0
        %3374 = vperm.xlu0 %3373, %v3148
        %v3375 = vpop.permute.xlu0 %3374
        %3378 = vset.pattern.permute.xlu0 0
        %3379 = vperm.xlu0 %3378, %v3149
        %v3380 = vpop.permute.xlu0 %3379
        %3383 = vset.pattern.permute.xlu0 0
        %3384 = vperm.xlu0 %3383, %v3150
        %v3385 = vpop.permute.xlu0 %3384
        %3388 = vset.pattern.permute.xlu0 0
        %3389 = vperm.xlu0 %3388, %v3151
        %v3390 = vpop.permute.xlu0 %3389
        %v3440 = vunpack.c.l.b16 %v3024
        %v3441 = vunpack.c.h.b16 %v3024
        %v3442 = vunpack.c.l.b16 %v3025
        %v3443 = vunpack.c.h.b16 %v3025
        %v3444 = vunpack.c.l.b16 %v3026
        %v3445 = vunpack.c.h.b16 %v3026
        %v3446 = vunpack.c.l.b16 %v3027
        %v3447 = vunpack.c.h.b16 %v3027
        %v3448 = vunpack.c.l.b16 %v3028
        %v3449 = vunpack.c.h.b16 %v3028
        %v3450 = vunpack.c.l.b16 %v3029
        %v3451 = vunpack.c.h.b16 %v3029
        %v3452 = vunpack.c.l.b16 %v3030
        %v3453 = vunpack.c.h.b16 %v3030
        %v3454 = vunpack.c.l.b16 %v3031
        %v3455 = vunpack.c.h.b16 %v3031
        %v3456 = vunpack.c.l.b16 %v3032
        %v3457 = vunpack.c.h.b16 %v3032
        %v3458 = vunpack.c.l.b16 %v3033
        %v3459 = vunpack.c.h.b16 %v3033
        %v3460 = vunpack.c.l.b16 %v3034
        %v3461 = vunpack.c.h.b16 %v3034
        %v3462 = vunpack.c.l.b16 %v3035
        %v3463 = vunpack.c.h.b16 %v3035
        %v3464 = vunpack.c.l.b16 %v3036
        %v3465 = vunpack.c.h.b16 %v3036
        %v3466 = vunpack.c.l.b16 %v3037
        %v3467 = vunpack.c.h.b16 %v3037
        %v3468 = vunpack.c.l.b16 %v3038
        %v3469 = vunpack.c.h.b16 %v3038
        %v3470 = vunpack.c.l.b16 %v3039
        %v3471 = vunpack.c.h.b16 %v3039
        %v3472 = vunpack.c.l.b16 %v3040
        %v3473 = vunpack.c.h.b16 %v3040
        %v3474 = vunpack.c.l.b16 %v3041
        %v3475 = vunpack.c.h.b16 %v3041
        %v3476 = vunpack.c.l.b16 %v3042
        %v3477 = vunpack.c.h.b16 %v3042
        %v3478 = vunpack.c.l.b16 %v3043
        %v3479 = vunpack.c.h.b16 %v3043
        %v3480 = vunpack.c.l.b16 %v3044
        %v3481 = vunpack.c.h.b16 %v3044
        %v3482 = vunpack.c.l.b16 %v3045
        %v3483 = vunpack.c.h.b16 %v3045
        %v3484 = vunpack.c.l.b16 %v3046
        %v3485 = vunpack.c.h.b16 %v3046
        %v3486 = vunpack.c.l.b16 %v3047
        %v3487 = vunpack.c.h.b16 %v3047
        %v3488 = vunpack.c.l.b16 %v3048
        %v3489 = vunpack.c.h.b16 %v3048
        %v3490 = vunpack.c.l.b16 %v3049
        %v3491 = vunpack.c.h.b16 %v3049
        %v3492 = vunpack.c.l.b16 %v3050
        %v3493 = vunpack.c.h.b16 %v3050
        %v3494 = vunpack.c.l.b16 %v3051
        %v3495 = vunpack.c.h.b16 %v3051
        %v3496 = vunpack.c.l.b16 %v3052
        %v3497 = vunpack.c.h.b16 %v3052
        %v3498 = vunpack.c.l.b16 %v3053
        %v3499 = vunpack.c.h.b16 %v3053
        %v3500 = vunpack.c.l.b16 %v3054
        %v3501 = vunpack.c.h.b16 %v3054
        %v3502 = vunpack.c.l.b16 %v3055
        %v3503 = vunpack.c.h.b16 %v3055
        %v3504 = vunpack.c.l.b16 %v3056
        %v3505 = vunpack.c.h.b16 %v3056
        %v3506 = vunpack.c.l.b16 %v3057
        %v3507 = vunpack.c.h.b16 %v3057
        %v3508 = vunpack.c.l.b16 %v3058
        %v3509 = vunpack.c.h.b16 %v3058
        %v3510 = vunpack.c.l.b16 %v3059
        %v3511 = vunpack.c.h.b16 %v3059
        %v3512 = vunpack.c.l.b16 %v3060
        %v3513 = vunpack.c.h.b16 %v3060
        %v3514 = vunpack.c.l.b16 %v3061
        %v3515 = vunpack.c.h.b16 %v3061
        %v3516 = vunpack.c.l.b16 %v3062
        %v3517 = vunpack.c.h.b16 %v3062
        %v3518 = vunpack.c.l.b16 %v3063
        %v3519 = vunpack.c.h.b16 %v3063
        %v3520 = vunpack.c.l.b16 %v3064
        %v3521 = vunpack.c.h.b16 %v3064
        %v3522 = vunpack.c.l.b16 %v3065
        %v3523 = vunpack.c.h.b16 %v3065
        %v3524 = vunpack.c.l.b16 %v3066
        %v3525 = vunpack.c.h.b16 %v3066
        %v3526 = vunpack.c.l.b16 %v3067
        %v3527 = vunpack.c.h.b16 %v3067
        %v3528 = vunpack.c.l.b16 %v3068
        %v3529 = vunpack.c.h.b16 %v3068
        %v3530 = vunpack.c.l.b16 %v3069
        %v3531 = vunpack.c.h.b16 %v3069
        %v3532 = vunpack.c.l.b16 %v3070
        %v3533 = vunpack.c.h.b16 %v3070
        %v3534 = vunpack.c.l.b16 %v3071
        %v3535 = vunpack.c.h.b16 %v3071
        %v3536 = vpack.c.b16 %v3442, %v3440
        %v3537 = vpack.c.b16 %v3443, %v3441
        %v3538 = vpack.c.b16 %v3446, %v3444
        %v3539 = vpack.c.b16 %v3447, %v3445
        %v3540 = vpack.c.b16 %v3450, %v3448
        %v3541 = vpack.c.b16 %v3451, %v3449
        %v3542 = vpack.c.b16 %v3454, %v3452
        %v3543 = vpack.c.b16 %v3455, %v3453
        %v3544 = vpack.c.b16 %v3458, %v3456
        %v3545 = vpack.c.b16 %v3459, %v3457
        %v3546 = vpack.c.b16 %v3462, %v3460
        %v3547 = vpack.c.b16 %v3463, %v3461
        %v3548 = vpack.c.b16 %v3466, %v3464
        %v3549 = vpack.c.b16 %v3467, %v3465
        %v3550 = vpack.c.b16 %v3470, %v3468
        %v3551 = vpack.c.b16 %v3471, %v3469
        %v3552 = vpack.c.b16 %v3474, %v3472
        %v3553 = vpack.c.b16 %v3475, %v3473
        %v3554 = vpack.c.b16 %v3478, %v3476
        %v3555 = vpack.c.b16 %v3479, %v3477
        %v3556 = vpack.c.b16 %v3482, %v3480
        %v3557 = vpack.c.b16 %v3483, %v3481
        %v3558 = vpack.c.b16 %v3486, %v3484
        %v3559 = vpack.c.b16 %v3487, %v3485
        %v3560 = vpack.c.b16 %v3490, %v3488
        %v3561 = vpack.c.b16 %v3491, %v3489
        %v3562 = vpack.c.b16 %v3494, %v3492
        %v3563 = vpack.c.b16 %v3495, %v3493
        %v3564 = vpack.c.b16 %v3498, %v3496
        %v3565 = vpack.c.b16 %v3499, %v3497
        %v3566 = vpack.c.b16 %v3502, %v3500
        %v3567 = vpack.c.b16 %v3503, %v3501
        %v3568 = vpack.c.b16 %v3506, %v3504
        %v3569 = vpack.c.b16 %v3507, %v3505
        %v3570 = vpack.c.b16 %v3510, %v3508
        %v3571 = vpack.c.b16 %v3511, %v3509
        %v3572 = vpack.c.b16 %v3514, %v3512
        %v3573 = vpack.c.b16 %v3515, %v3513
        %v3574 = vpack.c.b16 %v3518, %v3516
        %v3575 = vpack.c.b16 %v3519, %v3517
        %v3576 = vpack.c.b16 %v3522, %v3520
        %v3577 = vpack.c.b16 %v3523, %v3521
        %v3578 = vpack.c.b16 %v3526, %v3524
        %v3579 = vpack.c.b16 %v3527, %v3525
        %v3580 = vpack.c.b16 %v3530, %v3528
        %v3581 = vpack.c.b16 %v3531, %v3529
        %v3582 = vpack.c.b16 %v3534, %v3532
        %v3583 = vpack.c.b16 %v3535, %v3533
        %3632 = vmatprep.subr.bf16.mxu0 %v3073
        %3633 = vmatpush1.bf16.msra.mxu0 %v3072
        %3634 = vmatprep.subr.bf16.mxu0 %v3075
        %3635 = vmatpush1.bf16.msra.mxu0 %v3074
        %3636 = vmatprep.subr.bf16.mxu0 %v3077
        %3637 = vmatpush1.bf16.msra.mxu0 %v3076
        %3638 = vmatprep.subr.bf16.mxu0 %v3079
        %3639 = vmatpush1.bf16.msra.mxu0 %v3078
        %3640 = vmatprep.subr.bf16.mxu0 %v3081
        %3641 = vmatpush1.bf16.msra.mxu0 %v3080
        %3642 = vmatprep.subr.bf16.mxu0 %v3083
        %3643 = vmatpush1.bf16.msra.mxu0 %v3082
        %3644 = vmatprep.subr.bf16.mxu0 %v3085
        %3645 = vmatpush1.bf16.msra.mxu0 %v3084
        %3646 = vmatprep.subr.bf16.mxu0 %v3087
        %3647 = vmatpush1.bf16.msra.mxu0 %v3086
        %3648 = vmatprep.subr.bf16.mxu0 %v3089
        %3649 = vmatpush1.bf16.msra.mxu0 %v3088
        %3650 = vmatprep.subr.bf16.mxu0 %v3091
        %3651 = vmatpush1.bf16.msra.mxu0 %v3090
        %3652 = vmatprep.subr.bf16.mxu0 %v3093
        %3653 = vmatpush1.bf16.msra.mxu0 %v3092
        %3654 = vmatprep.subr.bf16.mxu0 %v3095
        %3655 = vmatpush1.bf16.msra.mxu0 %v3094
        %3656 = vmatprep.subr.bf16.mxu0 %v3097
        %3657 = vmatpush1.bf16.msra.mxu0 %v3096
        %3658 = vmatprep.subr.bf16.mxu0 %v3099
        %3659 = vmatpush1.bf16.msra.mxu0 %v3098
        %3660 = vmatprep.subr.bf16.mxu0 %v3101
        %3661 = vmatpush1.bf16.msra.mxu0 %v3100
        %3662 = vmatprep.subr.bf16.mxu0 %v3103
        %3663 = vmatpush1.bf16.msra.mxu0 %v3102
        %3664 = vmatprep.mubr.bf16.mxu0 %v3537
        %3665 = vmatmul.mubr.bf16.gmra.mrb[0].mxu0 %v3536
        %v3666 = vpop.f32.mrb[0].mxu0
        %v3667 = vadd.f32 %v3155, %v3666
        %v3668 = vpop.f32.mrb[0].mxu0
        %v3669 = vadd.f32 %v3155, %v3668
        %v3670 = vpop.f32.mrb[0].mxu0
        %v3671 = vadd.f32 %v3160, %v3670
        %v3672 = vpop.f32.mrb[0].mxu0
        %v3673 = vadd.f32 %v3160, %v3672
        %3674 = vmatprep.mubr.bf16.mxu0 %v3539
        %3675 = vmatmul.mubr.bf16.gmra.mrb[0].mxu0 %v3538
        %v3676 = vpop.f32.mrb[0].mxu0
        %v3677 = vadd.f32 %v3165, %v3676
        %v3678 = vpop.f32.mrb[0].mxu0
        %v3679 = vadd.f32 %v3165, %v3678
        %v3680 = vpop.f32.mrb[0].mxu0
        %v3681 = vadd.f32 %v3170, %v3680
        %v3682 = vpop.f32.mrb[0].mxu0
        %v3683 = vadd.f32 %v3170, %v3682
        %3684 = vmatprep.mubr.bf16.mxu0 %v3541
        %3685 = vmatmul.mubr.bf16.gmra.mrb[0].mxu0 %v3540
        %v3686 = vpop.f32.mrb[0].mxu0
        %v3687 = vadd.f32 %v3175, %v3686
        %v3688 = vpop.f32.mrb[0].mxu0
        %v3689 = vadd.f32 %v3175, %v3688
        %v3690 = vpop.f32.mrb[0].mxu0
        %v3691 = vadd.f32 %v3180, %v3690
        %v3692 = vpop.f32.mrb[0].mxu0
        %v3693 = vadd.f32 %v3180, %v3692
        %3694 = vmatprep.mubr.bf16.mxu0 %v3543
        %3695 = vmatmul.mubr.bf16.gmra.mrb[0].mxu0 %v3542
        %v3696 = vpop.f32.mrb[0].mxu0
        %v3697 = vadd.f32 %v3185, %v3696
        %v3698 = vpop.f32.mrb[0].mxu0
        %v3699 = vadd.f32 %v3185, %v3698
        %v3700 = vpop.f32.mrb[0].mxu0
        %v3701 = vadd.f32 %v3190, %v3700
        %v3702 = vpop.f32.mrb[0].mxu0
        %v3703 = vadd.f32 %v3190, %v3702
        %3704 = vmatprep.mubr.bf16.mxu0 %v3545
        %3705 = vmatmul.mubr.bf16.gmra.mrb[0].mxu0 %v3544
        %v3706 = vpop.f32.mrb[0].mxu0
        %v3707 = vadd.f32 %v3195, %v3706
        %v3708 = vpop.f32.mrb[0].mxu0
        %v3709 = vadd.f32 %v3195, %v3708
        %v3710 = vpop.f32.mrb[0].mxu0
        %v3711 = vadd.f32 %v3200, %v3710
        %v3712 = vpop.f32.mrb[0].mxu0
        %v3713 = vadd.f32 %v3200, %v3712
        %3714 = vmatprep.mubr.bf16.mxu0 %v3547
        %3715 = vmatmul.mubr.bf16.gmra.mrb[0].mxu0 %v3546
        %v3716 = vpop.f32.mrb[0].mxu0
        %v3717 = vadd.f32 %v3205, %v3716
        %v3718 = vpop.f32.mrb[0].mxu0
        %v3719 = vadd.f32 %v3205, %v3718
        %v3720 = vpop.f32.mrb[0].mxu0
        %v3721 = vadd.f32 %v3210, %v3720
        %v3722 = vpop.f32.mrb[0].mxu0
        %v3723 = vadd.f32 %v3210, %v3722
        %3724 = vmatprep.mubr.bf16.mxu0 %v3549
        %3725 = vmatmul.mubr.bf16.gmra.mrb[0].mxu0 %v3548
        %v3726 = vpop.f32.mrb[0].mxu0
        %v3727 = vadd.f32 %v3215, %v3726
        %v3728 = vpop.f32.mrb[0].mxu0
        %v3729 = vadd.f32 %v3215, %v3728
        %v3730 = vpop.f32.mrb[0].mxu0
        %v3731 = vadd.f32 %v3220, %v3730
        %v3732 = vpop.f32.mrb[0].mxu0
        %v3733 = vadd.f32 %v3220, %v3732
        %3734 = vmatprep.mubr.bf16.mxu0 %v3551
        %3735 = vmatmul.mubr.bf16.gmra.mrb[0].mxu0 %v3550
        %v3736 = vpop.f32.mrb[0].mxu0
        %v3737 = vadd.f32 %v3225, %v3736
        %v3738 = vpop.f32.mrb[0].mxu0
        %v3739 = vadd.f32 %v3225, %v3738
        %v3740 = vpop.f32.mrb[0].mxu0
        %v3741 = vadd.f32 %v3230, %v3740
        %v3742 = vpop.f32.mrb[0].mxu0
        %v3743 = vadd.f32 %v3230, %v3742
        %3744 = vmatprep.mubr.bf16.mxu0 %v3553
        %3745 = vmatmul.mubr.bf16.gmra.mrb[0].mxu0 %v3552
        %v3746 = vpop.f32.mrb[0].mxu0
        %v3747 = vadd.f32 %v3235, %v3746
        %v3748 = vpop.f32.mrb[0].mxu0
        %v3749 = vadd.f32 %v3235, %v3748
        %v3750 = vpop.f32.mrb[0].mxu0
        %v3751 = vadd.f32 %v3240, %v3750
        %v3752 = vpop.f32.mrb[0].mxu0
        %v3753 = vadd.f32 %v3240, %v3752
        %3754 = vmatprep.mubr.bf16.mxu0 %v3555
        %3755 = vmatmul.mubr.bf16.gmra.mrb[0].mxu0 %v3554
        %v3756 = vpop.f32.mrb[0].mxu0
        %v3757 = vadd.f32 %v3245, %v3756
        %v3758 = vpop.f32.mrb[0].mxu0
        %v3759 = vadd.f32 %v3245, %v3758
        %v3760 = vpop.f32.mrb[0].mxu0
        %v3761 = vadd.f32 %v3250, %v3760
        %v3762 = vpop.f32.mrb[0].mxu0
        %v3763 = vadd.f32 %v3250, %v3762
        %3764 = vmatprep.mubr.bf16.mxu0 %v3557
        %3765 = vmatmul.mubr.bf16.gmra.mrb[0].mxu0 %v3556
        %v3766 = vpop.f32.mrb[0].mxu0
        %v3767 = vadd.f32 %v3255, %v3766
        %v3768 = vpop.f32.mrb[0].mxu0
        %v3769 = vadd.f32 %v3255, %v3768
        %v3770 = vpop.f32.mrb[0].mxu0
        %v3771 = vadd.f32 %v3260, %v3770
        %v3772 = vpop.f32.mrb[0].mxu0
        %v3773 = vadd.f32 %v3260, %v3772
        %3774 = vmatprep.mubr.bf16.mxu0 %v3559
        %3775 = vmatmul.mubr.bf16.gmra.mrb[0].mxu0 %v3558
        %v3776 = vpop.f32.mrb[0].mxu0
        %v3777 = vadd.f32 %v3265, %v3776
        %v3778 = vpop.f32.mrb[0].mxu0
        %v3779 = vadd.f32 %v3265, %v3778
        %v3780 = vpop.f32.mrb[0].mxu0
        %v3781 = vadd.f32 %v3270, %v3780
        %v3782 = vpop.f32.mrb[0].mxu0
        %v3783 = vadd.f32 %v3270, %v3782
        %3784 = vmatprep.mubr.bf16.mxu0 %v3561
        %3785 = vmatmul.mubr.bf16.gmra.mrb[0].mxu0 %v3560
        %v3786 = vpop.f32.mrb[0].mxu0
        %v3787 = vadd.f32 %v3275, %v3786
        %v3788 = vpop.f32.mrb[0].mxu0
        %v3789 = vadd.f32 %v3275, %v3788
        %v3790 = vpop.f32.mrb[0].mxu0
        %v3791 = vadd.f32 %v3280, %v3790
        %v3792 = vpop.f32.mrb[0].mxu0
        %v3793 = vadd.f32 %v3280, %v3792
        %3794 = vmatprep.mubr.bf16.mxu0 %v3563
        %3795 = vmatmul.mubr.bf16.gmra.mrb[0].mxu0 %v3562
        %v3796 = vpop.f32.mrb[0].mxu0
        %v3797 = vadd.f32 %v3285, %v3796
        %v3798 = vpop.f32.mrb[0].mxu0
        %v3799 = vadd.f32 %v3285, %v3798
        %v3800 = vpop.f32.mrb[0].mxu0
        %v3801 = vadd.f32 %v3290, %v3800
        %v3802 = vpop.f32.mrb[0].mxu0
        %v3803 = vadd.f32 %v3290, %v3802
        %3804 = vmatprep.mubr.bf16.mxu0 %v3565
        %3805 = vmatmul.mubr.bf16.gmra.mrb[0].mxu0 %v3564
        %v3806 = vpop.f32.mrb[0].mxu0
        %v3807 = vadd.f32 %v3295, %v3806
        %v3808 = vpop.f32.mrb[0].mxu0
        %v3809 = vadd.f32 %v3295, %v3808
        %v3810 = vpop.f32.mrb[0].mxu0
        %v3811 = vadd.f32 %v3300, %v3810
        %v3812 = vpop.f32.mrb[0].mxu0
        %v3813 = vadd.f32 %v3300, %v3812
        %3814 = vmatprep.mubr.bf16.mxu0 %v3567
        %3815 = vmatmul.mubr.bf16.gmra.mrb[0].mxu0 %v3566
        %v3816 = vpop.f32.mrb[0].mxu0
        %v3817 = vadd.f32 %v3305, %v3816
        %v3818 = vpop.f32.mrb[0].mxu0
        %v3819 = vadd.f32 %v3305, %v3818
        %v3820 = vpop.f32.mrb[0].mxu0
        %v3821 = vadd.f32 %v3310, %v3820
        %v3822 = vpop.f32.mrb[0].mxu0
        %v3823 = vadd.f32 %v3310, %v3822
        %3824 = vmatprep.mubr.bf16.mxu0 %v3569
        %3825 = vmatmul.mubr.bf16.gmra.mrb[0].mxu0 %v3568
        %v3826 = vpop.f32.mrb[0].mxu0
        %v3827 = vadd.f32 %v3315, %v3826
        %v3828 = vpop.f32.mrb[0].mxu0
        %v3829 = vadd.f32 %v3315, %v3828
        %v3830 = vpop.f32.mrb[0].mxu0
        %v3831 = vadd.f32 %v3320, %v3830
        %v3832 = vpop.f32.mrb[0].mxu0
        %v3833 = vadd.f32 %v3320, %v3832
        %3834 = vmatprep.mubr.bf16.mxu0 %v3571
        %3835 = vmatmul.mubr.bf16.gmra.mrb[0].mxu0 %v3570
        %v3836 = vpop.f32.mrb[0].mxu0
        %v3837 = vadd.f32 %v3325, %v3836
        %v3838 = vpop.f32.mrb[0].mxu0
        %v3839 = vadd.f32 %v3325, %v3838
        %v3840 = vpop.f32.mrb[0].mxu0
        %v3841 = vadd.f32 %v3330, %v3840
        %v3842 = vpop.f32.mrb[0].mxu0
        %v3843 = vadd.f32 %v3330, %v3842
        %3844 = vmatprep.mubr.bf16.mxu0 %v3573
        %3845 = vmatmul.mubr.bf16.gmra.mrb[0].mxu0 %v3572
        %v3846 = vpop.f32.mrb[0].mxu0
        %v3847 = vadd.f32 %v3335, %v3846
        %v3848 = vpop.f32.mrb[0].mxu0
        %v3849 = vadd.f32 %v3335, %v3848
        %v3850 = vpop.f32.mrb[0].mxu0
        %v3851 = vadd.f32 %v3340, %v3850
        %v3852 = vpop.f32.mrb[0].mxu0
        %v3853 = vadd.f32 %v3340, %v3852
        %3854 = vmatprep.mubr.bf16.mxu0 %v3575
        %3855 = vmatmul.mubr.bf16.gmra.mrb[0].mxu0 %v3574
        %v3856 = vpop.f32.mrb[0].mxu0
        %v3857 = vadd.f32 %v3345, %v3856
        %v3858 = vpop.f32.mrb[0].mxu0
        %v3859 = vadd.f32 %v3345, %v3858
        %v3860 = vpop.f32.mrb[0].mxu0
        %v3861 = vadd.f32 %v3350, %v3860
        %v3862 = vpop.f32.mrb[0].mxu0
        %v3863 = vadd.f32 %v3350, %v3862
        %3864 = vmatprep.mubr.bf16.mxu0 %v3577
        %3865 = vmatmul.mubr.bf16.gmra.mrb[0].mxu0 %v3576
        %v3866 = vpop.f32.mrb[0].mxu0
        %v3867 = vadd.f32 %v3355, %v3866
        %v3868 = vpop.f32.mrb[0].mxu0
        %v3869 = vadd.f32 %v3355, %v3868
        %v3870 = vpop.f32.mrb[0].mxu0
        %v3871 = vadd.f32 %v3360, %v3870
        %v3872 = vpop.f32.mrb[0].mxu0
        %v3873 = vadd.f32 %v3360, %v3872
        %3874 = vmatprep.mubr.bf16.mxu0 %v3579
        %3875 = vmatmul.mubr.bf16.gmra.mrb[0].mxu0 %v3578
        %v3876 = vpop.f32.mrb[0].mxu0
        %v3877 = vadd.f32 %v3365, %v3876
        %v3878 = vpop.f32.mrb[0].mxu0
        %v3879 = vadd.f32 %v3365, %v3878
        %v3880 = vpop.f32.mrb[0].mxu0
        %v3881 = vadd.f32 %v3370, %v3880
        %v3882 = vpop.f32.mrb[0].mxu0
        %v3883 = vadd.f32 %v3370, %v3882
        %3884 = vmatprep.mubr.bf16.mxu0 %v3581
        %3885 = vmatmul.mubr.bf16.gmra.mrb[0].mxu0 %v3580
        %v3886 = vpop.f32.mrb[0].mxu0
        %v3887 = vadd.f32 %v3375, %v3886
        %v3888 = vpop.f32.mrb[0].mxu0
        %v3889 = vadd.f32 %v3375, %v3888
        %v3890 = vpop.f32.mrb[0].mxu0
        %v3891 = vadd.f32 %v3380, %v3890
        %v3892 = vpop.f32.mrb[0].mxu0
        %v3893 = vadd.f32 %v3380, %v3892
        %3894 = vmatprep.mubr.bf16.mxu0 %v3583
        %3895 = vmatmul.mubr.bf16.gmra.mrb[0].mxu0 %v3582
        %v3896 = vpop.f32.mrb[0].mxu0
        %v3897 = vadd.f32 %v3385, %v3896
        %v3898 = vpop.f32.mrb[0].mxu0
        %v3899 = vadd.f32 %v3385, %v3898
        %v3900 = vpop.f32.mrb[0].mxu0
        %v3901 = vadd.f32 %v3390, %v3900
        %v3902 = vpop.f32.mrb[0].mxu0
        %v3903 = vadd.f32 %v3390, %v3902
        %3904 = vdwg.mxu0
        %v3905 = vpack.c.bf16 %v3671, %v3667
        %v3906 = vpack.c.bf16 %v3673, %v3669
        %v3907 = vpack.c.bf16 %v3681, %v3677
        %v3908 = vpack.c.bf16 %v3683, %v3679
        %v3909 = vpack.c.bf16 %v3691, %v3687
        %v3910 = vpack.c.bf16 %v3693, %v3689
        %v3911 = vpack.c.bf16 %v3701, %v3697
        %v3912 = vpack.c.bf16 %v3703, %v3699
        %v3913 = vpack.c.bf16 %v3711, %v3707
        %v3914 = vpack.c.bf16 %v3713, %v3709
        %v3915 = vpack.c.bf16 %v3721, %v3717
        %v3916 = vpack.c.bf16 %v3723, %v3719
        %v3917 = vpack.c.bf16 %v3731, %v3727
        %v3918 = vpack.c.bf16 %v3733, %v3729
        %v3919 = vpack.c.bf16 %v3741, %v3737
        %v3920 = vpack.c.bf16 %v3743, %v3739
        %v3921 = vpack.c.bf16 %v3751, %v3747
        %v3922 = vpack.c.bf16 %v3753, %v3749
        %v3923 = vpack.c.bf16 %v3761, %v3757
        %v3924 = vpack.c.bf16 %v3763, %v3759
        %v3925 = vpack.c.bf16 %v3771, %v3767
        %v3926 = vpack.c.bf16 %v3773, %v3769
        %v3927 = vpack.c.bf16 %v3781, %v3777
        %v3928 = vpack.c.bf16 %v3783, %v3779
        %v3929 = vpack.c.bf16 %v3791, %v3787
        %v3930 = vpack.c.bf16 %v3793, %v3789
        %v3931 = vpack.c.bf16 %v3801, %v3797
        %v3932 = vpack.c.bf16 %v3803, %v3799
        %v3933 = vpack.c.bf16 %v3811, %v3807
        %v3934 = vpack.c.bf16 %v3813, %v3809
        %v3935 = vpack.c.bf16 %v3821, %v3817
        %v3936 = vpack.c.bf16 %v3823, %v3819
        %v3937 = vpack.c.bf16 %v3831, %v3827
        %v3938 = vpack.c.bf16 %v3833, %v3829
        %v3939 = vpack.c.bf16 %v3841, %v3837
        %v3940 = vpack.c.bf16 %v3843, %v3839
        %v3941 = vpack.c.bf16 %v3851, %v3847
        %v3942 = vpack.c.bf16 %v3853, %v3849
        %v3943 = vpack.c.bf16 %v3861, %v3857
        %v3944 = vpack.c.bf16 %v3863, %v3859
        %v3945 = vpack.c.bf16 %v3871, %v3867
        %v3946 = vpack.c.bf16 %v3873, %v3869
        %v3947 = vpack.c.bf16 %v3881, %v3877
        %v3948 = vpack.c.bf16 %v3883, %v3879
        %v3949 = vpack.c.bf16 %v3891, %v3887
        %v3950 = vpack.c.bf16 %v3893, %v3889
        %v3951 = vpack.c.bf16 %v3901, %v3897
        %v3952 = vpack.c.bf16 %v3903, %v3899
        %3953 = vst [vmem:[#allocation4] sm:$0xff] %v3905
        %3954 = vst [vmem:[#allocation4 + $0x8] sm:$0xff] %v3906
        %3955 = vst [vmem:[#allocation4 + $0x10] sm:$0xff] %v3907
        %3956 = vst [vmem:[#allocation4 + $0x18] sm:$0xff] %v3908
        %3957 = vst [vmem:[#allocation4 + $0x20] sm:$0xff] %v3909
        %3958 = vst [vmem:[#allocation4 + $0x28] sm:$0xff] %v3910
        %3959 = vst [vmem:[#allocation4 + $0x30] sm:$0xff] %v3911
        %3960 = vst [vmem:[#allocation4 + $0x38] sm:$0xff] %v3912
        %3961 = vst [vmem:[#allocation4 + $0x40] sm:$0xff] %v3913
        %3962 = vst [vmem:[#allocation4 + $0x48] sm:$0xff] %v3914
        %3963 = vst [vmem:[#allocation4 + $0x50] sm:$0xff] %v3915
        %3964 = vst [vmem:[#allocation4 + $0x58] sm:$0xff] %v3916
        %3965 = vst [vmem:[#allocation4 + $0x60] sm:$0xff] %v3917
        %3966 = vst [vmem:[#allocation4 + $0x68] sm:$0xff] %v3918
        %3967 = vst [vmem:[#allocation4 + $0x70] sm:$0xff] %v3919
        %3968 = vst [vmem:[#allocation4 + $0x78] sm:$0xff] %v3920
        %3969 = vst [vmem:[#allocation4 + $0x80] sm:$0xff] %v3921
        %3970 = vst [vmem:[#allocation4 + $0x88] sm:$0xff] %v3922
        %3971 = vst [vmem:[#allocation4 + $0x90] sm:$0xff] %v3923
        %3972 = vst [vmem:[#allocation4 + $0x98] sm:$0xff] %v3924
        %3973 = vst [vmem:[#allocation4 + $0xa0] sm:$0xff] %v3925
        %3974 = vst [vmem:[#allocation4 + $0xa8] sm:$0xff] %v3926
        %3975 = vst [vmem:[#allocation4 + $0xb0] sm:$0xff] %v3927
        %3976 = vst [vmem:[#allocation4 + $0xb8] sm:$0xff] %v3928
        %3977 = vst [vmem:[#allocation4 + $0xc0] sm:$0xff] %v3929
        %3978 = vst [vmem:[#allocation4 + $0xc8] sm:$0xff] %v3930
        %3979 = vst [vmem:[#allocation4 + $0xd0] sm:$0xff] %v3931
        %3980 = vst [vmem:[#allocation4 + $0xd8] sm:$0xff] %v3932
        %3981 = vst [vmem:[#allocation4 + $0xe0] sm:$0xff] %v3933
        %3982 = vst [vmem:[#allocation4 + $0xe8] sm:$0xff] %v3934
        %3983 = vst [vmem:[#allocation4 + $0xf0] sm:$0xff] %v3935
        %3984 = vst [vmem:[#allocation4 + $0xf8] sm:$0xff] %v3936
        %3985 = vst [vmem:[#allocation4 + $0x100] sm:$0xff] %v3937
        %3986 = vst [vmem:[#allocation4 + $0x108] sm:$0xff] %v3938
        %3987 = vst [vmem:[#allocation4 + $0x110] sm:$0xff] %v3939
        %3988 = vst [vmem:[#allocation4 + $0x118] sm:$0xff] %v3940
        %3989 = vst [vmem:[#allocation4 + $0x120] sm:$0xff] %v3941
        %3990 = vst [vmem:[#allocation4 + $0x128] sm:$0xff] %v3942
        %3991 = vst [vmem:[#allocation4 + $0x130] sm:$0xff] %v3943
        %3992 = vst [vmem:[#allocation4 + $0x138] sm:$0xff] %v3944
        %3993 = vst [vmem:[#allocation4 + $0x140] sm:$0xff] %v3945
        %3994 = vst [vmem:[#allocation4 + $0x148] sm:$0xff] %v3946
        %3995 = vst [vmem:[#allocation4 + $0x150] sm:$0xff] %v3947
        %3996 = vst [vmem:[#allocation4 + $0x158] sm:$0xff] %v3948
        %3997 = vst [vmem:[#allocation4 + $0x160] sm:$0xff] %v3949
        %3998 = vst [vmem:[#allocation4 + $0x168] sm:$0xff] %v3950
        %3999 = vst [vmem:[#allocation4 + $0x170] sm:$0xff] %v3951
        %4000 = vst [vmem:[#allocation4 + $0x178] sm:$0xff] %v3952
        %v4001 = vld [vmem:[%s2] sm:$0xff]
        %v4002 = vld [vmem:[%s2 + $0x8] sm:$0xff]
        %v4003 = vld [vmem:[%s2 + $0x10] sm:$0xff]
        %v4004 = vld [vmem:[%s2 + $0x18] sm:$0xff]
        %v4005 = vld [vmem:[%s2 + $0x20] sm:$0xff]
        %v4006 = vld [vmem:[%s2 + $0x28] sm:$0xff]
        %v4007 = vld [vmem:[%s2 + $0x30] sm:$0xff]
        %v4008 = vld [vmem:[%s2 + $0x38] sm:$0xff]
        %v4009 = vld [vmem:[%s2 + $0x40] sm:$0xff]
        %v4010 = vld [vmem:[%s2 + $0x48] sm:$0xff]
        %v4011 = vld [vmem:[%s2 + $0x50] sm:$0xff]
        %v4012 = vld [vmem:[%s2 + $0x58] sm:$0xff]
        %v4013 = vld [vmem:[%s2 + $0x60] sm:$0xff]
        %v4014 = vld [vmem:[%s2 + $0x68] sm:$0xff]
        %v4015 = vld [vmem:[%s2 + $0x70] sm:$0xff]
        %v4016 = vld [vmem:[%s2 + $0x78] sm:$0xff]
        %v4017 = vld [vmem:[%s3] sm:$0xff]
        %v4018 = vld [vmem:[%s3 + $0x8] sm:$0xff]
        %v4019 = vld [vmem:[%s3 + $0x10] sm:$0xff]
        %v4020 = vld [vmem:[%s3 + $0x18] sm:$0xff]
        %v4021 = vld [vmem:[%s3 + $0x20] sm:$0xff]
        %v4022 = vld [vmem:[%s3 + $0x28] sm:$0xff]
        %v4023 = vld [vmem:[%s3 + $0x30] sm:$0xff]
        %v4024 = vld [vmem:[%s3 + $0x38] sm:$0xff]
        %v4025 = vld [vmem:[%s3 + $0x40] sm:$0xff]
        %v4026 = vld [vmem:[%s3 + $0x48] sm:$0xff]
        %v4027 = vld [vmem:[%s3 + $0x50] sm:$0xff]
        %v4028 = vld [vmem:[%s3 + $0x58] sm:$0xff]
        %v4029 = vld [vmem:[%s3 + $0x60] sm:$0xff]
        %v4030 = vld [vmem:[%s3 + $0x68] sm:$0xff]
        %v4031 = vld [vmem:[%s3 + $0x70] sm:$0xff]
        %v4032 = vld [vmem:[%s3 + $0x78] sm:$0xff]
        %4034 = vset.pattern.permute.xlu0 0
        %4035 = vperm.xlu0 %4034, %v4017
        %v4036 = vpop.permute.xlu0 %4035
        %4039 = vset.pattern.permute.xlu0 0
        %4040 = vperm.xlu0 %4039, %v4018
        %v4041 = vpop.permute.xlu0 %4040
        %4044 = vset.pattern.permute.xlu0 0
        %4045 = vperm.xlu0 %4044, %v4019
        %v4046 = vpop.permute.xlu0 %4045
        %4049 = vset.pattern.permute.xlu0 0
        %4050 = vperm.xlu0 %4049, %v4020
        %v4051 = vpop.permute.xlu0 %4050
        %4054 = vset.pattern.permute.xlu0 0
        %4055 = vperm.xlu0 %4054, %v4021
        %v4056 = vpop.permute.xlu0 %4055
        %4059 = vset.pattern.permute.xlu0 0
        %4060 = vperm.xlu0 %4059, %v4022
        %v4061 = vpop.permute.xlu0 %4060
        %4064 = vset.pattern.permute.xlu0 0
        %4065 = vperm.xlu0 %4064, %v4023
        %v4066 = vpop.permute.xlu0 %4065
        %4069 = vset.pattern.permute.xlu0 0
        %4070 = vperm.xlu0 %4069, %v4024
        %v4071 = vpop.permute.xlu0 %4070
        %4074 = vset.pattern.permute.xlu0 0
        %4075 = vperm.xlu0 %4074, %v4025
        %v4076 = vpop.permute.xlu0 %4075
        %4079 = vset.pattern.permute.xlu0 0
        %4080 = vperm.xlu0 %4079, %v4026
        %v4081 = vpop.permute.xlu0 %4080
        %4084 = vset.pattern.permute.xlu0 0
        %4085 = vperm.xlu0 %4084, %v4027
        %v4086 = vpop.permute.xlu0 %4085
        %4089 = vset.pattern.permute.xlu0 0
        %4090 = vperm.xlu0 %4089, %v4028
        %v4091 = vpop.permute.xlu0 %4090
        %4094 = vset.pattern.permute.xlu0 0
        %4095 = vperm.xlu0 %4094, %v4029
        %v4096 = vpop.permute.xlu0 %4095
        %4099 = vset.pattern.permute.xlu0 0
        %4100 = vperm.xlu0 %4099, %v4030
        %v4101 = vpop.permute.xlu0 %4100
        %4104 = vset.pattern.permute.xlu0 0
        %4105 = vperm.xlu0 %4104, %v4031
        %v4106 = vpop.permute.xlu0 %4105
        %4109 = vset.pattern.permute.xlu0 0
        %4110 = vperm.xlu0 %4109, %v4032
        %v4111 = vpop.permute.xlu0 %4110
        %v4113 = vld [vmem:[%s4] sm:$0xff]
        %v4114 = vld [vmem:[%s4 + $0x8] sm:$0xff]
        %v4115 = vld [vmem:[%s4 + $0x10] sm:$0xff]
        %v4116 = vld [vmem:[%s4 + $0x18] sm:$0xff]
        %v4117 = vld [vmem:[%s4 + $0x20] sm:$0xff]
        %v4118 = vld [vmem:[%s4 + $0x28] sm:$0xff]
        %v4119 = vld [vmem:[%s4 + $0x30] sm:$0xff]
        %v4120 = vld [vmem:[%s4 + $0x38] sm:$0xff]
        %v4121 = vld [vmem:[%s4 + $0x40] sm:$0xff]
        %v4122 = vld [vmem:[%s4 + $0x48] sm:$0xff]
        %v4123 = vld [vmem:[%s4 + $0x50] sm:$0xff]
        %v4124 = vld [vmem:[%s4 + $0x58] sm:$0xff]
        %v4125 = vld [vmem:[%s4 + $0x60] sm:$0xff]
        %v4126 = vld [vmem:[%s4 + $0x68] sm:$0xff]
        %v4127 = vld [vmem:[%s4 + $0x70] sm:$0xff]
        %v4128 = vld [vmem:[%s4 + $0x78] sm:$0xff]
        %v4129 = vld [vmem:[%s4 + $0x80] sm:$0xff]
        %v4130 = vld [vmem:[%s4 + $0x88] sm:$0xff]
        %v4131 = vld [vmem:[%s4 + $0x90] sm:$0xff]
        %v4132 = vld [vmem:[%s4 + $0x98] sm:$0xff]
        %v4133 = vld [vmem:[%s4 + $0xa0] sm:$0xff]
        %v4134 = vld [vmem:[%s4 + $0xa8] sm:$0xff]
        %v4135 = vld [vmem:[%s4 + $0xb0] sm:$0xff]
        %v4136 = vld [vmem:[%s4 + $0xb8] sm:$0xff]
        %v4137 = vld [vmem:[%s4 + $0xc0] sm:$0xff]
        %v4138 = vld [vmem:[%s4 + $0xc8] sm:$0xff]
        %v4139 = vld [vmem:[%s4 + $0xd0] sm:$0xff]
        %v4140 = vld [vmem:[%s4 + $0xd8] sm:$0xff]
        %v4141 = vld [vmem:[%s4 + $0xe0] sm:$0xff]
        %v4142 = vld [vmem:[%s4 + $0xe8] sm:$0xff]
        %v4143 = vld [vmem:[%s4 + $0xf0] sm:$0xff]
        %v4144 = vld [vmem:[%s4 + $0xf8] sm:$0xff]
        %v4145 = vld [vmem:[%s4 + $0x100] sm:$0xff]
        %v4146 = vld [vmem:[%s4 + $0x108] sm:$0xff]
        %v4147 = vld [vmem:[%s4 + $0x110] sm:$0xff]
        %v4148 = vld [vmem:[%s4 + $0x118] sm:$0xff]
        %v4149 = vld [vmem:[%s4 + $0x120] sm:$0xff]
        %v4150 = vld [vmem:[%s4 + $0x128] sm:$0xff]
        %v4151 = vld [vmem:[%s4 + $0x130] sm:$0xff]
        %v4152 = vld [vmem:[%s4 + $0x138] sm:$0xff]
        %v4153 = vld [vmem:[%s4 + $0x140] sm:$0xff]
        %v4154 = vld [vmem:[%s4 + $0x148] sm:$0xff]
        %v4155 = vld [vmem:[%s4 + $0x150] sm:$0xff]
        %v4156 = vld [vmem:[%s4 + $0x158] sm:$0xff]
        %v4157 = vld [vmem:[%s4 + $0x160] sm:$0xff]
        %v4158 = vld [vmem:[%s4 + $0x168] sm:$0xff]
        %v4159 = vld [vmem:[%s4 + $0x170] sm:$0xff]
        %v4160 = vld [vmem:[%s4 + $0x178] sm:$0xff]
        %v4161 = vld [vmem:[%s4 + $0x180] sm:$0xff]
        %v4162 = vld [vmem:[%s4 + $0x188] sm:$0xff]
        %v4163 = vld [vmem:[%s4 + $0x190] sm:$0xff]
        %v4164 = vld [vmem:[%s4 + $0x198] sm:$0xff]
        %v4165 = vld [vmem:[%s4 + $0x1a0] sm:$0xff]
        %v4166 = vld [vmem:[%s4 + $0x1a8] sm:$0xff]
        %v4167 = vld [vmem:[%s4 + $0x1b0] sm:$0xff]
        %v4168 = vld [vmem:[%s4 + $0x1b8] sm:$0xff]
        %v4169 = vld [vmem:[%s4 + $0x1c0] sm:$0xff]
        %v4170 = vld [vmem:[%s4 + $0x1c8] sm:$0xff]
        %v4171 = vld [vmem:[%s4 + $0x1d0] sm:$0xff]
        %v4172 = vld [vmem:[%s4 + $0x1d8] sm:$0xff]
        %v4173 = vld [vmem:[%s4 + $0x1e0] sm:$0xff]
        %v4174 = vld [vmem:[%s4 + $0x1e8] sm:$0xff]
        %v4175 = vld [vmem:[%s4 + $0x1f0] sm:$0xff]
        %v4176 = vld [vmem:[%s4 + $0x1f8] sm:$0xff]
        %v4177 = vld [vmem:[#allocation6] sm:$0xf]
        %v4178 = vld [vmem:[#allocation8] sm:$0xff]
        %v4179 = vld [vmem:[#allocation10] sm:$0xff]
        %v4180 = vld [vmem:[%s518] sm:$0xf]
        %v4181 = vld [vmem:[%s518 + $0x4] sm:$0xf]
        %v4182 = vld [vmem:[%s518 + $0x8] sm:$0xf]
        %v4183 = vld [vmem:[%s518 + $0xc] sm:$0xf]
        %v4184 = vld [vmem:[%s518 + $0x10] sm:$0xf]
        %v4185 = vld [vmem:[%s518 + $0x14] sm:$0xf]
        %v4186 = vld [vmem:[%s518 + $0x18] sm:$0xf]
        %v4187 = vld [vmem:[%s518 + $0x1c] sm:$0xf]
        %v4188 = vld [vmem:[%s518 + $0x20] sm:$0xf]
        %v4189 = vld [vmem:[%s518 + $0x24] sm:$0xf]
        %v4190 = vld [vmem:[%s518 + $0x28] sm:$0xf]
        %v4191 = vld [vmem:[%s518 + $0x2c] sm:$0xf]
        %v4192 = vld [vmem:[%s518 + $0x30] sm:$0xf]
        %v4193 = vld [vmem:[%s518 + $0x34] sm:$0xf]
        %v4194 = vld [vmem:[%s518 + $0x38] sm:$0xf]
        %v4195 = vld [vmem:[%s518 + $0x3c] sm:$0xf]
        %v4196 = vld [vmem:[%s518 + $0x40] sm:$0xf]
        %v4197 = vld [vmem:[%s518 + $0x44] sm:$0xf]
        %v4198 = vld [vmem:[%s518 + $0x48] sm:$0xf]
        %v4199 = vld [vmem:[%s518 + $0x4c] sm:$0xf]
        %v4200 = vld [vmem:[%s518 + $0x50] sm:$0xf]
        %v4201 = vld [vmem:[%s518 + $0x54] sm:$0xf]
        %v4202 = vld [vmem:[%s518 + $0x58] sm:$0xf]
        %v4203 = vld [vmem:[%s518 + $0x5c] sm:$0xf]
        %v4204 = vld [vmem:[%s518 + $0x60] sm:$0xf]
        %v4205 = vld [vmem:[%s518 + $0x64] sm:$0xf]
        %v4206 = vld [vmem:[%s518 + $0x68] sm:$0xf]
        %v4207 = vld [vmem:[%s518 + $0x6c] sm:$0xf]
        %v4208 = vld [vmem:[%s518 + $0x70] sm:$0xf]
        %v4209 = vld [vmem:[%s518 + $0x74] sm:$0xf]
        %v4210 = vld [vmem:[%s518 + $0x78] sm:$0xf]
        %v4211 = vld [vmem:[%s518 + $0x7c] sm:$0xf]
        %v4228 = vunpack.c.l.b16 %v4001
        %v4229 = vunpack.c.h.b16 %v4001
        %v4230 = vunpack.c.l.b16 %v4002
        %v4231 = vunpack.c.h.b16 %v4002
        %v4232 = vunpack.c.l.b16 %v4003
        %v4233 = vunpack.c.h.b16 %v4003
        %v4234 = vunpack.c.l.b16 %v4004
        %v4235 = vunpack.c.h.b16 %v4004
        %v4236 = vunpack.c.l.b16 %v4005
        %v4237 = vunpack.c.h.b16 %v4005
        %v4238 = vunpack.c.l.b16 %v4006
        %v4239 = vunpack.c.h.b16 %v4006
        %v4240 = vunpack.c.l.b16 %v4007
        %v4241 = vunpack.c.h.b16 %v4007
        %v4242 = vunpack.c.l.b16 %v4008
        %v4243 = vunpack.c.h.b16 %v4008
        %v4244 = vunpack.c.l.b16 %v4009
        %v4245 = vunpack.c.h.b16 %v4009
        %v4246 = vunpack.c.l.b16 %v4010
        %v4247 = vunpack.c.h.b16 %v4010
        %v4248 = vunpack.c.l.b16 %v4011
        %v4249 = vunpack.c.h.b16 %v4011
        %v4250 = vunpack.c.l.b16 %v4012
        %v4251 = vunpack.c.h.b16 %v4012
        %v4252 = vunpack.c.l.b16 %v4013
        %v4253 = vunpack.c.h.b16 %v4013
        %v4254 = vunpack.c.l.b16 %v4014
        %v4255 = vunpack.c.h.b16 %v4014
        %v4256 = vunpack.c.l.b16 %v4015
        %v4257 = vunpack.c.h.b16 %v4015
        %v4258 = vunpack.c.l.b16 %v4016
        %v4259 = vunpack.c.h.b16 %v4016
        %v4260 = vpack.c.b16 %v4230, %v4228
        %v4261 = vpack.c.b16 %v4231, %v4229
        %v4262 = vpack.c.b16 %v4234, %v4232
        %v4263 = vpack.c.b16 %v4235, %v4233
        %v4264 = vpack.c.b16 %v4238, %v4236
        %v4265 = vpack.c.b16 %v4239, %v4237
        %v4266 = vpack.c.b16 %v4242, %v4240
        %v4267 = vpack.c.b16 %v4243, %v4241
        %v4268 = vpack.c.b16 %v4246, %v4244
        %v4269 = vpack.c.b16 %v4247, %v4245
        %v4270 = vpack.c.b16 %v4250, %v4248
        %v4271 = vpack.c.b16 %v4251, %v4249
        %v4272 = vpack.c.b16 %v4254, %v4252
        %v4273 = vpack.c.b16 %v4255, %v4253
        %v4274 = vpack.c.b16 %v4258, %v4256
        %v4275 = vpack.c.b16 %v4259, %v4257
        %v4324 = vunpack.c.l.b16 %v4180
        %v4325 = vunpack.c.l.b16 %v4181
        %v4326 = vunpack.c.l.b16 %v4182
        %v4327 = vunpack.c.l.b16 %v4183
        %v4328 = vunpack.c.l.b16 %v4184
        %v4329 = vunpack.c.l.b16 %v4185
        %v4330 = vunpack.c.l.b16 %v4186
        %v4331 = vunpack.c.l.b16 %v4187
        %v4332 = vunpack.c.l.b16 %v4188
        %v4333 = vunpack.c.l.b16 %v4189
        %v4334 = vunpack.c.l.b16 %v4190
        %v4335 = vunpack.c.l.b16 %v4191
        %v4336 = vunpack.c.l.b16 %v4192
        %v4337 = vunpack.c.l.b16 %v4193
        %v4338 = vunpack.c.l.b16 %v4194
        %v4339 = vunpack.c.l.b16 %v4195
        %v4340 = vunpack.c.l.b16 %v4196
        %v4341 = vunpack.c.l.b16 %v4197
        %v4342 = vunpack.c.l.b16 %v4198
        %v4343 = vunpack.c.l.b16 %v4199
        %v4344 = vunpack.c.l.b16 %v4200
        %v4345 = vunpack.c.l.b16 %v4201
        %v4346 = vunpack.c.l.b16 %v4202
        %v4347 = vunpack.c.l.b16 %v4203
        %v4348 = vunpack.c.l.b16 %v4204
        %v4349 = vunpack.c.l.b16 %v4205
        %v4350 = vunpack.c.l.b16 %v4206
        %v4351 = vunpack.c.l.b16 %v4207
        %v4352 = vunpack.c.l.b16 %v4208
        %v4353 = vunpack.c.l.b16 %v4209
        %v4354 = vunpack.c.l.b16 %v4210
        %v4355 = vunpack.c.l.b16 %v4211
        %v4356 = vpack.c.b16 %v4325, %v4324
        %v4357 = vpack.c.b16 %v4327, %v4326
        %v4358 = vpack.c.b16 %v4329, %v4328
        %v4359 = vpack.c.b16 %v4331, %v4330
        %v4360 = vpack.c.b16 %v4333, %v4332
        %v4361 = vpack.c.b16 %v4335, %v4334
        %v4362 = vpack.c.b16 %v4337, %v4336
        %v4363 = vpack.c.b16 %v4339, %v4338
        %v4364 = vpack.c.b16 %v4341, %v4340
        %v4365 = vpack.c.b16 %v4343, %v4342
        %v4366 = vpack.c.b16 %v4345, %v4344
        %v4367 = vpack.c.b16 %v4347, %v4346
        %v4368 = vpack.c.b16 %v4349, %v4348
        %v4369 = vpack.c.b16 %v4351, %v4350
        %v4370 = vpack.c.b16 %v4353, %v4352
        %v4371 = vpack.c.b16 %v4355, %v4354
        %4388 = vmatprep.subr.bf16.mxu0 0
        %4389 = vmatpush1.bf16.msra.mxu0 %v4356
        %4390 = vmatprep.subr.bf16.mxu0 0
        %4391 = vmatpush1.bf16.msra.mxu0 %v4357
        %4392 = vmatprep.subr.bf16.mxu0 0
        %4393 = vmatpush1.bf16.msra.mxu0 %v4358
        %4394 = vmatprep.subr.bf16.mxu0 0
        %4395 = vmatpush1.bf16.msra.mxu0 %v4359
        %4396 = vmatprep.subr.bf16.mxu0 0
        %4397 = vmatpush1.bf16.msra.mxu0 %v4360
        %4398 = vmatprep.subr.bf16.mxu0 0
        %4399 = vmatpush1.bf16.msra.mxu0 %v4361
        %4400 = vmatprep.subr.bf16.mxu0 0
        %4401 = vmatpush1.bf16.msra.mxu0 %v4362
        %4402 = vmatprep.subr.bf16.mxu0 0
        %4403 = vmatpush1.bf16.msra.mxu0 %v4363
        %4404 = vmatprep.subr.bf16.mxu0 0
        %4405 = vmatpush1.bf16.msra.mxu0 %v4364
        %4406 = vmatprep.subr.bf16.mxu0 0
        %4407 = vmatpush1.bf16.msra.mxu0 %v4365
        %4408 = vmatprep.subr.bf16.mxu0 0
        %4409 = vmatpush1.bf16.msra.mxu0 %v4366
        %4410 = vmatprep.subr.bf16.mxu0 0
        %4411 = vmatpush1.bf16.msra.mxu0 %v4367
        %4412 = vmatprep.subr.bf16.mxu0 0
        %4413 = vmatpush1.bf16.msra.mxu0 %v4368
        %4414 = vmatprep.subr.bf16.mxu0 0
        %4415 = vmatpush1.bf16.msra.mxu0 %v4369
        %4416 = vmatprep.subr.bf16.mxu0 0
        %4417 = vmatpush1.bf16.msra.mxu0 %v4370
        %4418 = vmatprep.subr.bf16.mxu0 0
        %4419 = vmatpush1.bf16.msra.mxu0 %v4371
        %4420 = vmatprep.mubr.bf16.mxu0 %v4261
        %4421 = vmatmul.mubr.bf16.gmra.mrb[0].mxu0 %v4260
        %v4422 = vpop.f32.mrb[0].mxu0
        %v4423 = vadd.f32 0.0, %v4422
        %v4424 = vpop.f32.mrb[0].mxu0
        %v4425 = vpop.f32.mrb[0].mxu0
        %v4426 = vadd.f32 0.0, %v4425
        %v4427 = vpop.f32.mrb[0].mxu0
        %4428 = vmatprep.mubr.bf16.mxu0 %v4263
        %4429 = vmatmul.mubr.bf16.gmra.mrb[0].mxu0 %v4262
        %v4430 = vpop.f32.mrb[0].mxu0
        %v4431 = vadd.f32 0.0, %v4430
        %v4432 = vpop.f32.mrb[0].mxu0
        %v4433 = vpop.f32.mrb[0].mxu0
        %v4434 = vadd.f32 0.0, %v4433
        %v4435 = vpop.f32.mrb[0].mxu0
        %4436 = vmatprep.mubr.bf16.mxu0 %v4265
        %4437 = vmatmul.mubr.bf16.gmra.mrb[0].mxu0 %v4264
        %v4438 = vpop.f32.mrb[0].mxu0
        %v4439 = vadd.f32 0.0, %v4438
        %v4440 = vpop.f32.mrb[0].mxu0
        %v4441 = vpop.f32.mrb[0].mxu0
        %v4442 = vadd.f32 0.0, %v4441
        %v4443 = vpop.f32.mrb[0].mxu0
        %4444 = vmatprep.mubr.bf16.mxu0 %v4267
        %4445 = vmatmul.mubr.bf16.gmra.mrb[0].mxu0 %v4266
        %v4446 = vpop.f32.mrb[0].mxu0
        %v4447 = vadd.f32 0.0, %v4446
        %v4448 = vpop.f32.mrb[0].mxu0
        %v4449 = vpop.f32.mrb[0].mxu0
        %v4450 = vadd.f32 0.0, %v4449
        %v4451 = vpop.f32.mrb[0].mxu0
        %4452 = vmatprep.mubr.bf16.mxu0 %v4269
        %4453 = vmatmul.mubr.bf16.gmra.mrb[0].mxu0 %v4268
        %v4454 = vpop.f32.mrb[0].mxu0
        %v4455 = vadd.f32 0.0, %v4454
        %v4456 = vpop.f32.mrb[0].mxu0
        %v4457 = vpop.f32.mrb[0].mxu0
        %v4458 = vadd.f32 0.0, %v4457
        %v4459 = vpop.f32.mrb[0].mxu0
        %4460 = vmatprep.mubr.bf16.mxu0 %v4271
        %4461 = vmatmul.mubr.bf16.gmra.mrb[0].mxu0 %v4270
        %v4462 = vpop.f32.mrb[0].mxu0
        %v4463 = vadd.f32 0.0, %v4462
        %v4464 = vpop.f32.mrb[0].mxu0
        %v4465 = vpop.f32.mrb[0].mxu0
        %v4466 = vadd.f32 0.0, %v4465
        %v4467 = vpop.f32.mrb[0].mxu0
        %4468 = vmatprep.mubr.bf16.mxu0 %v4273
        %4469 = vmatmul.mubr.bf16.gmra.mrb[0].mxu0 %v4272
        %v4470 = vpop.f32.mrb[0].mxu0
        %v4471 = vadd.f32 0.0, %v4470
        %v4472 = vpop.f32.mrb[0].mxu0
        %v4473 = vpop.f32.mrb[0].mxu0
        %v4474 = vadd.f32 0.0, %v4473
        %v4475 = vpop.f32.mrb[0].mxu0
        %4476 = vmatprep.mubr.bf16.mxu0 %v4275
        %4477 = vmatmul.mubr.bf16.gmra.mrb[0].mxu0 %v4274
        %v4478 = vpop.f32.mrb[0].mxu0
        %v4479 = vadd.f32 0.0, %v4478
        %v4480 = vpop.f32.mrb[0].mxu0
        %v4481 = vpop.f32.mrb[0].mxu0
        %v4482 = vadd.f32 0.0, %v4481
        %v4483 = vpop.f32.mrb[0].mxu0
        %4484 = vdwg.mxu0
        %v4485 = vpack.c.bf16 %v4426, %v4423
        %v4486 = vpack.c.bf16 %v4434, %v4431
        %v4487 = vpack.c.bf16 %v4442, %v4439
        %v4488 = vpack.c.bf16 %v4450, %v4447
        %v4489 = vpack.c.bf16 %v4458, %v4455
        %v4490 = vpack.c.bf16 %v4466, %v4463
        %v4491 = vpack.c.bf16 %v4474, %v4471
        %v4492 = vpack.c.bf16 %v4482, %v4479
        %vm4493 = vcmask 261120
        %v4495 = vsel %vm4493, %v4485, 0
        %v4498 = vsel %vm4493, %v4486, 0
        %v4501 = vsel %vm4493, %v4487, 0
        %v4504 = vsel %vm4493, %v4488, 0
        %v4507 = vsel %vm4493, %v4489, 0
        %v4510 = vsel %vm4493, %v4490, 0
        %v4513 = vsel %vm4493, %v4491, 0
        %v4516 = vsel %vm4493, %v4492, 0
        %v4519 = vsel %vm4493, %v4356, 0
        %v4522 = vsel %vm4493, %v4357, 0
        %v4525 = vsel %vm4493, %v4358, 0
        %v4528 = vsel %vm4493, %v4359, 0
        %v4531 = vsel %vm4493, %v4360, 0
        %v4534 = vsel %vm4493, %v4361, 0
        %v4537 = vsel %vm4493, %v4362, 0
        %v4540 = vsel %vm4493, %v4363, 0
        %v4543 = vsel %vm4493, %v4364, 0
        %v4546 = vsel %vm4493, %v4365, 0
        %v4549 = vsel %vm4493, %v4366, 0
        %v4552 = vsel %vm4493, %v4367, 0
        %v4555 = vsel %vm4493, %v4368, 0
        %v4558 = vsel %vm4493, %v4369, 0
        %v4561 = vsel %vm4493, %v4370, 0
        %v4564 = vsel %vm4493, %v4371, 0
        %4566 = vmatprep.subr.bf16.mxu0 0
        %4567 = vmatpush1.bf16.xpose.msra.mxu0 %v4519
        %4568 = vmatprep.subr.bf16.mxu0 0
        %4569 = vmatpush1.bf16.xpose.msra.mxu0 %v4522
        %4570 = vmatprep.subr.bf16.mxu0 0
        %4571 = vmatpush1.bf16.xpose.msra.mxu0 %v4525
        %4572 = vmatprep.subr.bf16.mxu0 0
        %4573 = vmatpush1.bf16.xpose.msra.mxu0 %v4528
        %4574 = vmatprep.subr.bf16.mxu0 0
        %4575 = vmatpush1.bf16.xpose.msra.mxu0 %v4531
        %4576 = vmatprep.subr.bf16.mxu0 0
        %4577 = vmatpush1.bf16.xpose.msra.mxu0 %v4534
        %4578 = vmatprep.subr.bf16.mxu0 0
        %4579 = vmatpush1.bf16.xpose.msra.mxu0 %v4537
        %4580 = vmatprep.subr.bf16.mxu0 0
        %4581 = vmatpush1.bf16.xpose.msra.mxu0 %v4540
        %4582 = vmatprep.subr.bf16.mxu0 0
        %4583 = vmatpush1.bf16.xpose.msra.mxu0 %v4543
        %4584 = vmatprep.subr.bf16.mxu0 0
        %4585 = vmatpush1.bf16.xpose.msra.mxu0 %v4546
        %4586 = vmatprep.subr.bf16.mxu0 0
        %4587 = vmatpush1.bf16.xpose.msra.mxu0 %v4549
        %4588 = vmatprep.subr.bf16.mxu0 0
        %4589 = vmatpush1.bf16.xpose.msra.mxu0 %v4552
        %4590 = vmatprep.subr.bf16.mxu0 0
        %4591 = vmatpush1.bf16.xpose.msra.mxu0 %v4555
        %4592 = vmatprep.subr.bf16.mxu0 0
        %4593 = vmatpush1.bf16.xpose.msra.mxu0 %v4558
        %4594 = vmatprep.subr.bf16.mxu0 0
        %4595 = vmatpush1.bf16.xpose.msra.mxu0 %v4561
        %4596 = vmatprep.subr.bf16.mxu0 0
        %4597 = vmatpush1.bf16.xpose.msra.mxu0 %v4564
        %4598 = vmatprep.mubr.bf16.mxu0 0
        %4599 = vmatmul.mubr.bf16.gmra.mrb[0].mxu0 %v4495
        %v4600 = vpop.f32.mrb[0].mxu0
        %v4601 = vadd.f32 %v4036, %v4600
        %v4602 = vpop.f32.mrb[0].mxu0
        %v4603 = vadd.f32 %v4036, %v4602
        %v4604 = vpop.f32.mrb[0].mxu0
        %v4605 = vadd.f32 %v4041, %v4604
        %v4606 = vpop.f32.mrb[0].mxu0
        %v4607 = vadd.f32 %v4041, %v4606
        %4608 = vmatprep.mubr.bf16.mxu0 0
        %4609 = vmatmul.mubr.bf16.gmra.mrb[0].mxu0 %v4498
        %v4610 = vpop.f32.mrb[0].mxu0
        %v4611 = vadd.f32 %v4046, %v4610
        %v4612 = vpop.f32.mrb[0].mxu0
        %v4613 = vadd.f32 %v4046, %v4612
        %v4614 = vpop.f32.mrb[0].mxu0
        %v4615 = vadd.f32 %v4051, %v4614
        %v4616 = vpop.f32.mrb[0].mxu0
        %v4617 = vadd.f32 %v4051, %v4616
        %4618 = vmatprep.mubr.bf16.mxu0 0
        %4619 = vmatmul.mubr.bf16.gmra.mrb[0].mxu0 %v4501
        %v4620 = vpop.f32.mrb[0].mxu0
        %v4621 = vadd.f32 %v4056, %v4620
        %v4622 = vpop.f32.mrb[0].mxu0
        %v4623 = vadd.f32 %v4056, %v4622
        %v4624 = vpop.f32.mrb[0].mxu0
        %v4625 = vadd.f32 %v4061, %v4624
        %v4626 = vpop.f32.mrb[0].mxu0
        %v4627 = vadd.f32 %v4061, %v4626
        %4628 = vmatprep.mubr.bf16.mxu0 0
        %4629 = vmatmul.mubr.bf16.gmra.mrb[0].mxu0 %v4504
        %v4630 = vpop.f32.mrb[0].mxu0
        %v4631 = vadd.f32 %v4066, %v4630
        %v4632 = vpop.f32.mrb[0].mxu0
        %v4633 = vadd.f32 %v4066, %v4632
        %v4634 = vpop.f32.mrb[0].mxu0
        %v4635 = vadd.f32 %v4071, %v4634
        %v4636 = vpop.f32.mrb[0].mxu0
        %v4637 = vadd.f32 %v4071, %v4636
        %4638 = vmatprep.mubr.bf16.mxu0 0
        %4639 = vmatmul.mubr.bf16.gmra.mrb[0].mxu0 %v4507
        %v4640 = vpop.f32.mrb[0].mxu0
        %v4641 = vadd.f32 %v4076, %v4640
        %v4642 = vpop.f32.mrb[0].mxu0
        %v4643 = vadd.f32 %v4076, %v4642
        %v4644 = vpop.f32.mrb[0].mxu0
        %v4645 = vadd.f32 %v4081, %v4644
        %v4646 = vpop.f32.mrb[0].mxu0
        %v4647 = vadd.f32 %v4081, %v4646
        %4648 = vmatprep.mubr.bf16.mxu0 0
        %4649 = vmatmul.mubr.bf16.gmra.mrb[0].mxu0 %v4510
        %v4650 = vpop.f32.mrb[0].mxu0
        %v4651 = vadd.f32 %v4086, %v4650
        %v4652 = vpop.f32.mrb[0].mxu0
        %v4653 = vadd.f32 %v4086, %v4652
        %v4654 = vpop.f32.mrb[0].mxu0
        %v4655 = vadd.f32 %v4091, %v4654
        %v4656 = vpop.f32.mrb[0].mxu0
        %v4657 = vadd.f32 %v4091, %v4656
        %4658 = vmatprep.mubr.bf16.mxu0 0
        %4659 = vmatmul.mubr.bf16.gmra.mrb[0].mxu0 %v4513
        %v4660 = vpop.f32.mrb[0].mxu0
        %v4661 = vadd.f32 %v4096, %v4660
        %v4662 = vpop.f32.mrb[0].mxu0
        %v4663 = vadd.f32 %v4096, %v4662
        %v4664 = vpop.f32.mrb[0].mxu0
        %v4665 = vadd.f32 %v4101, %v4664
        %v4666 = vpop.f32.mrb[0].mxu0
        %v4667 = vadd.f32 %v4101, %v4666
        %4668 = vmatprep.mubr.bf16.mxu0 0
        %4669 = vmatmul.mubr.bf16.gmra.mrb[0].mxu0 %v4516
        %v4670 = vpop.f32.mrb[0].mxu0
        %v4671 = vadd.f32 %v4106, %v4670
        %v4672 = vpop.f32.mrb[0].mxu0
        %v4673 = vadd.f32 %v4106, %v4672
        %v4674 = vpop.f32.mrb[0].mxu0
        %v4675 = vadd.f32 %v4111, %v4674
        %v4676 = vpop.f32.mrb[0].mxu0
        %v4677 = vadd.f32 %v4111, %v4676
        %4678 = vdwg.mxu0
        %v4679 = vpack.c.bf16 %v4605, %v4601
        %v4680 = vpack.c.bf16 %v4607, %v4603
        %v4681 = vpack.c.bf16 %v4615, %v4611
        %v4682 = vpack.c.bf16 %v4617, %v4613
        %v4683 = vpack.c.bf16 %v4625, %v4621
        %v4684 = vpack.c.bf16 %v4627, %v4623
        %v4685 = vpack.c.bf16 %v4635, %v4631
        %v4686 = vpack.c.bf16 %v4637, %v4633
        %v4687 = vpack.c.bf16 %v4645, %v4641
        %v4688 = vpack.c.bf16 %v4647, %v4643
        %v4689 = vpack.c.bf16 %v4655, %v4651
        %v4690 = vpack.c.bf16 %v4657, %v4653
        %v4691 = vpack.c.bf16 %v4665, %v4661
        %v4692 = vpack.c.bf16 %v4667, %v4663
        %v4693 = vpack.c.bf16 %v4675, %v4671
        %v4694 = vpack.c.bf16 %v4677, %v4673
        %v4695 = vld [vmem:[#allocation4] sm:$0xff]
        %v4696 = vld [vmem:[#allocation4 + $0x8] sm:$0xff]
        %v4697 = vld [vmem:[#allocation4 + $0x10] sm:$0xff]
        %v4698 = vld [vmem:[#allocation4 + $0x18] sm:$0xff]
        %v4699 = vld [vmem:[#allocation4 + $0x20] sm:$0xff]
        %v4700 = vld [vmem:[#allocation4 + $0x28] sm:$0xff]
        %v4701 = vld [vmem:[#allocation4 + $0x30] sm:$0xff]
        %v4702 = vld [vmem:[#allocation4 + $0x38] sm:$0xff]
        %v4703 = vld [vmem:[#allocation4 + $0x40] sm:$0xff]
        %v4704 = vld [vmem:[#allocation4 + $0x48] sm:$0xff]
        %v4705 = vld [vmem:[#allocation4 + $0x50] sm:$0xff]
        %v4706 = vld [vmem:[#allocation4 + $0x58] sm:$0xff]
        %v4707 = vld [vmem:[#allocation4 + $0x60] sm:$0xff]
        %v4708 = vld [vmem:[#allocation4 + $0x68] sm:$0xff]
        %v4709 = vld [vmem:[#allocation4 + $0x70] sm:$0xff]
        %v4710 = vld [vmem:[#allocation4 + $0x78] sm:$0xff]
        %v4711 = vld [vmem:[#allocation4 + $0x80] sm:$0xff]
        %v4712 = vld [vmem:[#allocation4 + $0x88] sm:$0xff]
        %v4713 = vld [vmem:[#allocation4 + $0x90] sm:$0xff]
        %v4714 = vld [vmem:[#allocation4 + $0x98] sm:$0xff]
        %v4715 = vld [vmem:[#allocation4 + $0xa0] sm:$0xff]
        %v4716 = vld [vmem:[#allocation4 + $0xa8] sm:$0xff]
        %v4717 = vld [vmem:[#allocation4 + $0xb0] sm:$0xff]
        %v4718 = vld [vmem:[#allocation4 + $0xb8] sm:$0xff]
        %v4719 = vld [vmem:[#allocation4 + $0xc0] sm:$0xff]
        %v4720 = vld [vmem:[#allocation4 + $0xc8] sm:$0xff]
        %v4721 = vld [vmem:[#allocation4 + $0xd0] sm:$0xff]
        %v4722 = vld [vmem:[#allocation4 + $0xd8] sm:$0xff]
        %v4723 = vld [vmem:[#allocation4 + $0xe0] sm:$0xff]
        %v4724 = vld [vmem:[#allocation4 + $0xe8] sm:$0xff]
        %v4725 = vld [vmem:[#allocation4 + $0xf0] sm:$0xff]
        %v4726 = vld [vmem:[#allocation4 + $0xf8] sm:$0xff]
        %v4727 = vld [vmem:[#allocation4 + $0x100] sm:$0xff]
        %v4728 = vld [vmem:[#allocation4 + $0x108] sm:$0xff]
        %v4729 = vld [vmem:[#allocation4 + $0x110] sm:$0xff]
        %v4730 = vld [vmem:[#allocation4 + $0x118] sm:$0xff]
        %v4731 = vld [vmem:[#allocation4 + $0x120] sm:$0xff]
        %v4732 = vld [vmem:[#allocation4 + $0x128] sm:$0xff]
        %v4733 = vld [vmem:[#allocation4 + $0x130] sm:$0xff]
        %v4734 = vld [vmem:[#allocation4 + $0x138] sm:$0xff]
        %v4735 = vld [vmem:[#allocation4 + $0x140] sm:$0xff]
        %v4736 = vld [vmem:[#allocation4 + $0x148] sm:$0xff]
        %v4737 = vld [vmem:[#allocation4 + $0x150] sm:$0xff]
        %v4738 = vld [vmem:[#allocation4 + $0x158] sm:$0xff]
        %v4739 = vld [vmem:[#allocation4 + $0x160] sm:$0xff]
        %v4740 = vld [vmem:[#allocation4 + $0x168] sm:$0xff]
        %v4741 = vld [vmem:[#allocation4 + $0x170] sm:$0xff]
        %v4742 = vld [vmem:[#allocation4 + $0x178] sm:$0xff]
        %4743 = vxpose.xlu0.c.b16.start [1/8] %v4695, 128
        %4744 = vxpose.xlu0.c.b16.cont [2/8] %v4697, 128
        %4745 = vxpose.xlu0.c.b16.cont [3/8] %v4699, 128
        %4746 = vxpose.xlu0.c.b16.cont [4/8] %v4701, 128
        %4747 = vxpose.xlu0.c.b16.cont [5/8] %v4703, 128
        %4748 = vxpose.xlu0.c.b16.cont [6/8] %v4705, 128
        %4749 = vxpose.xlu0.c.b16.cont [7/8] %v4707, 128
        %4750 = vxpose.xlu0.c.b16.end [8/8] %v4709, 128
        %v4751 = vpop.trf.xlu0
        %v4752 = vpop.trf.xlu0
        %v4753 = vpop.trf.xlu0
        %v4754 = vpop.trf.xlu0
        %v4755 = vpop.trf.xlu0
        %v4756 = vpop.trf.xlu0
        %v4757 = vpop.trf.xlu0
        %v4758 = vpop.trf.xlu0
        %4759 = vxpose.xlu0.c.b16.start [1/8] %v4696, 128
        %4760 = vxpose.xlu0.c.b16.cont [2/8] %v4698, 128
        %4761 = vxpose.xlu0.c.b16.cont [3/8] %v4700, 128
        %4762 = vxpose.xlu0.c.b16.cont [4/8] %v4702, 128
        %4763 = vxpose.xlu0.c.b16.cont [5/8] %v4704, 128
        %4764 = vxpose.xlu0.c.b16.cont [6/8] %v4706, 128
        %4765 = vxpose.xlu0.c.b16.cont [7/8] %v4708, 128
        %4766 = vxpose.xlu0.c.b16.end [8/8] %v4710, 128
        %v4767 = vpop.trf.xlu0
        %v4768 = vpop.trf.xlu0
        %v4769 = vpop.trf.xlu0
        %v4770 = vpop.trf.xlu0
        %v4771 = vpop.trf.xlu0
        %v4772 = vpop.trf.xlu0
        %v4773 = vpop.trf.xlu0
        %v4774 = vpop.trf.xlu0
        %4775 = vmatprep.subr.bf16.mxu0 %v4680
        %4776 = vmatpush1.bf16.msra.mxu0 %v4679
        %4777 = vmatprep.subr.bf16.mxu0 %v4682
        %4778 = vmatpush1.bf16.msra.mxu0 %v4681
        %4779 = vmatprep.subr.bf16.mxu0 %v4684
        %4780 = vmatpush1.bf16.msra.mxu0 %v4683
        %4781 = vmatprep.subr.bf16.mxu0 %v4686
        %4782 = vmatpush1.bf16.msra.mxu0 %v4685
        %4783 = vmatprep.subr.bf16.mxu0 %v4688
        %4784 = vmatpush1.bf16.msra.mxu0 %v4687
        %4785 = vmatprep.subr.bf16.mxu0 %v4690
        %4786 = vmatpush1.bf16.msra.mxu0 %v4689
        %4787 = vmatprep.subr.bf16.mxu0 %v4692
        %4788 = vmatpush1.bf16.msra.mxu0 %v4691
        %4789 = vmatprep.subr.bf16.mxu0 %v4694
        %4790 = vmatpush1.bf16.msra.mxu0 %v4693
        %4791 = vmatprep.subr.bf16.mxu0 0
        %4792 = vmatpush1.bf16.msra.mxu0 0
        %4793 = vmatprep.subr.bf16.mxu0 0
        %4794 = vmatpush1.bf16.msra.mxu0 0
        %4795 = vmatprep.subr.bf16.mxu0 0
        %4796 = vmatpush1.bf16.msra.mxu0 0
        %4797 = vmatprep.subr.bf16.mxu0 0
        %4798 = vmatpush1.bf16.msra.mxu0 0
        %4799 = vmatprep.subr.bf16.mxu0 0
        %4800 = vmatpush1.bf16.msra.mxu0 0
        %4801 = vmatprep.subr.bf16.mxu0 0
        %4802 = vmatpush1.bf16.msra.mxu0 0
        %4803 = vmatprep.subr.bf16.mxu0 0
        %4804 = vmatpush1.bf16.msra.mxu0 0
        %4805 = vmatprep.subr.bf16.mxu0 0
        %4806 = vmatpush1.bf16.msra.mxu0 0
        %4807 = vmatprep.mubr.bf16.mxu0 0
        %4808 = vmatmul.mubr.bf16.gmra.mrb[0].mxu0 %v4751
        %v4809 = vpop.f32.mrb[0].mxu0
        %v4810 = vadd.f32 0.0, %v4809
        %v4811 = vpop.f32.mrb[0].mxu0
        %v4812 = vadd.f32 0.0, %v4811
        %v4813 = vpop.f32.mrb[0].mxu0
        %v4814 = vadd.f32 0.0, %v4813
        %v4815 = vpop.f32.mrb[0].mxu0
        %v4816 = vadd.f32 0.0, %v4815
        %4817 = vmatprep.mubr.bf16.mxu0 0
        %4818 = vmatmul.mubr.bf16.gmra.mrb[0].mxu0 %v4752
        %v4819 = vpop.f32.mrb[0].mxu0
        %v4820 = vadd.f32 0.0, %v4819
        %v4821 = vpop.f32.mrb[0].mxu0
        %v4822 = vadd.f32 0.0, %v4821
        %v4823 = vpop.f32.mrb[0].mxu0
        %v4824 = vadd.f32 0.0, %v4823
        %v4825 = vpop.f32.mrb[0].mxu0
        %v4826 = vadd.f32 0.0, %v4825
        %4827 = vmatprep.mubr.bf16.mxu0 0
        %4828 = vmatmul.mubr.bf16.gmra.mrb[0].mxu0 %v4753
        %v4829 = vpop.f32.mrb[0].mxu0
        %v4830 = vadd.f32 0.0, %v4829
        %v4831 = vpop.f32.mrb[0].mxu0
        %v4832 = vadd.f32 0.0, %v4831
        %v4833 = vpop.f32.mrb[0].mxu0
        %v4834 = vadd.f32 0.0, %v4833
        %v4835 = vpop.f32.mrb[0].mxu0
        %v4836 = vadd.f32 0.0, %v4835
        %4837 = vmatprep.mubr.bf16.mxu0 0
        %4838 = vmatmul.mubr.bf16.gmra.mrb[0].mxu0 %v4754
        %v4839 = vpop.f32.mrb[0].mxu0
        %v4840 = vadd.f32 0.0, %v4839
        %v4841 = vpop.f32.mrb[0].mxu0
        %v4842 = vadd.f32 0.0, %v4841
        %v4843 = vpop.f32.mrb[0].mxu0
        %v4844 = vadd.f32 0.0, %v4843
        %v4845 = vpop.f32.mrb[0].mxu0
        %v4846 = vadd.f32 0.0, %v4845
        %4847 = vmatprep.mubr.bf16.mxu0 0
        %4848 = vmatmul.mubr.bf16.gmra.mrb[0].mxu0 %v4755
        %v4849 = vpop.f32.mrb[0].mxu0
        %v4850 = vadd.f32 0.0, %v4849
        %v4851 = vpop.f32.mrb[0].mxu0
        %v4852 = vadd.f32 0.0, %v4851
        %v4853 = vpop.f32.mrb[0].mxu0
        %v4854 = vadd.f32 0.0, %v4853
        %v4855 = vpop.f32.mrb[0].mxu0
        %v4856 = vadd.f32 0.0, %v4855
        %4857 = vmatprep.mubr.bf16.mxu0 0
        %4858 = vmatmul.mubr.bf16.gmra.mrb[0].mxu0 %v4756
        %v4859 = vpop.f32.mrb[0].mxu0
        %v4860 = vadd.f32 0.0, %v4859
        %v4861 = vpop.f32.mrb[0].mxu0
        %v4862 = vadd.f32 0.0, %v4861
        %v4863 = vpop.f32.mrb[0].mxu0
        %v4864 = vadd.f32 0.0, %v4863
        %v4865 = vpop.f32.mrb[0].mxu0
        %v4866 = vadd.f32 0.0, %v4865
        %4867 = vmatprep.mubr.bf16.mxu0 0
        %4868 = vmatmul.mubr.bf16.gmra.mrb[0].mxu0 %v4757
        %v4869 = vpop.f32.mrb[0].mxu0
        %v4870 = vadd.f32 0.0, %v4869
        %v4871 = vpop.f32.mrb[0].mxu0
        %v4872 = vadd.f32 0.0, %v4871
        %v4873 = vpop.f32.mrb[0].mxu0
        %v4874 = vadd.f32 0.0, %v4873
        %v4875 = vpop.f32.mrb[0].mxu0
        %v4876 = vadd.f32 0.0, %v4875
        %4877 = vmatprep.mubr.bf16.mxu0 0
        %4878 = vmatmul.mubr.bf16.gmra.mrb[0].mxu0 %v4758
        %v4879 = vpop.f32.mrb[0].mxu0
        %v4880 = vadd.f32 0.0, %v4879
        %v4881 = vpop.f32.mrb[0].mxu0
        %v4882 = vadd.f32 0.0, %v4881
        %v4883 = vpop.f32.mrb[0].mxu0
        %v4884 = vadd.f32 0.0, %v4883
        %v4885 = vpop.f32.mrb[0].mxu0
        %v4886 = vadd.f32 0.0, %v4885
        %4887 = vmatprep.mubr.bf16.mxu0 0
        %4888 = vmatmul.mubr.bf16.gmra.mrb[0].mxu0 %v4767
        %v4889 = vpop.f32.mrb[0].mxu0
        %v4890 = vadd.f32 0.0, %v4889
        %v4891 = vpop.f32.mrb[0].mxu0
        %v4892 = vadd.f32 0.0, %v4891
        %v4893 = vpop.f32.mrb[0].mxu0
        %v4894 = vadd.f32 0.0, %v4893
        %v4895 = vpop.f32.mrb[0].mxu0
        %v4896 = vadd.f32 0.0, %v4895
        %4897 = vmatprep.mubr.bf16.mxu0 0
        %4898 = vmatmul.mubr.bf16.gmra.mrb[0].mxu0 %v4768
        %v4899 = vpop.f32.mrb[0].mxu0
        %v4900 = vadd.f32 0.0, %v4899
        %v4901 = vpop.f32.mrb[0].mxu0
        %v4902 = vadd.f32 0.0, %v4901
        %v4903 = vpop.f32.mrb[0].mxu0
        %v4904 = vadd.f32 0.0, %v4903
        %v4905 = vpop.f32.mrb[0].mxu0
        %v4906 = vadd.f32 0.0, %v4905
        %4907 = vmatprep.mubr.bf16.mxu0 0
        %4908 = vmatmul.mubr.bf16.gmra.mrb[0].mxu0 %v4769
        %v4909 = vpop.f32.mrb[0].mxu0
        %v4910 = vadd.f32 0.0, %v4909
        %v4911 = vpop.f32.mrb[0].mxu0
        %v4912 = vadd.f32 0.0, %v4911
        %v4913 = vpop.f32.mrb[0].mxu0
        %v4914 = vadd.f32 0.0, %v4913
        %v4915 = vpop.f32.mrb[0].mxu0
        %v4916 = vadd.f32 0.0, %v4915
        %4917 = vmatprep.mubr.bf16.mxu0 0
        %4918 = vmatmul.mubr.bf16.gmra.mrb[0].mxu0 %v4770
        %v4919 = vpop.f32.mrb[0].mxu0
        %v4920 = vadd.f32 0.0, %v4919
        %v4921 = vpop.f32.mrb[0].mxu0
        %v4922 = vadd.f32 0.0, %v4921
        %v4923 = vpop.f32.mrb[0].mxu0
        %v4924 = vadd.f32 0.0, %v4923
        %v4925 = vpop.f32.mrb[0].mxu0
        %v4926 = vadd.f32 0.0, %v4925
        %4927 = vmatprep.mubr.bf16.mxu0 0
        %4928 = vmatmul.mubr.bf16.gmra.mrb[0].mxu0 %v4771
        %v4929 = vpop.f32.mrb[0].mxu0
        %v4930 = vadd.f32 0.0, %v4929
        %v4931 = vpop.f32.mrb[0].mxu0
        %v4932 = vadd.f32 0.0, %v4931
        %v4933 = vpop.f32.mrb[0].mxu0
        %v4934 = vadd.f32 0.0, %v4933
        %v4935 = vpop.f32.mrb[0].mxu0
        %v4936 = vadd.f32 0.0, %v4935
        %4937 = vmatprep.mubr.bf16.mxu0 0
        %4938 = vmatmul.mubr.bf16.gmra.mrb[0].mxu0 %v4772
        %v4939 = vpop.f32.mrb[0].mxu0
        %v4940 = vadd.f32 0.0, %v4939
        %v4941 = vpop.f32.mrb[0].mxu0
        %v4942 = vadd.f32 0.0, %v4941
        %v4943 = vpop.f32.mrb[0].mxu0
        %v4944 = vadd.f32 0.0, %v4943
        %v4945 = vpop.f32.mrb[0].mxu0
        %v4946 = vadd.f32 0.0, %v4945
        %4947 = vmatprep.mubr.bf16.mxu0 0
        %4948 = vmatmul.mubr.bf16.gmra.mrb[0].mxu0 %v4773
        %v4949 = vpop.f32.mrb[0].mxu0
        %v4950 = vadd.f32 0.0, %v4949
        %v4951 = vpop.f32.mrb[0].mxu0
        %v4952 = vadd.f32 0.0, %v4951
        %v4953 = vpop.f32.mrb[0].mxu0
        %v4954 = vadd.f32 0.0, %v4953
        %v4955 = vpop.f32.mrb[0].mxu0
        %v4956 = vadd.f32 0.0, %v4955
        %4957 = vmatprep.mubr.bf16.mxu0 0
        %4958 = vmatmul.mubr.bf16.gmra.mrb[0].mxu0 %v4774
        %v4959 = vpop.f32.mrb[0].mxu0
        %v4960 = vadd.f32 0.0, %v4959
        %v4961 = vpop.f32.mrb[0].mxu0
        %v4962 = vadd.f32 0.0, %v4961
        %v4963 = vpop.f32.mrb[0].mxu0
        %v4964 = vadd.f32 0.0, %v4963
        %v4965 = vpop.f32.mrb[0].mxu0
        %v4966 = vadd.f32 0.0, %v4965
        %4967 = vdwg.mxu0
        %v4968 = vmax.f32 %v4810, %v4812
        %4969 = vmax.xlane.f32.xlu0 %v4968
        %v4970 = vpop.xlane.xlu0 %4969
        %v4971 = vmax.f32 %v4814, %v4816
        %4972 = vmax.xlane.f32.xlu0 %v4971
        %v4973 = vpop.xlane.xlu0 %4972
        %v4974 = vmax.f32 %v4820, %v4822
        %4975 = vmax.xlane.f32.xlu0 %v4974
        %v4976 = vpop.xlane.xlu0 %4975
        %v4977 = vmax.f32 %v4824, %v4826
        %4978 = vmax.xlane.f32.xlu0 %v4977
        %v4979 = vpop.xlane.xlu0 %4978
        %v4980 = vmax.f32 %v4830, %v4832
        %4981 = vmax.xlane.f32.xlu0 %v4980
        %v4982 = vpop.xlane.xlu0 %4981
        %v4983 = vmax.f32 %v4834, %v4836
        %4984 = vmax.xlane.f32.xlu0 %v4983
        %v4985 = vpop.xlane.xlu0 %4984
        %v4986 = vmax.f32 %v4840, %v4842
        %4987 = vmax.xlane.f32.xlu0 %v4986
        %v4988 = vpop.xlane.xlu0 %4987
        %v4989 = vmax.f32 %v4844, %v4846
        %4990 = vmax.xlane.f32.xlu0 %v4989
        %v4991 = vpop.xlane.xlu0 %4990
        %v4992 = vmax.f32 %v4850, %v4852
        %4993 = vmax.xlane.f32.xlu0 %v4992
        %v4994 = vpop.xlane.xlu0 %4993
        %v4995 = vmax.f32 %v4854, %v4856
        %4996 = vmax.xlane.f32.xlu0 %v4995
        %v4997 = vpop.xlane.xlu0 %4996
        %v4998 = vmax.f32 %v4860, %v4862
        %4999 = vmax.xlane.f32.xlu0 %v4998
        %v5000 = vpop.xlane.xlu0 %4999
        %v5001 = vmax.f32 %v4864, %v4866
        %5002 = vmax.xlane.f32.xlu0 %v5001
        %v5003 = vpop.xlane.xlu0 %5002
        %v5004 = vmax.f32 %v4870, %v4872
        %5005 = vmax.xlane.f32.xlu0 %v5004
        %v5006 = vpop.xlane.xlu0 %5005
        %v5007 = vmax.f32 %v4874, %v4876
        %5008 = vmax.xlane.f32.xlu0 %v5007
        %v5009 = vpop.xlane.xlu0 %5008
        %v5010 = vmax.f32 %v4880, %v4882
        %5011 = vmax.xlane.f32.xlu0 %v5010
        %v5012 = vpop.xlane.xlu0 %5011
        %v5013 = vmax.f32 %v4884, %v4886
        %5014 = vmax.xlane.f32.xlu0 %v5013
        %v5015 = vpop.xlane.xlu0 %5014
        %v5016 = vmax.f32 %v4890, %v4892
        %5017 = vmax.xlane.f32.xlu0 %v5016
        %v5018 = vpop.xlane.xlu0 %5017
        %v5019 = vmax.f32 %v4894, %v4896
        %5020 = vmax.xlane.f32.xlu0 %v5019
        %v5021 = vpop.xlane.xlu0 %5020
        %v5022 = vmax.f32 %v4900, %v4902
        %5023 = vmax.xlane.f32.xlu0 %v5022
        %v5024 = vpop.xlane.xlu0 %5023
        %v5025 = vmax.f32 %v4904, %v4906
        %5026 = vmax.xlane.f32.xlu0 %v5025
        %v5027 = vpop.xlane.xlu0 %5026
        %v5028 = vmax.f32 %v4910, %v4912
        %5029 = vmax.xlane.f32.xlu0 %v5028
        %v5030 = vpop.xlane.xlu0 %5029
        %v5031 = vmax.f32 %v4914, %v4916
        %5032 = vmax.xlane.f32.xlu0 %v5031
        %v5033 = vpop.xlane.xlu0 %5032
        %v5034 = vmax.f32 %v4920, %v4922
        %5035 = vmax.xlane.f32.xlu0 %v5034
        %v5036 = vpop.xlane.xlu0 %5035
        %v5037 = vmax.f32 %v4924, %v4926
        %5038 = vmax.xlane.f32.xlu0 %v5037
        %v5039 = vpop.xlane.xlu0 %5038
        %v5040 = vmax.f32 %v4930, %v4932
        %5041 = vmax.xlane.f32.xlu0 %v5040
        %v5042 = vpop.xlane.xlu0 %5041
        %v5043 = vmax.f32 %v4934, %v4936
        %5044 = vmax.xlane.f32.xlu0 %v5043
        %v5045 = vpop.xlane.xlu0 %5044
        %v5046 = vmax.f32 %v4940, %v4942
        %5047 = vmax.xlane.f32.xlu0 %v5046
        %v5048 = vpop.xlane.xlu0 %5047
        %v5049 = vmax.f32 %v4944, %v4946
        %5050 = vmax.xlane.f32.xlu0 %v5049
        %v5051 = vpop.xlane.xlu0 %5050
        %v5052 = vmax.f32 %v4950, %v4952
        %5053 = vmax.xlane.f32.xlu0 %v5052
        %v5054 = vpop.xlane.xlu0 %5053
        %v5055 = vmax.f32 %v4954, %v4956
        %5056 = vmax.xlane.f32.xlu0 %v5055
        %v5057 = vpop.xlane.xlu0 %5056
        %v5058 = vmax.f32 %v4960, %v4962
        %5059 = vmax.xlane.f32.xlu0 %v5058
        %v5060 = vpop.xlane.xlu0 %5059
        %v5061 = vmax.f32 %v4964, %v4966
        %5062 = vmax.xlane.f32.xlu0 %v5061
        %v5063 = vpop.xlane.xlu0 %5062
        %v5064 = vsub.f32 %v4810, %v4970
        %v5065 = vsub.f32 %v4812, %v4970
        %v5066 = vsub.f32 %v4814, %v4973
        %v5067 = vsub.f32 %v4816, %v4973
        %v5068 = vsub.f32 %v4820, %v4976
        %v5069 = vsub.f32 %v4822, %v4976
        %v5070 = vsub.f32 %v4824, %v4979
        %v5071 = vsub.f32 %v4826, %v4979
        %v5072 = vsub.f32 %v4830, %v4982
        %v5073 = vsub.f32 %v4832, %v4982
        %v5074 = vsub.f32 %v4834, %v4985
        %v5075 = vsub.f32 %v4836, %v4985
        %v5076 = vsub.f32 %v4840, %v4988
        %v5077 = vsub.f32 %v4842, %v4988
        %v5078 = vsub.f32 %v4844, %v4991
        %v5079 = vsub.f32 %v4846, %v4991
        %v5080 = vsub.f32 %v4850, %v4994
        %v5081 = vsub.f32 %v4852, %v4994
        %v5082 = vsub.f32 %v4854, %v4997
        %v5083 = vsub.f32 %v4856, %v4997
        %v5084 = vsub.f32 %v4860, %v5000
        %v5085 = vsub.f32 %v4862, %v5000
        %v5086 = vsub.f32 %v4864, %v5003
        %v5087 = vsub.f32 %v4866, %v5003
        %v5088 = vsub.f32 %v4870, %v5006
        %v5089 = vsub.f32 %v4872, %v5006
        %v5090 = vsub.f32 %v4874, %v5009
        %v5091 = vsub.f32 %v4876, %v5009
        %v5092 = vsub.f32 %v4880, %v5012
        %v5093 = vsub.f32 %v4882, %v5012
        %v5094 = vsub.f32 %v4884, %v5015
        %v5095 = vsub.f32 %v4886, %v5015
        %v5096 = vsub.f32 %v4890, %v5018
        %v5097 = vsub.f32 %v4892, %v5018
        %v5098 = vsub.f32 %v4894, %v5021
        %v5099 = vsub.f32 %v4896, %v5021
        %v5100 = vsub.f32 %v4900, %v5024
        %v5101 = vsub.f32 %v4902, %v5024
        %v5102 = vsub.f32 %v4904, %v5027
        %v5103 = vsub.f32 %v4906, %v5027
        %v5104 = vsub.f32 %v4910, %v5030
        %v5105 = vsub.f32 %v4912, %v5030
        %v5106 = vsub.f32 %v4914, %v5033
        %v5107 = vsub.f32 %v4916, %v5033
        %v5108 = vsub.f32 %v4920, %v5036
        %v5109 = vsub.f32 %v4922, %v5036
        %v5110 = vsub.f32 %v4924, %v5039
        %v5111 = vsub.f32 %v4926, %v5039
        %v5112 = vsub.f32 %v4930, %v5042
        %v5113 = vsub.f32 %v4932, %v5042
        %v5114 = vsub.f32 %v4934, %v5045
        %v5115 = vsub.f32 %v4936, %v5045
        %v5116 = vsub.f32 %v4940, %v5048
        %v5117 = vsub.f32 %v4942, %v5048
        %v5118 = vsub.f32 %v4944, %v5051
        %v5119 = vsub.f32 %v4946, %v5051
        %v5120 = vsub.f32 %v4950, %v5054
        %v5121 = vsub.f32 %v4952, %v5054
        %v5122 = vsub.f32 %v4954, %v5057
        %v5123 = vsub.f32 %v4956, %v5057
        %v5124 = vsub.f32 %v4960, %v5060
        %v5125 = vsub.f32 %v4962, %v5060
        %v5126 = vsub.f32 %v4964, %v5063
        %v5127 = vsub.f32 %v4966, %v5063
        %v5128 = vmul.f32 %v5064, 1.442695
        %v5129 = vpow.pop %v5128
        %v5130 = vmul.f32 %v5065, 1.442695
        %v5131 = vpow.pop %v5130
        %v5132 = vmul.f32 %v5066, 1.442695
        %v5133 = vpow.pop %v5132
        %v5134 = vmul.f32 %v5067, 1.442695
        %v5135 = vpow.pop %v5134
        %v5136 = vmul.f32 %v5068, 1.442695
        %v5137 = vpow.pop %v5136
        %v5138 = vmul.f32 %v5069, 1.442695
        %v5139 = vpow.pop %v5138
        %v5140 = vmul.f32 %v5070, 1.442695
        %v5141 = vpow.pop %v5140
        %v5142 = vmul.f32 %v5071, 1.442695
        %v5143 = vpow.pop %v5142
        %v5144 = vmul.f32 %v5072, 1.442695
        %v5145 = vpow.pop %v5144
        %v5146 = vmul.f32 %v5073, 1.442695
        %v5147 = vpow.pop %v5146
        %v5148 = vmul.f32 %v5074, 1.442695
        %v5149 = vpow.pop %v5148
        %v5150 = vmul.f32 %v5075, 1.442695
        %v5151 = vpow.pop %v5150
        %v5152 = vmul.f32 %v5076, 1.442695
        %v5153 = vpow.pop %v5152
        %v5154 = vmul.f32 %v5077, 1.442695
        %v5155 = vpow.pop %v5154
        %v5156 = vmul.f32 %v5078, 1.442695
        %v5157 = vpow.pop %v5156
        %v5158 = vmul.f32 %v5079, 1.442695
        %v5159 = vpow.pop %v5158
        %v5160 = vmul.f32 %v5080, 1.442695
        %v5161 = vpow.pop %v5160
        %v5162 = vmul.f32 %v5081, 1.442695
        %v5163 = vpow.pop %v5162
        %v5164 = vmul.f32 %v5082, 1.442695
        %v5165 = vpow.pop %v5164
        %v5166 = vmul.f32 %v5083, 1.442695
        %v5167 = vpow.pop %v5166
        %v5168 = vmul.f32 %v5084, 1.442695
        %v5169 = vpow.pop %v5168
        %v5170 = vmul.f32 %v5085, 1.442695
        %v5171 = vpow.pop %v5170
        %v5172 = vmul.f32 %v5086, 1.442695
        %v5173 = vpow.pop %v5172
        %v5174 = vmul.f32 %v5087, 1.442695
        %v5175 = vpow.pop %v5174
        %v5176 = vmul.f32 %v5088, 1.442695
        %v5177 = vpow.pop %v5176
        %v5178 = vmul.f32 %v5089, 1.442695
        %v5179 = vpow.pop %v5178
        %v5180 = vmul.f32 %v5090, 1.442695
        %v5181 = vpow.pop %v5180
        %v5182 = vmul.f32 %v5091, 1.442695
        %v5183 = vpow.pop %v5182
        %v5184 = vmul.f32 %v5092, 1.442695
        %v5185 = vpow.pop %v5184
        %v5186 = vmul.f32 %v5093, 1.442695
        %v5187 = vpow.pop %v5186
        %v5188 = vmul.f32 %v5094, 1.442695
        %v5189 = vpow.pop %v5188
        %v5190 = vmul.f32 %v5095, 1.442695
        %v5191 = vpow.pop %v5190
        %v5192 = vmul.f32 %v5096, 1.442695
        %v5193 = vpow.pop %v5192
        %v5194 = vmul.f32 %v5097, 1.442695
        %v5195 = vpow.pop %v5194
        %v5196 = vmul.f32 %v5098, 1.442695
        %v5197 = vpow.pop %v5196
        %v5198 = vmul.f32 %v5099, 1.442695
        %v5199 = vpow.pop %v5198
        %v5200 = vmul.f32 %v5100, 1.442695
        %v5201 = vpow.pop %v5200
        %v5202 = vmul.f32 %v5101, 1.442695
        %v5203 = vpow.pop %v5202
        %v5204 = vmul.f32 %v5102, 1.442695
        %v5205 = vpow.pop %v5204
        %v5206 = vmul.f32 %v5103, 1.442695
        %v5207 = vpow.pop %v5206
        %v5208 = vmul.f32 %v5104, 1.442695
        %v5209 = vpow.pop %v5208
        %v5210 = vmul.f32 %v5105, 1.442695
        %v5211 = vpow.pop %v5210
        %v5212 = vmul.f32 %v5106, 1.442695
        %v5213 = vpow.pop %v5212
        %v5214 = vmul.f32 %v5107, 1.442695
        %v5215 = vpow.pop %v5214
        %v5216 = vmul.f32 %v5108, 1.442695
        %v5217 = vpow.pop %v5216
        %v5218 = vmul.f32 %v5109, 1.442695
        %v5219 = vpow.pop %v5218
        %v5220 = vmul.f32 %v5110, 1.442695
        %v5221 = vpow.pop %v5220
        %v5222 = vmul.f32 %v5111, 1.442695
        %v5223 = vpow.pop %v5222
        %v5224 = vmul.f32 %v5112, 1.442695
        %v5225 = vpow.pop %v5224
        %v5226 = vmul.f32 %v5113, 1.442695
        %v5227 = vpow.pop %v5226
        %v5228 = vmul.f32 %v5114, 1.442695
        %v5229 = vpow.pop %v5228
        %v5230 = vmul.f32 %v5115, 1.442695
        %v5231 = vpow.pop %v5230
        %v5232 = vmul.f32 %v5116, 1.442695
        %v5233 = vpow.pop %v5232
        %v5234 = vmul.f32 %v5117, 1.442695
        %v5235 = vpow.pop %v5234
        %v5236 = vmul.f32 %v5118, 1.442695
        %v5237 = vpow.pop %v5236
        %v5238 = vmul.f32 %v5119, 1.442695
        %v5239 = vpow.pop %v5238
        %v5240 = vmul.f32 %v5120, 1.442695
        %v5241 = vpow.pop %v5240
        %v5242 = vmul.f32 %v5121, 1.442695
        %v5243 = vpow.pop %v5242
        %v5244 = vmul.f32 %v5122, 1.442695
        %v5245 = vpow.pop %v5244
        %v5246 = vmul.f32 %v5123, 1.442695
        %v5247 = vpow.pop %v5246
        %v5248 = vmul.f32 %v5124, 1.442695
        %v5249 = vpow.pop %v5248
        %v5250 = vmul.f32 %v5125, 1.442695
        %v5251 = vpow.pop %v5250
        %v5252 = vmul.f32 %v5126, 1.442695
        %v5253 = vpow.pop %v5252
        %v5254 = vmul.f32 %v5127, 1.442695
        %v5255 = vpow.pop %v5254
        %v5256 = vadd.f32 %v5129, %v5131
        %5257 = vadd.xlane.f32.xlu0 %v5256
        %v5258 = vpop.xlane.xlu0 %5257
        %v5259 = vadd.f32 %v5133, %v5135
        %5260 = vadd.xlane.f32.xlu0 %v5259
        %v5261 = vpop.xlane.xlu0 %5260
        %v5262 = vadd.f32 %v5137, %v5139
        %5263 = vadd.xlane.f32.xlu0 %v5262
        %v5264 = vpop.xlane.xlu0 %5263
        %v5265 = vadd.f32 %v5141, %v5143
        %5266 = vadd.xlane.f32.xlu0 %v5265
        %v5267 = vpop.xlane.xlu0 %5266
        %v5268 = vadd.f32 %v5145, %v5147
        %5269 = vadd.xlane.f32.xlu0 %v5268
        %v5270 = vpop.xlane.xlu0 %5269
        %v5271 = vadd.f32 %v5149, %v5151
        %5272 = vadd.xlane.f32.xlu0 %v5271
        %v5273 = vpop.xlane.xlu0 %5272
        %v5274 = vadd.f32 %v5153, %v5155
        %5275 = vadd.xlane.f32.xlu0 %v5274
        %v5276 = vpop.xlane.xlu0 %5275
        %v5277 = vadd.f32 %v5157, %v5159
        %5278 = vadd.xlane.f32.xlu0 %v5277
        %v5279 = vpop.xlane.xlu0 %5278
        %v5280 = vadd.f32 %v5161, %v5163
        %5281 = vadd.xlane.f32.xlu0 %v5280
        %v5282 = vpop.xlane.xlu0 %5281
        %v5283 = vadd.f32 %v5165, %v5167
        %5284 = vadd.xlane.f32.xlu0 %v5283
        %v5285 = vpop.xlane.xlu0 %5284
        %v5286 = vadd.f32 %v5169, %v5171
        %5287 = vadd.xlane.f32.xlu0 %v5286
        %v5288 = vpop.xlane.xlu0 %5287
        %v5289 = vadd.f32 %v5173, %v5175
        %5290 = vadd.xlane.f32.xlu0 %v5289
        %v5291 = vpop.xlane.xlu0 %5290
        %v5292 = vadd.f32 %v5177, %v5179
        %5293 = vadd.xlane.f32.xlu0 %v5292
        %v5294 = vpop.xlane.xlu0 %5293
        %v5295 = vadd.f32 %v5181, %v5183
        %5296 = vadd.xlane.f32.xlu0 %v5295
        %v5297 = vpop.xlane.xlu0 %5296
        %v5298 = vadd.f32 %v5185, %v5187
        %5299 = vadd.xlane.f32.xlu0 %v5298
        %v5300 = vpop.xlane.xlu0 %5299
        %v5301 = vadd.f32 %v5189, %v5191
        %5302 = vadd.xlane.f32.xlu0 %v5301
        %v5303 = vpop.xlane.xlu0 %5302
        %v5304 = vadd.f32 %v5193, %v5195
        %5305 = vadd.xlane.f32.xlu0 %v5304
        %v5306 = vpop.xlane.xlu0 %5305
        %v5307 = vadd.f32 %v5197, %v5199
        %5308 = vadd.xlane.f32.xlu0 %v5307
        %v5309 = vpop.xlane.xlu0 %5308
        %v5310 = vadd.f32 %v5201, %v5203
        %5311 = vadd.xlane.f32.xlu0 %v5310
        %v5312 = vpop.xlane.xlu0 %5311
        %v5313 = vadd.f32 %v5205, %v5207
        %5314 = vadd.xlane.f32.xlu0 %v5313
        %v5315 = vpop.xlane.xlu0 %5314
        %v5316 = vadd.f32 %v5209, %v5211
        %5317 = vadd.xlane.f32.xlu0 %v5316
        %v5318 = vpop.xlane.xlu0 %5317
        %v5319 = vadd.f32 %v5213, %v5215
        %5320 = vadd.xlane.f32.xlu0 %v5319
        %v5321 = vpop.xlane.xlu0 %5320
        %v5322 = vadd.f32 %v5217, %v5219
        %5323 = vadd.xlane.f32.xlu0 %v5322
        %v5324 = vpop.xlane.xlu0 %5323
        %v5325 = vadd.f32 %v5221, %v5223
        %5326 = vadd.xlane.f32.xlu0 %v5325
        %v5327 = vpop.xlane.xlu0 %5326
        %v5328 = vadd.f32 %v5225, %v5227
        %5329 = vadd.xlane.f32.xlu0 %v5328
        %v5330 = vpop.xlane.xlu0 %5329
        %v5331 = vadd.f32 %v5229, %v5231
        %5332 = vadd.xlane.f32.xlu0 %v5331
        %v5333 = vpop.xlane.xlu0 %5332
        %v5334 = vadd.f32 %v5233, %v5235
        %5335 = vadd.xlane.f32.xlu0 %v5334
        %v5336 = vpop.xlane.xlu0 %5335
        %v5337 = vadd.f32 %v5237, %v5239
        %5338 = vadd.xlane.f32.xlu0 %v5337
        %v5339 = vpop.xlane.xlu0 %5338
        %v5340 = vadd.f32 %v5241, %v5243
        %5341 = vadd.xlane.f32.xlu0 %v5340
        %v5342 = vpop.xlane.xlu0 %5341
        %v5343 = vadd.f32 %v5245, %v5247
        %5344 = vadd.xlane.f32.xlu0 %v5343
        %v5345 = vpop.xlane.xlu0 %5344
        %v5346 = vadd.f32 %v5249, %v5251
        %5347 = vadd.xlane.f32.xlu0 %v5346
        %v5348 = vpop.xlane.xlu0 %5347
        %v5349 = vadd.f32 %v5253, %v5255
        %5350 = vadd.xlane.f32.xlu0 %v5349
        %v5351 = vpop.xlane.xlu0 %5350
        %v5352 = vrcp.pop %v5258
        %v5353 = vrcp.pop %v5261
        %v5354 = vrcp.pop %v5264
        %v5355 = vrcp.pop %v5267
        %v5356 = vrcp.pop %v5270
        %v5357 = vrcp.pop %v5273
        %v5358 = vrcp.pop %v5276
        %v5359 = vrcp.pop %v5279
        %v5360 = vrcp.pop %v5282
        %v5361 = vrcp.pop %v5285
        %v5362 = vrcp.pop %v5288
        %v5363 = vrcp.pop %v5291
        %v5364 = vrcp.pop %v5294
        %v5365 = vrcp.pop %v5297
        %v5366 = vrcp.pop %v5300
        %v5367 = vrcp.pop %v5303
        %v5368 = vrcp.pop %v5306
        %v5369 = vrcp.pop %v5309
        %v5370 = vrcp.pop %v5312
        %v5371 = vrcp.pop %v5315
        %v5372 = vrcp.pop %v5318
        %v5373 = vrcp.pop %v5321
        %v5374 = vrcp.pop %v5324
        %v5375 = vrcp.pop %v5327
        %v5376 = vrcp.pop %v5330
        %v5377 = vrcp.pop %v5333
        %v5378 = vrcp.pop %v5336
        %v5379 = vrcp.pop %v5339
        %v5380 = vrcp.pop %v5342
        %v5381 = vrcp.pop %v5345
        %v5382 = vrcp.pop %v5348
        %v5383 = vrcp.pop %v5351
        %v5384 = vmul.f32 %v5129, %v5352
        %v5385 = vmul.f32 %v5131, %v5352
        %v5386 = vmul.f32 %v5133, %v5353
        %v5387 = vmul.f32 %v5135, %v5353
        %v5388 = vmul.f32 %v5137, %v5354
        %v5389 = vmul.f32 %v5139, %v5354
        %v5390 = vmul.f32 %v5141, %v5355
        %v5391 = vmul.f32 %v5143, %v5355
        %v5392 = vmul.f32 %v5145, %v5356
        %v5393 = vmul.f32 %v5147, %v5356
        %v5394 = vmul.f32 %v5149, %v5357
        %v5395 = vmul.f32 %v5151, %v5357
        %v5396 = vmul.f32 %v5153, %v5358
        %v5397 = vmul.f32 %v5155, %v5358
        %v5398 = vmul.f32 %v5157, %v5359
        %v5399 = vmul.f32 %v5159, %v5359
        %v5400 = vmul.f32 %v5161, %v5360
        %v5401 = vmul.f32 %v5163, %v5360
        %v5402 = vmul.f32 %v5165, %v5361
        %v5403 = vmul.f32 %v5167, %v5361
        %v5404 = vmul.f32 %v5169, %v5362
        %v5405 = vmul.f32 %v5171, %v5362
        %v5406 = vmul.f32 %v5173, %v5363
        %v5407 = vmul.f32 %v5175, %v5363
        %v5408 = vmul.f32 %v5177, %v5364
        %v5409 = vmul.f32 %v5179, %v5364
        %v5410 = vmul.f32 %v5181, %v5365
        %v5411 = vmul.f32 %v5183, %v5365
        %v5412 = vmul.f32 %v5185, %v5366
        %v5413 = vmul.f32 %v5187, %v5366
        %v5414 = vmul.f32 %v5189, %v5367
        %v5415 = vmul.f32 %v5191, %v5367
        %v5416 = vmul.f32 %v5193, %v5368
        %v5417 = vmul.f32 %v5195, %v5368
        %v5418 = vmul.f32 %v5197, %v5369
        %v5419 = vmul.f32 %v5199, %v5369
        %v5420 = vmul.f32 %v5201, %v5370
        %v5421 = vmul.f32 %v5203, %v5370
        %v5422 = vmul.f32 %v5205, %v5371
        %v5423 = vmul.f32 %v5207, %v5371
        %v5424 = vmul.f32 %v5209, %v5372
        %v5425 = vmul.f32 %v5211, %v5372
        %v5426 = vmul.f32 %v5213, %v5373
        %v5427 = vmul.f32 %v5215, %v5373
        %v5428 = vmul.f32 %v5217, %v5374
        %v5429 = vmul.f32 %v5219, %v5374
        %v5430 = vmul.f32 %v5221, %v5375
        %v5431 = vmul.f32 %v5223, %v5375
        %v5432 = vmul.f32 %v5225, %v5376
        %v5433 = vmul.f32 %v5227, %v5376
        %v5434 = vmul.f32 %v5229, %v5377
        %v5435 = vmul.f32 %v5231, %v5377
        %v5436 = vmul.f32 %v5233, %v5378
        %v5437 = vmul.f32 %v5235, %v5378
        %v5438 = vmul.f32 %v5237, %v5379
        %v5439 = vmul.f32 %v5239, %v5379
        %v5440 = vmul.f32 %v5241, %v5380
        %v5441 = vmul.f32 %v5243, %v5380
        %v5442 = vmul.f32 %v5245, %v5381
        %v5443 = vmul.f32 %v5247, %v5381
        %v5444 = vmul.f32 %v5249, %v5382
        %v5445 = vmul.f32 %v5251, %v5382
        %v5446 = vmul.f32 %v5253, %v5383
        %v5447 = vmul.f32 %v5255, %v5383
        %v5448 = vpack.c.bf16 %v5386, %v5384
        %v5449 = vpack.c.bf16 %v5387, %v5385
        %v5450 = vpack.c.bf16 %v5390, %v5388
        %v5451 = vpack.c.bf16 %v5391, %v5389
        %v5452 = vpack.c.bf16 %v5394, %v5392
        %v5453 = vpack.c.bf16 %v5395, %v5393
        %v5454 = vpack.c.bf16 %v5398, %v5396
        %v5455 = vpack.c.bf16 %v5399, %v5397
        %v5456 = vpack.c.bf16 %v5402, %v5400
        %v5457 = vpack.c.bf16 %v5403, %v5401
        %v5458 = vpack.c.bf16 %v5406, %v5404
        %v5459 = vpack.c.bf16 %v5407, %v5405
        %v5460 = vpack.c.bf16 %v5410, %v5408
        %v5461 = vpack.c.bf16 %v5411, %v5409
        %v5462 = vpack.c.bf16 %v5414, %v5412
        %v5463 = vpack.c.bf16 %v5415, %v5413
        %v5464 = vpack.c.bf16 %v5418, %v5416
        %v5465 = vpack.c.bf16 %v5419, %v5417
        %v5466 = vpack.c.bf16 %v5422, %v5420
        %v5467 = vpack.c.bf16 %v5423, %v5421
        %v5468 = vpack.c.bf16 %v5426, %v5424
        %v5469 = vpack.c.bf16 %v5427, %v5425
        %v5470 = vpack.c.bf16 %v5430, %v5428
        %v5471 = vpack.c.bf16 %v5431, %v5429
        %v5472 = vpack.c.bf16 %v5434, %v5432
        %v5473 = vpack.c.bf16 %v5435, %v5433
        %v5474 = vpack.c.bf16 %v5438, %v5436
        %v5475 = vpack.c.bf16 %v5439, %v5437
        %v5476 = vpack.c.bf16 %v5442, %v5440
        %v5477 = vpack.c.bf16 %v5443, %v5441
        %v5478 = vpack.c.bf16 %v5446, %v5444
        %v5479 = vpack.c.bf16 %v5447, %v5445
        %5480 = vmatprep.subr.bf16.mxu0 %v5449
        %5481 = vmatpush1.bf16.xpose.msra.mxu0 %v5448
        %5482 = vmatprep.subr.bf16.mxu0 %v5451
        %5483 = vmatpush1.bf16.xpose.msra.mxu0 %v5450
        %5484 = vmatprep.subr.bf16.mxu0 %v5453
        %5485 = vmatpush1.bf16.xpose.msra.mxu0 %v5452
        %5486 = vmatprep.subr.bf16.mxu0 %v5455
        %5487 = vmatpush1.bf16.xpose.msra.mxu0 %v5454
        %5488 = vmatprep.subr.bf16.mxu0 %v5457
        %5489 = vmatpush1.bf16.xpose.msra.mxu0 %v5456
        %5490 = vmatprep.subr.bf16.mxu0 %v5459
        %5491 = vmatpush1.bf16.xpose.msra.mxu0 %v5458
        %5492 = vmatprep.subr.bf16.mxu0 %v5461
        %5493 = vmatpush1.bf16.xpose.msra.mxu0 %v5460
        %5494 = vmatprep.subr.bf16.mxu0 %v5463
        %5495 = vmatpush1.bf16.xpose.msra.mxu0 %v5462
        %5496 = vmatprep.subr.bf16.mxu0 %v5465
        %5497 = vmatpush1.bf16.xpose.msra.mxu0 %v5464
        %5498 = vmatprep.subr.bf16.mxu0 %v5467
        %5499 = vmatpush1.bf16.xpose.msra.mxu0 %v5466
        %5500 = vmatprep.subr.bf16.mxu0 %v5469
        %5501 = vmatpush1.bf16.xpose.msra.mxu0 %v5468
        %5502 = vmatprep.subr.bf16.mxu0 %v5471
        %5503 = vmatpush1.bf16.xpose.msra.mxu0 %v5470
        %5504 = vmatprep.subr.bf16.mxu0 %v5473
        %5505 = vmatpush1.bf16.xpose.msra.mxu0 %v5472
        %5506 = vmatprep.subr.bf16.mxu0 %v5475
        %5507 = vmatpush1.bf16.xpose.msra.mxu0 %v5474
        %5508 = vmatprep.subr.bf16.mxu0 %v5477
        %5509 = vmatpush1.bf16.xpose.msra.mxu0 %v5476
        %5510 = vmatprep.subr.bf16.mxu0 %v5479
        %5511 = vmatpush1.bf16.xpose.msra.mxu0 %v5478
        %5512 = vmatprep.mubr.bf16.mxu0 %v4712
        %5513 = vmatmul.mubr.bf16.gmra.mrb[0].mxu0 %v4711
        %v5514 = vpop.f32.mrb[0].mxu0
        %v5515 = vadd.f32 0.0, %v5514
        %v5516 = vpop.f32.mrb[0].mxu0
        %v5517 = vadd.f32 0.0, %v5516
        %v5518 = vpop.f32.mrb[0].mxu0
        %v5519 = vadd.f32 0.0, %v5518
        %v5520 = vpop.f32.mrb[0].mxu0
        %v5521 = vadd.f32 0.0, %v5520
        %5522 = vmatprep.mubr.bf16.mxu0 %v4714
        %5523 = vmatmul.mubr.bf16.gmra.mrb[0].mxu0 %v4713
        %v5524 = vpop.f32.mrb[0].mxu0
        %v5525 = vadd.f32 0.0, %v5524
        %v5526 = vpop.f32.mrb[0].mxu0
        %v5527 = vadd.f32 0.0, %v5526
        %v5528 = vpop.f32.mrb[0].mxu0
        %v5529 = vadd.f32 0.0, %v5528
        %v5530 = vpop.f32.mrb[0].mxu0
        %v5531 = vadd.f32 0.0, %v5530
        %5532 = vmatprep.mubr.bf16.mxu0 %v4716
        %5533 = vmatmul.mubr.bf16.gmra.mrb[0].mxu0 %v4715
        %v5534 = vpop.f32.mrb[0].mxu0
        %v5535 = vadd.f32 0.0, %v5534
        %v5536 = vpop.f32.mrb[0].mxu0
        %v5537 = vadd.f32 0.0, %v5536
        %v5538 = vpop.f32.mrb[0].mxu0
        %v5539 = vadd.f32 0.0, %v5538
        %v5540 = vpop.f32.mrb[0].mxu0
        %v5541 = vadd.f32 0.0, %v5540
        %5542 = vmatprep.mubr.bf16.mxu0 %v4718
        %5543 = vmatmul.mubr.bf16.gmra.mrb[0].mxu0 %v4717
        %v5544 = vpop.f32.mrb[0].mxu0
        %v5545 = vadd.f32 0.0, %v5544
        %v5546 = vpop.f32.mrb[0].mxu0
        %v5547 = vadd.f32 0.0, %v5546
        %v5548 = vpop.f32.mrb[0].mxu0
        %v5549 = vadd.f32 0.0, %v5548
        %v5550 = vpop.f32.mrb[0].mxu0
        %v5551 = vadd.f32 0.0, %v5550
        %5552 = vmatprep.mubr.bf16.mxu0 %v4720
        %5553 = vmatmul.mubr.bf16.gmra.mrb[0].mxu0 %v4719
        %v5554 = vpop.f32.mrb[0].mxu0
        %v5555 = vadd.f32 0.0, %v5554
        %v5556 = vpop.f32.mrb[0].mxu0
        %v5557 = vadd.f32 0.0, %v5556
        %v5558 = vpop.f32.mrb[0].mxu0
        %v5559 = vadd.f32 0.0, %v5558
        %v5560 = vpop.f32.mrb[0].mxu0
        %v5561 = vadd.f32 0.0, %v5560
        %5562 = vmatprep.mubr.bf16.mxu0 %v4722
        %5563 = vmatmul.mubr.bf16.gmra.mrb[0].mxu0 %v4721
        %v5564 = vpop.f32.mrb[0].mxu0
        %v5565 = vadd.f32 0.0, %v5564
        %v5566 = vpop.f32.mrb[0].mxu0
        %v5567 = vadd.f32 0.0, %v5566
        %v5568 = vpop.f32.mrb[0].mxu0
        %v5569 = vadd.f32 0.0, %v5568
        %v5570 = vpop.f32.mrb[0].mxu0
        %v5571 = vadd.f32 0.0, %v5570
        %5572 = vmatprep.mubr.bf16.mxu0 %v4724
        %5573 = vmatmul.mubr.bf16.gmra.mrb[0].mxu0 %v4723
        %v5574 = vpop.f32.mrb[0].mxu0
        %v5575 = vadd.f32 0.0, %v5574
        %v5576 = vpop.f32.mrb[0].mxu0
        %v5577 = vadd.f32 0.0, %v5576
        %v5578 = vpop.f32.mrb[0].mxu0
        %v5579 = vadd.f32 0.0, %v5578
        %v5580 = vpop.f32.mrb[0].mxu0
        %v5581 = vadd.f32 0.0, %v5580
        %5582 = vmatprep.mubr.bf16.mxu0 %v4726
        %5583 = vmatmul.mubr.bf16.gmra.mrb[0].mxu0 %v4725
        %v5584 = vpop.f32.mrb[0].mxu0
        %v5585 = vadd.f32 0.0, %v5584
        %v5586 = vpop.f32.mrb[0].mxu0
        %v5587 = vadd.f32 0.0, %v5586
        %v5588 = vpop.f32.mrb[0].mxu0
        %v5589 = vadd.f32 0.0, %v5588
        %v5590 = vpop.f32.mrb[0].mxu0
        %v5591 = vadd.f32 0.0, %v5590
        %5592 = vmatprep.mubr.bf16.mxu0 %v4728
        %5593 = vmatmul.mubr.bf16.gmra.mrb[0].mxu0 %v4727
        %v5594 = vpop.f32.mrb[0].mxu0
        %v5595 = vadd.f32 0.0, %v5594
        %v5596 = vpop.f32.mrb[0].mxu0
        %v5597 = vadd.f32 0.0, %v5596
        %v5598 = vpop.f32.mrb[0].mxu0
        %v5599 = vadd.f32 0.0, %v5598
        %v5600 = vpop.f32.mrb[0].mxu0
        %v5601 = vadd.f32 0.0, %v5600
        %5602 = vmatprep.mubr.bf16.mxu0 %v4730
        %5603 = vmatmul.mubr.bf16.gmra.mrb[0].mxu0 %v4729
        %v5604 = vpop.f32.mrb[0].mxu0
        %v5605 = vadd.f32 0.0, %v5604
        %v5606 = vpop.f32.mrb[0].mxu0
        %v5607 = vadd.f32 0.0, %v5606
        %v5608 = vpop.f32.mrb[0].mxu0
        %v5609 = vadd.f32 0.0, %v5608
        %v5610 = vpop.f32.mrb[0].mxu0
        %v5611 = vadd.f32 0.0, %v5610
        %5612 = vmatprep.mubr.bf16.mxu0 %v4732
        %5613 = vmatmul.mubr.bf16.gmra.mrb[0].mxu0 %v4731
        %v5614 = vpop.f32.mrb[0].mxu0
        %v5615 = vadd.f32 0.0, %v5614
        %v5616 = vpop.f32.mrb[0].mxu0
        %v5617 = vadd.f32 0.0, %v5616
        %v5618 = vpop.f32.mrb[0].mxu0
        %v5619 = vadd.f32 0.0, %v5618
        %v5620 = vpop.f32.mrb[0].mxu0
        %v5621 = vadd.f32 0.0, %v5620
        %5622 = vmatprep.mubr.bf16.mxu0 %v4734
        %5623 = vmatmul.mubr.bf16.gmra.mrb[0].mxu0 %v4733
        %v5624 = vpop.f32.mrb[0].mxu0
        %v5625 = vadd.f32 0.0, %v5624
        %v5626 = vpop.f32.mrb[0].mxu0
        %v5627 = vadd.f32 0.0, %v5626
        %v5628 = vpop.f32.mrb[0].mxu0
        %v5629 = vadd.f32 0.0, %v5628
        %v5630 = vpop.f32.mrb[0].mxu0
        %v5631 = vadd.f32 0.0, %v5630
        %5632 = vmatprep.mubr.bf16.mxu0 %v4736
        %5633 = vmatmul.mubr.bf16.gmra.mrb[0].mxu0 %v4735
        %v5634 = vpop.f32.mrb[0].mxu0
        %v5635 = vadd.f32 0.0, %v5634
        %v5636 = vpop.f32.mrb[0].mxu0
        %v5637 = vadd.f32 0.0, %v5636
        %v5638 = vpop.f32.mrb[0].mxu0
        %v5639 = vadd.f32 0.0, %v5638
        %v5640 = vpop.f32.mrb[0].mxu0
        %v5641 = vadd.f32 0.0, %v5640
        %5642 = vmatprep.mubr.bf16.mxu0 %v4738
        %5643 = vmatmul.mubr.bf16.gmra.mrb[0].mxu0 %v4737
        %v5644 = vpop.f32.mrb[0].mxu0
        %v5645 = vadd.f32 0.0, %v5644
        %v5646 = vpop.f32.mrb[0].mxu0
        %v5647 = vadd.f32 0.0, %v5646
        %v5648 = vpop.f32.mrb[0].mxu0
        %v5649 = vadd.f32 0.0, %v5648
        %v5650 = vpop.f32.mrb[0].mxu0
        %v5651 = vadd.f32 0.0, %v5650
        %5652 = vmatprep.mubr.bf16.mxu0 %v4740
        %5653 = vmatmul.mubr.bf16.gmra.mrb[0].mxu0 %v4739
        %v5654 = vpop.f32.mrb[0].mxu0
        %v5655 = vadd.f32 0.0, %v5654
        %v5656 = vpop.f32.mrb[0].mxu0
        %v5657 = vadd.f32 0.0, %v5656
        %v5658 = vpop.f32.mrb[0].mxu0
        %v5659 = vadd.f32 0.0, %v5658
        %v5660 = vpop.f32.mrb[0].mxu0
        %v5661 = vadd.f32 0.0, %v5660
        %5662 = vmatprep.mubr.bf16.mxu0 %v4742
        %5663 = vmatmul.mubr.bf16.gmra.mrb[0].mxu0 %v4741
        %v5664 = vpop.f32.mrb[0].mxu0
        %v5665 = vadd.f32 0.0, %v5664
        %v5666 = vpop.f32.mrb[0].mxu0
        %v5667 = vadd.f32 0.0, %v5666
        %v5668 = vpop.f32.mrb[0].mxu0
        %v5669 = vadd.f32 0.0, %v5668
        %v5670 = vpop.f32.mrb[0].mxu0
        %v5671 = vadd.f32 0.0, %v5670
        %5672 = vdwg.mxu0
        %v5673 = vadd.f32 %v5515, %v5517
        %v5674 = vadd.f32 %v5673, %v5519
        %v5675 = vadd.f32 %v5674, %v5521
        %v5676 = vadd.f32 %v5675, %v5525
        %v5677 = vadd.f32 %v5676, %v5527
        %v5678 = vadd.f32 %v5677, %v5529
        %v5679 = vadd.f32 %v5678, %v5531
        %v5680 = vadd.f32 %v5679, %v5535
        %v5681 = vadd.f32 %v5680, %v5537
        %v5682 = vadd.f32 %v5681, %v5539
        %v5683 = vadd.f32 %v5682, %v5541
        %v5684 = vadd.f32 %v5683, %v5545
        %v5685 = vadd.f32 %v5684, %v5547
        %v5686 = vadd.f32 %v5685, %v5549
        %v5687 = vadd.f32 %v5686, %v5551
        %v5688 = vadd.f32 %v5687, %v5555
        %v5689 = vadd.f32 %v5688, %v5557
        %v5690 = vadd.f32 %v5689, %v5559
        %v5691 = vadd.f32 %v5690, %v5561
        %v5692 = vadd.f32 %v5691, %v5565
        %v5693 = vadd.f32 %v5692, %v5567
        %v5694 = vadd.f32 %v5693, %v5569
        %v5695 = vadd.f32 %v5694, %v5571
        %v5696 = vadd.f32 %v5695, %v5575
        %v5697 = vadd.f32 %v5696, %v5577
        %v5698 = vadd.f32 %v5697, %v5579
        %v5699 = vadd.f32 %v5698, %v5581
        %v5700 = vadd.f32 %v5699, %v5585
        %v5701 = vadd.f32 %v5700, %v5587
        %v5702 = vadd.f32 %v5701, %v5589
        %v5703 = vadd.f32 %v5702, %v5591
        %v5704 = vadd.f32 %v5703, %v5595
        %v5705 = vadd.f32 %v5704, %v5597
        %v5706 = vadd.f32 %v5705, %v5599
        %v5707 = vadd.f32 %v5706, %v5601
        %v5708 = vadd.f32 %v5707, %v5605
        %v5709 = vadd.f32 %v5708, %v5607
        %v5710 = vadd.f32 %v5709, %v5609
        %v5711 = vadd.f32 %v5710, %v5611
        %v5712 = vadd.f32 %v5711, %v5615
        %v5713 = vadd.f32 %v5712, %v5617
        %v5714 = vadd.f32 %v5713, %v5619
        %v5715 = vadd.f32 %v5714, %v5621
        %v5716 = vadd.f32 %v5715, %v5625
        %v5717 = vadd.f32 %v5716, %v5627
        %v5718 = vadd.f32 %v5717, %v5629
        %v5719 = vadd.f32 %v5718, %v5631
        %v5720 = vadd.f32 %v5719, %v5635
        %v5721 = vadd.f32 %v5720, %v5637
        %v5722 = vadd.f32 %v5721, %v5639
        %v5723 = vadd.f32 %v5722, %v5641
        %v5724 = vadd.f32 %v5723, %v5645
        %v5725 = vadd.f32 %v5724, %v5647
        %v5726 = vadd.f32 %v5725, %v5649
        %v5727 = vadd.f32 %v5726, %v5651
        %v5728 = vadd.f32 %v5727, %v5655
        %v5729 = vadd.f32 %v5728, %v5657
        %v5730 = vadd.f32 %v5729, %v5659
        %v5731 = vadd.f32 %v5730, %v5661
        %v5732 = vadd.f32 %v5731, %v5665
        %v5733 = vadd.f32 %v5732, %v5667
        %v5734 = vadd.f32 %v5733, %v5669
        %v5735 = vadd.f32 %v5734, %v5671
        %5736 = vadd.xlane.f32.xlu0 %v5735
        %v5737 = vpop.xlane.xlu0 %5736
        %v5738 = vrot.slane %v5737, 4
        %v5739 = vadd.f32 %v5737, %v5738
        %v5740 = vrot.slane %v5739, 2
        %v5741 = vadd.f32 %v5739, %v5740
        %v5742 = vrot.slane %v5741, 1
        %v5743 = vadd.f32 %v5741, %v5742
        %s5744 = vtos %v5743
        %v5745 = vrcp.pop 65536.0
        %s5746 = vtos %v5745
        %s5747 = smul.f32 %s5744, %s5746
        %v5748 = vmul.f32 %v5515, %v5515
        %v5749 = vmul.f32 %v5517, %v5517
        %v5750 = vmul.f32 %v5519, %v5519
        %v5751 = vmul.f32 %v5521, %v5521
        %v5752 = vmul.f32 %v5525, %v5525
        %v5753 = vmul.f32 %v5527, %v5527
        %v5754 = vmul.f32 %v5529, %v5529
        %v5755 = vmul.f32 %v5531, %v5531
        %v5756 = vmul.f32 %v5535, %v5535
        %v5757 = vmul.f32 %v5537, %v5537
        %v5758 = vmul.f32 %v5539, %v5539
        %v5759 = vmul.f32 %v5541, %v5541
        %v5760 = vmul.f32 %v5545, %v5545
        %v5761 = vmul.f32 %v5547, %v5547
        %v5762 = vmul.f32 %v5549, %v5549
        %v5763 = vmul.f32 %v5551, %v5551
        %v5764 = vmul.f32 %v5555, %v5555
        %v5765 = vmul.f32 %v5557, %v5557
        %v5766 = vmul.f32 %v5559, %v5559
        %v5767 = vmul.f32 %v5561, %v5561
        %v5768 = vmul.f32 %v5565, %v5565
        %v5769 = vmul.f32 %v5567, %v5567
        %v5770 = vmul.f32 %v5569, %v5569
        %v5771 = vmul.f32 %v5571, %v5571
        %v5772 = vmul.f32 %v5575, %v5575
        %v5773 = vmul.f32 %v5577, %v5577
        %v5774 = vmul.f32 %v5579, %v5579
        %v5775 = vmul.f32 %v5581, %v5581
        %v5776 = vmul.f32 %v5585, %v5585
        %v5777 = vmul.f32 %v5587, %v5587
        %v5778 = vmul.f32 %v5589, %v5589
        %v5779 = vmul.f32 %v5591, %v5591
        %v5780 = vmul.f32 %v5595, %v5595
        %v5781 = vmul.f32 %v5597, %v5597
        %v5782 = vmul.f32 %v5599, %v5599
        %v5783 = vmul.f32 %v5601, %v5601
        %v5784 = vmul.f32 %v5605, %v5605
        %v5785 = vmul.f32 %v5607, %v5607
        %v5786 = vmul.f32 %v5609, %v5609
        %v5787 = vmul.f32 %v5611, %v5611
        %v5788 = vmul.f32 %v5615, %v5615
        %v5789 = vmul.f32 %v5617, %v5617
        %v5790 = vmul.f32 %v5619, %v5619
        %v5791 = vmul.f32 %v5621, %v5621
        %v5792 = vmul.f32 %v5625, %v5625
        %v5793 = vmul.f32 %v5627, %v5627
        %v5794 = vmul.f32 %v5629, %v5629
        %v5795 = vmul.f32 %v5631, %v5631
        %v5796 = vmul.f32 %v5635, %v5635
        %v5797 = vmul.f32 %v5637, %v5637
        %v5798 = vmul.f32 %v5639, %v5639
        %v5799 = vmul.f32 %v5641, %v5641
        %v5800 = vmul.f32 %v5645, %v5645
        %v5801 = vmul.f32 %v5647, %v5647
        %v5802 = vmul.f32 %v5649, %v5649
        %v5803 = vmul.f32 %v5651, %v5651
        %v5804 = vmul.f32 %v5655, %v5655
        %v5805 = vmul.f32 %v5657, %v5657
        %v5806 = vmul.f32 %v5659, %v5659
        %v5807 = vmul.f32 %v5661, %v5661
        %v5808 = vmul.f32 %v5665, %v5665
        %v5809 = vmul.f32 %v5667, %v5667
        %v5810 = vmul.f32 %v5669, %v5669
        %v5811 = vmul.f32 %v5671, %v5671
        %v5812 = vadd.f32 %v5748, %v5749
        %v5813 = vadd.f32 %v5812, %v5750
        %v5814 = vadd.f32 %v5813, %v5751
        %v5815 = vadd.f32 %v5814, %v5752
        %v5816 = vadd.f32 %v5815, %v5753
        %v5817 = vadd.f32 %v5816, %v5754
        %v5818 = vadd.f32 %v5817, %v5755
        %v5819 = vadd.f32 %v5818, %v5756
        %v5820 = vadd.f32 %v5819, %v5757
        %v5821 = vadd.f32 %v5820, %v5758
        %v5822 = vadd.f32 %v5821, %v5759
        %v5823 = vadd.f32 %v5822, %v5760
        %v5824 = vadd.f32 %v5823, %v5761
        %v5825 = vadd.f32 %v5824, %v5762
        %v5826 = vadd.f32 %v5825, %v5763
        %v5827 = vadd.f32 %v5826, %v5764
        %v5828 = vadd.f32 %v5827, %v5765
        %v5829 = vadd.f32 %v5828, %v5766
        %v5830 = vadd.f32 %v5829, %v5767
        %v5831 = vadd.f32 %v5830, %v5768
        %v5832 = vadd.f32 %v5831, %v5769
        %v5833 = vadd.f32 %v5832, %v5770
        %v5834 = vadd.f32 %v5833, %v5771
        %v5835 = vadd.f32 %v5834, %v5772
        %v5836 = vadd.f32 %v5835, %v5773
        %v5837 = vadd.f32 %v5836, %v5774
        %v5838 = vadd.f32 %v5837, %v5775
        %v5839 = vadd.f32 %v5838, %v5776
        %v5840 = vadd.f32 %v5839, %v5777
        %v5841 = vadd.f32 %v5840, %v5778
        %v5842 = vadd.f32 %v5841, %v5779
        %v5843 = vadd.f32 %v5842, %v5780
        %v5844 = vadd.f32 %v5843, %v5781
        %v5845 = vadd.f32 %v5844, %v5782
        %v5846 = vadd.f32 %v5845, %v5783
        %v5847 = vadd.f32 %v5846, %v5784
        %v5848 = vadd.f32 %v5847, %v5785
        %v5849 = vadd.f32 %v5848, %v5786
        %v5850 = vadd.f32 %v5849, %v5787
        %v5851 = vadd.f32 %v5850, %v5788
        %v5852 = vadd.f32 %v5851, %v5789
        %v5853 = vadd.f32 %v5852, %v5790
        %v5854 = vadd.f32 %v5853, %v5791
        %v5855 = vadd.f32 %v5854, %v5792
        %v5856 = vadd.f32 %v5855, %v5793
        %v5857 = vadd.f32 %v5856, %v5794
        %v5858 = vadd.f32 %v5857, %v5795
        %v5859 = vadd.f32 %v5858, %v5796
        %v5860 = vadd.f32 %v5859, %v5797
        %v5861 = vadd.f32 %v5860, %v5798
        %v5862 = vadd.f32 %v5861, %v5799
        %v5863 = vadd.f32 %v5862, %v5800
        %v5864 = vadd.f32 %v5863, %v5801
        %v5865 = vadd.f32 %v5864, %v5802
        %v5866 = vadd.f32 %v5865, %v5803
        %v5867 = vadd.f32 %v5866, %v5804
        %v5868 = vadd.f32 %v5867, %v5805
        %v5869 = vadd.f32 %v5868, %v5806
        %v5870 = vadd.f32 %v5869, %v5807
        %v5871 = vadd.f32 %v5870, %v5808
        %v5872 = vadd.f32 %v5871, %v5809
        %v5873 = vadd.f32 %v5872, %v5810
        %v5874 = vadd.f32 %v5873, %v5811
        %5875 = vadd.xlane.f32.xlu0 %v5874
        %v5876 = vpop.xlane.xlu0 %5875
        %v5877 = vrot.slane %v5876, 4
        %v5878 = vadd.f32 %v5876, %v5877
        %v5879 = vrot.slane %v5878, 2
        %v5880 = vadd.f32 %v5878, %v5879
        %v5881 = vrot.slane %v5880, 1
        %v5882 = vadd.f32 %v5880, %v5881
        %s5883 = vtos %v5882
        %v5884 = vrcp.pop 65536.0
        %s5885 = vtos %v5884
        %s5886 = smul.f32 %s5883, %s5885
        %s5887 = smul.f32 %s5747, %s5747
        %s5888 = ssub.f32 %s5886, %s5887
        %s5889 = smax.f32 %s5888, 0.0
        %s5890 = sadd.f32 %s5889, 1e-05
        %v5891 = vstv %s5890
        %v5892 = vrsqrt.pop %v5891
        %s5893 = vtos %v5892
        %v5894 = vmul.f32 %v5515, %v4113
        %v5895 = vmul.f32 %v5517, %v4114
        %v5896 = vmul.f32 %v5519, %v4115
        %v5897 = vmul.f32 %v5521, %v4116
        %v5898 = vmul.f32 %v5525, %v4117
        %v5899 = vmul.f32 %v5527, %v4118
        %v5900 = vmul.f32 %v5529, %v4119
        %v5901 = vmul.f32 %v5531, %v4120
        %v5902 = vmul.f32 %v5535, %v4121
        %v5903 = vmul.f32 %v5537, %v4122
        %v5904 = vmul.f32 %v5539, %v4123
        %v5905 = vmul.f32 %v5541, %v4124
        %v5906 = vmul.f32 %v5545, %v4125
        %v5907 = vmul.f32 %v5547, %v4126
        %v5908 = vmul.f32 %v5549, %v4127
        %v5909 = vmul.f32 %v5551, %v4128
        %v5910 = vmul.f32 %v5555, %v4129
        %v5911 = vmul.f32 %v5557, %v4130
        %v5912 = vmul.f32 %v5559, %v4131
        %v5913 = vmul.f32 %v5561, %v4132
        %v5914 = vmul.f32 %v5565, %v4133
        %v5915 = vmul.f32 %v5567, %v4134
        %v5916 = vmul.f32 %v5569, %v4135
        %v5917 = vmul.f32 %v5571, %v4136
        %v5918 = vmul.f32 %v5575, %v4137
        %v5919 = vmul.f32 %v5577, %v4138
        %v5920 = vmul.f32 %v5579, %v4139
        %v5921 = vmul.f32 %v5581, %v4140
        %v5922 = vmul.f32 %v5585, %v4141
        %v5923 = vmul.f32 %v5587, %v4142
        %v5924 = vmul.f32 %v5589, %v4143
        %v5925 = vmul.f32 %v5591, %v4144
        %v5926 = vmul.f32 %v5595, %v4145
        %v5927 = vmul.f32 %v5597, %v4146
        %v5928 = vmul.f32 %v5599, %v4147
        %v5929 = vmul.f32 %v5601, %v4148
        %v5930 = vmul.f32 %v5605, %v4149
        %v5931 = vmul.f32 %v5607, %v4150
        %v5932 = vmul.f32 %v5609, %v4151
        %v5933 = vmul.f32 %v5611, %v4152
        %v5934 = vmul.f32 %v5615, %v4153
        %v5935 = vmul.f32 %v5617, %v4154
        %v5936 = vmul.f32 %v5619, %v4155
        %v5937 = vmul.f32 %v5621, %v4156
        %v5938 = vmul.f32 %v5625, %v4157
        %v5939 = vmul.f32 %v5627, %v4158
        %v5940 = vmul.f32 %v5629, %v4159
        %v5941 = vmul.f32 %v5631, %v4160
        %v5942 = vmul.f32 %v5635, %v4161
        %v5943 = vmul.f32 %v5637, %v4162
        %v5944 = vmul.f32 %v5639, %v4163
        %v5945 = vmul.f32 %v5641, %v4164
        %v5946 = vmul.f32 %v5645, %v4165
        %v5947 = vmul.f32 %v5647, %v4166
        %v5948 = vmul.f32 %v5649, %v4167
        %v5949 = vmul.f32 %v5651, %v4168
        %v5950 = vmul.f32 %v5655, %v4169
        %v5951 = vmul.f32 %v5657, %v4170
        %v5952 = vmul.f32 %v5659, %v4171
        %v5953 = vmul.f32 %v5661, %v4172
        %v5954 = vmul.f32 %v5665, %v4173
        %v5955 = vmul.f32 %v5667, %v4174
        %v5956 = vmul.f32 %v5669, %v4175
        %v5957 = vmul.f32 %v5671, %v4176
        %v5958 = vpack.c.bf16 %v5896, %v5894
        %v5959 = vpack.c.bf16 %v5897, %v5895
        %v5960 = vpack.c.bf16 %v5900, %v5898
        %v5961 = vpack.c.bf16 %v5901, %v5899
        %v5962 = vpack.c.bf16 %v5904, %v5902
        %v5963 = vpack.c.bf16 %v5905, %v5903
        %v5964 = vpack.c.bf16 %v5908, %v5906
        %v5965 = vpack.c.bf16 %v5909, %v5907
        %v5966 = vpack.c.bf16 %v5912, %v5910
        %v5967 = vpack.c.bf16 %v5913, %v5911
        %v5968 = vpack.c.bf16 %v5916, %v5914
        %v5969 = vpack.c.bf16 %v5917, %v5915
        %v5970 = vpack.c.bf16 %v5920, %v5918
        %v5971 = vpack.c.bf16 %v5921, %v5919
        %v5972 = vpack.c.bf16 %v5924, %v5922
        %v5973 = vpack.c.bf16 %v5925, %v5923
        %v5974 = vpack.c.bf16 %v5928, %v5926
        %v5975 = vpack.c.bf16 %v5929, %v5927
        %v5976 = vpack.c.bf16 %v5932, %v5930
        %v5977 = vpack.c.bf16 %v5933, %v5931
        %v5978 = vpack.c.bf16 %v5936, %v5934
        %v5979 = vpack.c.bf16 %v5937, %v5935
        %v5980 = vpack.c.bf16 %v5940, %v5938
        %v5981 = vpack.c.bf16 %v5941, %v5939
        %v5982 = vpack.c.bf16 %v5944, %v5942
        %v5983 = vpack.c.bf16 %v5945, %v5943
        %v5984 = vpack.c.bf16 %v5948, %v5946
        %v5985 = vpack.c.bf16 %v5949, %v5947
        %v5986 = vpack.c.bf16 %v5952, %v5950
        %v5987 = vpack.c.bf16 %v5953, %v5951
        %v5988 = vpack.c.bf16 %v5956, %v5954
        %v5989 = vpack.c.bf16 %v5957, %v5955
        %v5992 = vunpack.c.l.s4 1983009808
        %v5993 = vunpack.c.0.s8 %v5992
        %v5994 = vlaneseq
        %v5995 = vshrl.u32 %v5994, 7
        %v5996 = vsub.s32 %v5993, %v5995
        %v5997 = vrot.slane %v4177, %v5996
        %v5998 = vcombine.high %v5997, %v5997
        %6001 = vmatprep.subr.bf16.mxu0 %v5959
        %6002 = vmatpush1.bf16.xpose.msra.mxu0 %v5958
        %6003 = vmatprep.subr.bf16.mxu0 %v5961
        %6004 = vmatpush1.bf16.xpose.msra.mxu0 %v5960
        %6005 = vmatprep.subr.bf16.mxu0 %v5963
        %6006 = vmatpush1.bf16.xpose.msra.mxu0 %v5962
        %6007 = vmatprep.subr.bf16.mxu0 %v5965
        %6008 = vmatpush1.bf16.xpose.msra.mxu0 %v5964
        %6009 = vmatprep.subr.bf16.mxu0 %v5967
        %6010 = vmatpush1.bf16.xpose.msra.mxu0 %v5966
        %6011 = vmatprep.subr.bf16.mxu0 %v5969
        %6012 = vmatpush1.bf16.xpose.msra.mxu0 %v5968
        %6013 = vmatprep.subr.bf16.mxu0 %v5971
        %6014 = vmatpush1.bf16.xpose.msra.mxu0 %v5970
        %6015 = vmatprep.subr.bf16.mxu0 %v5973
        %6016 = vmatpush1.bf16.xpose.msra.mxu0 %v5972
        %6017 = vmatprep.subr.bf16.mxu0 %v5975
        %6018 = vmatpush1.bf16.xpose.msra.mxu0 %v5974
        %6019 = vmatprep.subr.bf16.mxu0 %v5977
        %6020 = vmatpush1.bf16.xpose.msra.mxu0 %v5976
        %6021 = vmatprep.subr.bf16.mxu0 %v5979
        %6022 = vmatpush1.bf16.xpose.msra.mxu0 %v5978
        %6023 = vmatprep.subr.bf16.mxu0 %v5981
        %6024 = vmatpush1.bf16.xpose.msra.mxu0 %v5980
        %6025 = vmatprep.subr.bf16.mxu0 %v5983
        %6026 = vmatpush1.bf16.xpose.msra.mxu0 %v5982
        %6027 = vmatprep.subr.bf16.mxu0 %v5985
        %6028 = vmatpush1.bf16.xpose.msra.mxu0 %v5984
        %6029 = vmatprep.subr.bf16.mxu0 %v5987
        %6030 = vmatpush1.bf16.xpose.msra.mxu0 %v5986
        %6031 = vmatprep.subr.bf16.mxu0 %v5989
        %6032 = vmatpush1.bf16.xpose.msra.mxu0 %v5988
        %6033 = vmatprep.mubr.bf16.mxu0 %v5998
        %6034 = vmatmul.mubr.bf16.gmra.mrb[0].mxu0 %v5997
        %v6035 = vpop.f32.mrb[0].mxu0
        %v6036 = vadd.f32 0.0, %v6035
        %v6037 = vpop.f32.mrb[0].mxu0
        %v6038 = vadd.f32 0.0, %v6037
        %v6039 = vpop.f32.mrb[0].mxu0
        %v6040 = vpop.f32.mrb[0].mxu0
        %6041 = vdwg.mxu0
        %v6042 = vstv %s5747
        %v6043 = vmul.f32 %v6042, %v4178
        %v6045 = vcombine.high %v6043, %v6043
        %v6047 = vsub.f32 %v6036, %v6043
        %v6048 = vsub.f32 %v6038, %v6045
        %v6049 = vstv %s5893
        %v6050 = vmul.f32 %v6047, %v6049
        %v6051 = vmul.f32 %v6048, %v6049
        %v6053 = vcombine.high %v4179, %v4179
        %v6055 = vadd.f32 %v6050, %v4179
        %v6056 = vadd.f32 %v6051, %v6053
        %v6059 = vcombine.low %v6055, %v6056
        %6061 = vst [vmem:[%s523] sm:$0xff] %v6059
        %p6062 = scmp.lt.s32.totalorder %s21, 1
        %s6063 = scalar_select %p6062, %s21, 1
        %s6064 = smul.addr %s6063, 2
        %s6065 = smul.addr %s6064, 4
        %s6066 = scalar_lea.vmem %s8, %s6065
        // Predicated region
        $region103: #{wordlevel_cfa_lstm.1} parent=85 // pred_check
          %p6067 = pneg %p217
        $region104: #{wordlevel_cfa_lstm.1} parent=85 // pred_check_branch
          %6069 = sbr.rel (%p6067) target = $region106
        $region105: #{wordlevel_cfa_lstm.1} parent=85 // pred_region
          _
        $region106: #{wordlevel_cfa_lstm.1} parent=85 // pred_fallthru
          _
      $region86: #{wordlevel_cfa_lstm.1} parent=5 // pred_fallthru
        _
      %p6070 = scmp.le.s32.totalorder 2, %s16
      // Predicated region
      $region107: #{wordlevel_cfa_lstm.1} parent=5 // pred_check
        %p6071 = pneg %p6070
      $region108: #{wordlevel_cfa_lstm.1} parent=5 // pred_check_branch
        %6073 = sbr.rel (%p6071) target = $region110
      $region109: #{wordlevel_cfa_lstm.1} parent=5 // pred_region
        %s6074 = ssub.s32 %s16, 2
        // Predicated region
        $region111: #{wordlevel_cfa_lstm.1} parent=109 // pred_check
          %p6075 = pneg %p223
        $region112: #{wordlevel_cfa_lstm.1} parent=109 // pred_check_branch
          %6077 = sbr.rel (%p6075) target = $region114
        $region113: #{wordlevel_cfa_lstm.1} parent=109 // pred_region
          %p6078 = scmp.lt.s32.totalorder %s22, 1
          %s6079 = scalar_select %p6078, %s22, 1
          %s6080 = smul.addr %s6079, 2
          %s6081 = smul.addr %s6080, 4
          %s6082 = scalar_lea.vmem %s8, %s6081
        $region114: #{wordlevel_cfa_lstm.1} parent=109 // pred_fallthru
          _
      $region110: #{wordlevel_cfa_lstm.1} parent=5 // pred_fallthru
        _
    $region6: #{wordlevel_cfa_lstm.1} parent=1 // loop_footer
      %s20 = sadd.s32 1, %s16
    $region7: #{wordlevel_cfa_lstm.1} parent=1 // loop_footer_branch
      %15 = sbr.rel target = $region3
    $region8: #{wordlevel_cfa_lstm.1} parent=1 // loop_exit
      _
    %6083 = vsyncpa [#allocation7], 1
    %s6084 = scalar_lea.sflag [#allocation7], 1
    %6085 = vsyncpa %s6084, 1
    %6086 = vsyncpa [#allocation9], 1

</llo_original>
